<compile_context>
chip_gen: v5e
topology: v5e:2x2
jax: 0.10.0
libtpu: 0.0.40
codegen_flags: <defaults>
</compile_context>

<pallas_src>
import jax
import jax.numpy as jnp
from jax.experimental import pallas as pl
from jax.experimental.pallas import tpu as pltpu

# ----------------------- synthetic GemmaConfig -----------------------
NUM_LAYERS = 2
HIDDEN = 32
NUM_HEADS = 4
NUM_KV_HEADS = 2
NUM_Q_PER_KV = NUM_HEADS // NUM_KV_HEADS
HEAD_DIM = 16
INTERMEDIATE = 64
Q_SIZE = NUM_HEADS * HEAD_DIM            # 64
KV_SIZE = NUM_KV_HEADS * HEAD_DIM        # 32
QKV_TOTAL = Q_SIZE + 2 * KV_SIZE         # 128 (lane-dense)
GROUP_W = NUM_Q_PER_KV * HEAD_DIM        # 32
RMS_EPS = 1e-6
SCALING = HEAD_DIM ** -0.5               # query_pre_attn_scalar is None
GELU_C = 0.7978845608028654              # sqrt(2/pi), tanh-approx GELU
# config: quant=False, use_bias=False, use_qk_norm=False,
#         attn_logit_softcapping=None, attn_type=GLOBAL (mask used, local_mask unused).


# ----------------------- fused whole-model kernel -----------------------
def gemma_model_kernel(kvidx_ref,                         # SMEM (S,) int32  [scalar prefetch]
                       x_ref,                             # (1, S, H)
                       inln_ref, wqkv_ref, wo_ref,        # (L,1,H) (L,H,128) (L,64,H)
                       postln_ref, wg_ref, wu_ref, wd_ref,
                       finln_ref,                         # (1, H)
                       cos_ref, sin_ref,                  # (S, 128)  (sign & q-scale folded in)
                       mask_ref,                          # (1, NUM_Q_PER_KV*S, C)  head-major stacked
                       kc_in_ref, vc_in_ref,              # (L, 1, C, KV)
                       out_ref, kc_out_ref, vc_out_ref):  # aliased caches
    f32 = jnp.float32
    n_layers = wqkv_ref.shape[0]
    seq = x_ref.shape[1]
    half = HEAD_DIM // 2

    # Copy-through the aliased caches once: rows that are not re-written this step
    # must survive the output write-back.
    kc_out_ref[...] = kc_in_ref[...]
    vc_out_ref[...] = vc_in_ref[...]

    h = x_ref[0]                                   # (S, H)
    cos_t = cos_ref[...]                           # (S, 128)
    sin_t = sin_ref[...]                           # (S, 128), signed (+ q-scaled)
    mask_g = mask_ref[0]                           # (NUM_Q_PER_KV*S, C)

    lane = jax.lax.broadcasted_iota(jnp.int32, (1, QKV_TOTAL), 1)
    second_half = (lane % HEAD_DIM) >= half        # (1, 128) bool: x2 half of each rope head

    def rmsnorm(v, w):
        var = jnp.mean(v * v, axis=-1, keepdims=True)
        return v * jax.lax.rsqrt(var + RMS_EPS) * (1.0 + w)   # Gemma (1 + weight)

    for layer in range(n_layers):
        # ---------------- attention sub-block ----------------
        xn = rmsnorm(h, inln_ref[layer])
        qkv = jnp.dot(xn, wqkv_ref[layer], preferred_element_type=f32)   # (S, 128)

        # RoPE: rotate_half via two XLU rolls + lane select (np.roll convention:
        # roll(x, +k)[i] = x[i-k]).  Sign and q pre-attention scaling live in the
        # precomputed sin/cos tables; V lanes have cos=1, sin=0 (pass-through), so
        # cross-head leakage at the V/wrap lanes is multiplied by zero.
        r_fwd = pltpu.roll(qkv, half, axis=1)                  # x[i - Dh/2]
        r_bwd = pltpu.roll(qkv, QKV_TOTAL - half, axis=1)      # x[i + Dh/2]
        rot = jnp.where(second_half, r_fwd, r_bwd)
        qkv = qkv * cos_t + rot * sin_t                        # roped q (scaled), roped k, raw v

        k_new = qkv[:, Q_SIZE:Q_SIZE + KV_SIZE]                # (S, 32)
        v_new = qkv[:, Q_SIZE + KV_SIZE:]                      # (S, 32)

        # KV-cache update (index_copy_): per-row dynamic stores at SMEM-prefetched
        # indices.  Sequential stores give last-write-wins on duplicate indices.
        for j in range(seq):
            idx = kvidx_ref[j]
            kc_out_ref[layer, 0, pl.ds(idx, 1), :] = k_new[j:j + 1, :]
            vc_out_ref[layer, 0, pl.ds(idx, 1), :] = v_new[j:j + 1, :]

        kb = kc_out_ref[layer, 0]                              # (C, 32) updated cache
        vb = vc_out_ref[layer, 0]

        # Grouped GQA: one score + one PV matmul per KV head, queries of the group
        # stacked head-major along sublanes.
        o_groups = []
        for g in range(NUM_KV_HEADS):
            q_g = jnp.concatenate(
                [qkv[:, (g * NUM_Q_PER_KV + j) * HEAD_DIM:
                        (g * NUM_Q_PER_KV + j + 1) * HEAD_DIM]
                 for j in range(NUM_Q_PER_KV)], axis=0)        # (NUM_Q_PER_KV*S, Dh)
            k_g = kb[:, g * HEAD_DIM:(g + 1) * HEAD_DIM]       # (C, Dh)
            v_g = vb[:, g * HEAD_DIM:(g + 1) * HEAD_DIM]       # (C, Dh)

            s = jax.lax.dot_general(q_g, k_g, (((1,), (1,)), ((), ())),
                                    preferred_element_type=f32)          # (2S, C)
            s = s + mask_g                                     # softcapping is None
            m = jnp.max(s, axis=-1, keepdims=True)
            p = jnp.exp(s - m)
            l = jnp.sum(p, axis=-1, keepdims=True)
            o = jnp.dot(p, v_g, preferred_element_type=f32)    # (2S, Dh), unnormalized
            o = o * pl.reciprocal(l, approx=True)              # post-PV normalize on EUP
            # un-stack (head-major) back into (S, NUM_Q_PER_KV*Dh) columns
            o_groups.append(jnp.concatenate(
                [o[j * seq:(j + 1) * seq, :] for j in range(NUM_Q_PER_KV)], axis=1))

        o_full = jnp.concatenate(o_groups, axis=1)             # (S, Q_SIZE)
        h = h + jnp.dot(o_full, wo_ref[layer], preferred_element_type=f32)

        # ---------------- MLP sub-block ----------------
        hn = rmsnorm(h, postln_ref[layer])
        gate = jnp.dot(hn, wg_ref[layer], preferred_element_type=f32)
        gate = 0.5 * gate * (1.0 + jnp.tanh(GELU_C * (gate + 0.044715 * gate * gate * gate)))
        up = jnp.dot(hn, wu_ref[layer], preferred_element_type=f32)
        h = h + jnp.dot(gate * up, wd_ref[layer], preferred_element_type=f32)

    # ---------------- final model RMSNorm ----------------
    out_ref[0] = rmsnorm(h, finln_ref[...])


# ----------------------- host-side precompute -----------------------
def build_rope_tables(cos, sin):
    """(S, Dh/2) cos/sin -> (S, QKV_TOTAL) tables with rotate sign and q-scaling folded in."""
    s = cos.shape[0]
    n_rope_heads = NUM_HEADS + NUM_KV_HEADS
    cos_head = jnp.concatenate([cos, cos], axis=-1)               # (S, Dh)
    sin_head = jnp.concatenate([-sin, sin], axis=-1)              # sign: -s on x1 half, +s on x2 half
    cos_rope = jnp.tile(cos_head, (1, n_rope_heads))              # (S, 96)
    sin_rope = jnp.tile(sin_head, (1, n_rope_heads))
    scale_row = jnp.concatenate(
        [jnp.full((1, Q_SIZE), SCALING, jnp.float32),             # fold q pre-attention scaling
         jnp.ones((1, KV_SIZE), jnp.float32)], axis=-1)           # k lanes unscaled
    cos_rope = cos_rope * scale_row
    sin_rope = sin_rope * scale_row
    cos_full = jnp.concatenate([cos_rope, jnp.ones((s, KV_SIZE), jnp.float32)], axis=-1)
    sin_full = jnp.concatenate([sin_rope, jnp.zeros((s, KV_SIZE), jnp.float32)], axis=-1)
    return cos_full, sin_full


# ----------------------- wrapper -----------------------
@jax.jit
def gemma_model_pallas(x, params, cos, sin, kv_write_indices, kv_caches, mask):
    B, S, H = x.shape
    L = params["w_qkv"].shape[0]
    C = kv_caches[0][0].shape[1]
    assert mask.shape == (B, S, C), "mask last dim must equal cache_len"
    assert kv_write_indices.ndim == 1 and kv_write_indices.shape[0] == S

    cos_full, sin_full = build_rope_tables(cos, sin)
    kv_idx = kv_write_indices.astype(jnp.int32)
    # head-major stacked mask rows: [mask tokens for head j=0 ; ... ; j=NUM_Q_PER_KV-1]
    mask_g = jnp.tile(mask, (1, NUM_Q_PER_KV, 1))                 # (B, NUM_Q_PER_KV*S, C)
    kc = jnp.stack([c[0] for c in kv_caches]).reshape(L, B, C, KV_SIZE)
    vc = jnp.stack([c[1] for c in kv_caches]).reshape(L, B, C, KV_SIZE)

    grid_spec = pltpu.PrefetchScalarGridSpec(
        num_scalar_prefetch=1,
        grid=(B,),
        in_specs=[
            pl.BlockSpec((1, S, H), lambda b, idx: (b, 0, 0)),                 # x
            pl.BlockSpec((L, 1, H), lambda b, idx: (0, 0, 0)),                 # input_ln
            pl.BlockSpec((L, H, QKV_TOTAL), lambda b, idx: (0, 0, 0)),         # w_qkv
            pl.BlockSpec((L, Q_SIZE, H), lambda b, idx: (0, 0, 0)),            # w_o
            pl.BlockSpec((L, 1, H), lambda b, idx: (0, 0, 0)),                 # post_ln
            pl.BlockSpec((L, H, INTERMEDIATE), lambda b, idx: (0, 0, 0)),      # w_gate
            pl.BlockSpec((L, H, INTERMEDIATE), lambda b, idx: (0, 0, 0)),      # w_up
            pl.BlockSpec((L, INTERMEDIATE, H), lambda b, idx: (0, 0, 0)),      # w_down
            pl.BlockSpec((1, H), lambda b, idx: (0, 0)),                       # final_ln
            pl.BlockSpec((S, QKV_TOTAL), lambda b, idx: (0, 0)),               # cos table
            pl.BlockSpec((S, QKV_TOTAL), lambda b, idx: (0, 0)),               # sin table
            pl.BlockSpec((1, NUM_Q_PER_KV * S, C), lambda b, idx: (b, 0, 0)),  # stacked mask
            pl.BlockSpec((L, 1, C, KV_SIZE), lambda b, idx: (0, b, 0, 0)),     # k cache
            pl.BlockSpec((L, 1, C, KV_SIZE), lambda b, idx: (0, b, 0, 0)),     # v cache
        ],
        out_specs=(
            pl.BlockSpec((1, S, H), lambda b, idx: (b, 0, 0)),
            pl.BlockSpec((L, 1, C, KV_SIZE), lambda b, idx: (0, b, 0, 0)),
            pl.BlockSpec((L, 1, C, KV_SIZE), lambda b, idx: (0, b, 0, 0)),
        ),
    )

    out, kc_new, vc_new = pl.pallas_call(
        gemma_model_kernel,
        out_shape=(
            jax.ShapeDtypeStruct((B, S, H), jnp.float32),
            jax.ShapeDtypeStruct((L, B, C, KV_SIZE), jnp.float32),
            jax.ShapeDtypeStruct((L, B, C, KV_SIZE), jnp.float32),
        ),
        grid_spec=grid_spec,
        # in-place cache update: inputs 13/14 (kc, vc; indices count the scalar-prefetch arg)
        input_output_aliases={13: 1, 14: 2},
        compiler_params=pltpu.CompilerParams(
            dimension_semantics=("parallel",)),
    )(kv_idx, x,
      params["input_ln"].reshape(L, 1, H), params["w_qkv"], params["w_o"],
      params["post_ln"].reshape(L, 1, H), params["w_gate"], params["w_up"],
      params["w_down"], params["final_ln"].reshape(1, H),
      cos_full, sin_full, mask_g, kc, vc)

    kc_new = kc_new.reshape(L, B, C, NUM_KV_HEADS, HEAD_DIM)
    vc_new = vc_new.reshape(L, B, C, NUM_KV_HEADS, HEAD_DIM)
    new_caches = [(kc_new[i], vc_new[i]) for i in range(L)]
    return out, new_caches


# ----------------------- pure-JAX reference (for verification) -----------------------
def gemma_model_ref(x, params, cos, sin, kv_write_indices, kv_caches, mask):
    B, S, H = x.shape
    n_layers = params["w_qkv"].shape[0]

    def rmsnorm(v, w):
        var = jnp.mean(v * v, axis=-1, keepdims=True)
        return v * jax.lax.rsqrt(var + RMS_EPS) * (1.0 + w)

    def rope(t):
        x1, x2 = t[..., :HEAD_DIM // 2], t[..., HEAD_DIM // 2:]
        c = cos[None, :, None, :]
        s = sin[None, :, None, :]
        return jnp.concatenate([x1 * c - x2 * s, x1 * s + x2 * c], axis=-1)

    h = x
    new_caches = []
    for l in range(n_layers):
        res = h
        xn = rmsnorm(h, params["input_ln"][l])
        qkv = xn @ params["w_qkv"][l]
        xq = qkv[..., :Q_SIZE].reshape(B, S, NUM_HEADS, HEAD_DIM)
        xk = qkv[..., Q_SIZE:Q_SIZE + KV_SIZE].reshape(B, S, NUM_KV_HEADS, HEAD_DIM)
        xv = qkv[..., Q_SIZE + KV_SIZE:].reshape(B, S, NUM_KV_HEADS, HEAD_DIM)
        xq, xk = rope(xq), rope(xk)

        k_cache, v_cache = kv_caches[l]
        k_cache = k_cache.at[:, kv_write_indices].set(xk)
        v_cache = v_cache.at[:, kv_write_indices].set(xv)
        new_caches.append((k_cache, v_cache))

        key = jnp.repeat(k_cache, NUM_Q_PER_KV, axis=2)
        value = jnp.repeat(v_cache, NUM_Q_PER_KV, axis=2)

        q = jnp.transpose(xq, (0, 2, 1, 3)) * SCALING
        k = jnp.transpose(key, (0, 2, 1, 3))
        v = jnp.transpose(value, (0, 2, 1, 3))
        s = jnp.einsum("bhqd,bhkd->bhqk", q, k)
        s = s + mask[:, None]
        p = jax.nn.softmax(s, axis=-1)
        o = jnp.einsum("bhqk,bhkd->bhqd", p, v)
        o = jnp.transpose(o, (0, 2, 1, 3)).reshape(B, S, Q_SIZE)
        h = res + o @ params["w_o"][l]

        res = h
        hn = rmsnorm(h, params["post_ln"][l])
        gate = hn @ params["w_gate"][l]
        gate = 0.5 * gate * (1.0 + jnp.tanh(GELU_C * (gate + 0.044715 * gate ** 3)))
        up = hn @ params["w_up"][l]
        h = res + (gate * up) @ params["w_down"][l]

    h = rmsnorm(h, params["final_ln"])
    return h, new_caches


# ----------------------- setup helpers -----------------------
def precompute_cos_sin(seq_len, dim, theta=10000.0):
    inv = 1.0 / (theta ** (jnp.arange(0, dim, 2, dtype=jnp.float32) / dim))
    t = jnp.arange(seq_len, dtype=jnp.float32)
    freqs = jnp.outer(t, inv)
    return jnp.cos(freqs), jnp.sin(freqs)


def init_params(key):
    ks = jax.random.split(key, 8)
    sc = 0.05
    L = NUM_LAYERS
    return {
        "input_ln": jax.random.normal(ks[0], (L, HIDDEN), jnp.float32) * 0.1,
        "w_qkv":    jax.random.normal(ks[1], (L, HIDDEN, QKV_TOTAL), jnp.float32) * sc,
        "w_o":      jax.random.normal(ks[2], (L, Q_SIZE, HIDDEN), jnp.float32) * sc,
        "post_ln":  jax.random.normal(ks[3], (L, HIDDEN), jnp.float32) * 0.1,
        "w_gate":   jax.random.normal(ks[4], (L, HIDDEN, INTERMEDIATE), jnp.float32) * sc,
        "w_up":     jax.random.normal(ks[5], (L, HIDDEN, INTERMEDIATE), jnp.float32) * sc,
        "w_down":   jax.random.normal(ks[6], (L, INTERMEDIATE, HIDDEN), jnp.float32) * sc,
        "final_ln": jax.random.normal(ks[7], (HIDDEN,), jnp.float32) * 0.1,
    }


if __name__ == "__main__":
    B, S = 2, 8
    root = jax.random.PRNGKey(0)
    k_params, k_x = jax.random.split(root)
    params = init_params(k_params)

    x = jax.random.normal(k_x, (B, S, HIDDEN), jnp.float32)
    cos, sin = precompute_cos_sin(S, HEAD_DIM)
    kv_write_indices = jnp.arange(S, dtype=jnp.int32)
    kv_caches = [(jnp.zeros((B, S, NUM_KV_HEADS, HEAD_DIM), jnp.float32),
                  jnp.zeros((B, S, NUM_KV_HEADS, HEAD_DIM), jnp.float32))
                 for _ in range(NUM_LAYERS)]

    causal = jnp.tril(jnp.ones((S, S), dtype=bool))
    mask = jnp.where(causal, 0.0, -1e9).astype(jnp.float32)
    mask = jnp.broadcast_to(mask, (B, S, S))

    out, new_caches = gemma_model_pallas(
        x, params, cos, sin, kv_write_indices, kv_caches, mask)
    out = jax.block_until_ready(out)

    ref_out, ref_caches = gemma_model_ref(
        x, params, cos, sin, kv_write_indices, kv_caches, mask)

    assert out.shape == (B, S, HIDDEN)
    assert jnp.allclose(out, ref_out, atol=1e-3, rtol=1e-3), (
        float(jnp.max(jnp.abs(out - ref_out))))
    for (kp, vp), (kr, vr) in zip(new_caches, ref_caches):
        assert jnp.allclose(kp, kr, atol=1e-4, rtol=1e-4), (
            float(jnp.max(jnp.abs(kp - kr))))
        assert jnp.allclose(vp, vr, atol=1e-4, rtol=1e-4), (
            float(jnp.max(jnp.abs(vp - vr))))
    print("KERNEL_OK")
</pallas_src>

<mosaic_0001>
module attributes {stable_mosaic.version = 11 : i64} {
  func.func @gemma_model_kernel(%arg0: i32, %arg1: memref<8xi32, #tpu.memory_space<smem>>, %arg2: memref<1x8x32xf32, #tpu.memory_space<vmem>>, %arg3: memref<2x1x32xf32, #tpu.memory_space<vmem>>, %arg4: memref<2x32x128xf32, #tpu.memory_space<vmem>>, %arg5: memref<2x64x32xf32, #tpu.memory_space<vmem>>, %arg6: memref<2x1x32xf32, #tpu.memory_space<vmem>>, %arg7: memref<2x32x64xf32, #tpu.memory_space<vmem>>, %arg8: memref<2x32x64xf32, #tpu.memory_space<vmem>>, %arg9: memref<2x64x32xf32, #tpu.memory_space<vmem>>, %arg10: memref<1x32xf32, #tpu.memory_space<vmem>>, %arg11: memref<8x128xf32, #tpu.memory_space<vmem>>, %arg12: memref<8x128xf32, #tpu.memory_space<vmem>>, %arg13: memref<1x16x8xf32, #tpu.memory_space<vmem>>, %arg14: memref<2x1x8x32xf32, #tpu.memory_space<vmem>>, %arg15: memref<2x1x8x32xf32, #tpu.memory_space<vmem>>, %arg16: memref<1x8x32xf32, #tpu.memory_space<vmem>>, %arg17: memref<2x1x8x32xf32, #tpu.memory_space<vmem>>, %arg18: memref<2x1x8x32xf32, #tpu.memory_space<vmem>>) attributes {dimension_semantics = [#tpu.dimension_semantics<parallel>], iteration_bounds = array<i64: 2>, scalar_prefetch = 1 : i64, scratch_operands = 0 : i64, tpu.core_type = #tpu.core_type<tc>, window_params = [{transform_indices = @transform_0, window_bounds = array<i64: 1, 8, 32>}, {pipeline_mode = #tpu.pipeline_mode<synchronous>, transform_indices = @transform_1, window_bounds = array<i64: 2, 1, 32>}, {pipeline_mode = #tpu.pipeline_mode<synchronous>, transform_indices = @transform_2, window_bounds = array<i64: 2, 32, 128>}, {pipeline_mode = #tpu.pipeline_mode<synchronous>, transform_indices = @transform_3, window_bounds = array<i64: 2, 64, 32>}, {pipeline_mode = #tpu.pipeline_mode<synchronous>, transform_indices = @transform_4, window_bounds = array<i64: 2, 1, 32>}, {pipeline_mode = #tpu.pipeline_mode<synchronous>, transform_indices = @transform_5, window_bounds = array<i64: 2, 32, 64>}, {pipeline_mode = #tpu.pipeline_mode<synchronous>, transform_indices = @transform_6, window_bounds = array<i64: 2, 32, 64>}, {pipeline_mode = #tpu.pipeline_mode<synchronous>, transform_indices = @transform_7, window_bounds = array<i64: 2, 64, 32>}, {pipeline_mode = #tpu.pipeline_mode<synchronous>, transform_indices = @transform_8, window_bounds = array<i64: 1, 32>}, {pipeline_mode = #tpu.pipeline_mode<synchronous>, transform_indices = @transform_9, window_bounds = array<i64: 8, 128>}, {pipeline_mode = #tpu.pipeline_mode<synchronous>, transform_indices = @transform_10, window_bounds = array<i64: 8, 128>}, {transform_indices = @transform_11, window_bounds = array<i64: 1, 16, 8>}, {transform_indices = @transform_12, window_bounds = array<i64: 2, 1, 8, 32>}, {transform_indices = @transform_13, window_bounds = array<i64: 2, 1, 8, 32>}, {transform_indices = @transform_14, window_bounds = array<i64: 1, 8, 32>}, {transform_indices = @transform_15, window_bounds = array<i64: 2, 1, 8, 32>}, {transform_indices = @transform_16, window_bounds = array<i64: 2, 1, 8, 32>}]} {
    %c0 = arith.constant 0 : index
    %c0_0 = arith.constant 0 : index
    %c0_1 = arith.constant 0 : index
    %c0_2 = arith.constant 0 : index
    %0 = vector.load %arg14[%c0, %c0_0, %c0_1, %c0_2] : memref<2x1x8x32xf32, #tpu.memory_space<vmem>>, vector<2x1x8x32xf32>
    %c0_3 = arith.constant 0 : index
    %c0_4 = arith.constant 0 : index
    %c0_5 = arith.constant 0 : index
    %c0_6 = arith.constant 0 : index
    %1 = vector.load %arg17[%c0_3, %c0_4, %c0_5, %c0_6] : memref<2x1x8x32xf32, #tpu.memory_space<vmem>>, vector<2x1x8x32xf32>
    tpu.vector_store %arg17[%c0_3, %c0_4, %c0_5, %c0_6], %0 {strides = array<i32>} : memref<2x1x8x32xf32, #tpu.memory_space<vmem>>, vector<2x1x8x32xf32>,
    %c0_7 = arith.constant 0 : index
    %c0_8 = arith.constant 0 : index
    %c0_9 = arith.constant 0 : index
    %c0_10 = arith.constant 0 : index
    %2 = vector.load %arg15[%c0_7, %c0_8, %c0_9, %c0_10] : memref<2x1x8x32xf32, #tpu.memory_space<vmem>>, vector<2x1x8x32xf32>
    %c0_11 = arith.constant 0 : index
    %c0_12 = arith.constant 0 : index
    %c0_13 = arith.constant 0 : index
    %c0_14 = arith.constant 0 : index
    %3 = vector.load %arg18[%c0_11, %c0_12, %c0_13, %c0_14] : memref<2x1x8x32xf32, #tpu.memory_space<vmem>>, vector<2x1x8x32xf32>
    tpu.vector_store %arg18[%c0_11, %c0_12, %c0_13, %c0_14], %2 {strides = array<i32>} : memref<2x1x8x32xf32, #tpu.memory_space<vmem>>, vector<2x1x8x32xf32>,
    %c0_15 = arith.constant 0 : index
    %c0_16 = arith.constant 0 : index
    %c0_17 = arith.constant 0 : index
    %4 = vector.load %arg2[%c0_15, %c0_16, %c0_17] : memref<1x8x32xf32, #tpu.memory_space<vmem>>, vector<1x8x32xf32>
    %5 = vector.shape_cast %4 : vector<1x8x32xf32> to vector<8x32xf32>
    %c0_18 = arith.constant 0 : index
    %c0_19 = arith.constant 0 : index
    %6 = vector.load %arg11[%c0_18, %c0_19] : memref<8x128xf32, #tpu.memory_space<vmem>>, vector<8x128xf32>
    %c0_20 = arith.constant 0 : index
    %c0_21 = arith.constant 0 : index
    %7 = vector.load %arg12[%c0_20, %c0_21] : memref<8x128xf32, #tpu.memory_space<vmem>>, vector<8x128xf32>
    %c0_22 = arith.constant 0 : index
    %c0_23 = arith.constant 0 : index
    %c0_24 = arith.constant 0 : index
    %8 = vector.load %arg13[%c0_22, %c0_23, %c0_24] : memref<1x16x8xf32, #tpu.memory_space<vmem>>, vector<1x16x8xf32>
    %9 = vector.shape_cast %8 : vector<1x16x8xf32> to vector<16x8xf32>
    %10 = tpu.iota {dimensions = array<i32: 1>} : vector<1x128xi32>
    %c16_i32 = arith.constant 16 : i32
    %c0_i32 = arith.constant 0 : i32
    %11 = arith.cmpi eq, %c16_i32, %c0_i32 : i32
    %c1_i32 = arith.constant 1 : i32
    %12 = arith.select %11, %c1_i32, %c16_i32 : i32
    %13 = vector.broadcast %12 : i32 to vector<1x128xi32>
    %14 = arith.remsi %10, %13 : vector<1x128xi32>
    %c0_i32_25 = arith.constant 0 : i32
    %15 = vector.broadcast %c0_i32_25 : i32 to vector<1x128xi32>
    %16 = arith.cmpi ne, %14, %15 : vector<1x128xi32>
    %c0_i32_26 = arith.constant 0 : i32
    %17 = vector.broadcast %c0_i32_26 : i32 to vector<1x128xi32>
    %18 = arith.cmpi slt, %14, %17 : vector<1x128xi32>
    %c0_i32_27 = arith.constant 0 : i32
    %19 = arith.cmpi slt, %12, %c0_i32_27 : i32
    %20 = vector.broadcast %19 : i1 to vector<1x128xi1>
    %21 = vector.broadcast %20 : vector<1x128xi1> to vector<1x128xi1>
    %22 = arith.xori %18, %21 : vector<1x128xi1>
    %23 = arith.andi %22, %16 : vector<1x128xi1>
    %24 = vector.broadcast %12 : i32 to vector<1x128xi32>
    %25 = arith.addi %14, %24 : vector<1x128xi32>
    %26 = arith.select %23, %25, %14 : vector<1x128xi1>, vector<1x128xi32>
    %c8_i32 = arith.constant 8 : i32
    %27 = vector.broadcast %c8_i32 : i32 to vector<1x128xi32>
    %28 = arith.cmpi sge, %26, %27 : vector<1x128xi32>
    %c0_28 = arith.constant 0 : index
    %c0_29 = arith.constant 0 : index
    %c0_30 = arith.constant 0 : index
    %29 = vector.load %arg3[%c0_28, %c0_29, %c0_30] : memref<2x1x32xf32, #tpu.memory_space<vmem>>, vector<1x1x32xf32>
    %30 = vector.shape_cast %29 : vector<1x1x32xf32> to vector<1x32xf32>
    %31 = arith.mulf %5, %5 : vector<8x32xf32>
    %cst = arith.constant dense<0.000000e+00> : vector<8xf32>
    %32 = vector.multi_reduction <add>, %31, %cst [1] : vector<8x32xf32> to vector<8xf32>
    %33 = vector.shape_cast %32 : vector<8xf32> to vector<8x1xf32>
    %cst_31 = arith.constant 3.200000e+01 : f32
    %34 = vector.broadcast %cst_31 : f32 to vector<8x1xf32>
    %35 = arith.divf %33, %34 : vector<8x1xf32>
    %cst_32 = arith.constant 9.99999997E-7 : f32
    %36 = vector.broadcast %cst_32 : f32 to vector<8x1xf32>
    %37 = arith.addf %35, %36 : vector<8x1xf32>
    %38 = math.rsqrt %37 : vector<8x1xf32>
    %39 = vector.broadcast %38 : vector<8x1xf32> to vector<8x32xf32>
    %40 = arith.mulf %5, %39 : vector<8x32xf32>
    %cst_33 = arith.constant 1.000000e+00 : f32
    %41 = vector.broadcast %cst_33 : f32 to vector<1x32xf32>
    %42 = arith.addf %41, %30 : vector<1x32xf32>
    %43 = vector.broadcast %42 : vector<1x32xf32> to vector<8x32xf32>
    %44 = arith.mulf %40, %43 : vector<8x32xf32>
    %c0_34 = arith.constant 0 : index
    %c0_35 = arith.constant 0 : index
    %c0_36 = arith.constant 0 : index
    %45 = vector.load %arg4[%c0_34, %c0_35, %c0_36] : memref<2x32x128xf32, #tpu.memory_space<vmem>>, vector<1x32x128xf32>
    %46 = vector.shape_cast %45 : vector<1x32x128xf32> to vector<32x128xf32>
    %cst_37 = arith.constant dense<0.000000e+00> : vector<8x128xf32>
    %47 = tpu.matmul %44, %46, %cst_37 {dimension_numbers = #tpu.dot_dimension_numbers<[1], [0], [0], [1], [0, 0, 1, 1], [], []>} : vector<8x32xf32>, vector<32x128xf32>, vector<8x128xf32> -> vector<8x128xf32>
    %c8_i32_38 = arith.constant 8 : i32
    %48 = tpu.dynamic_rotate %47 by %c8_i32_38 dim 1 : vector<8x128xf32>, i32 -> vector<8x128xf32>
    %c120_i32 = arith.constant 120 : i32
    %49 = tpu.dynamic_rotate %47 by %c120_i32 dim 1 : vector<8x128xf32>, i32 -> vector<8x128xf32>
    %50 = vector.shape_cast %28 : vector<1x128xi1> to vector<1x128xi1>
    %51 = vector.broadcast %50 : vector<1x128xi1> to vector<8x128xi1>
    %52 = arith.select %51, %48, %49 : vector<8x128xi1>, vector<8x128xf32>
    %53 = arith.mulf %47, %6 : vector<8x128xf32>
    %54 = arith.mulf %52, %7 : vector<8x128xf32>
    %55 = arith.addf %53, %54 : vector<8x128xf32>
    %56 = vector.extract_strided_slice %55 {offsets = [0, 64], sizes = [8, 32], strides = [1, 1]} : vector<8x128xf32> to vector<8x32xf32>
    %57 = vector.extract_strided_slice %55 {offsets = [0, 96], sizes = [8, 32], strides = [1, 1]} : vector<8x128xf32> to vector<8x32xf32>
    %c0_39 = arith.constant 0 : index
    %58 = memref.load %arg1[%c0_39] : memref<8xi32, #tpu.memory_space<smem>>
    %59 = vector.extract_strided_slice %56 {offsets = [0, 0], sizes = [1, 32], strides = [1, 1]} : vector<8x32xf32> to vector<1x32xf32>
    %c0_40 = arith.constant 0 : index
    %c0_41 = arith.constant 0 : index
    %60 = arith.index_cast %58 : i32 to index
    %c0_42 = arith.constant 0 : index
    %61 = vector.load %arg17[%c0_40, %c0_41, %60, %c0_42] : memref<2x1x8x32xf32, #tpu.memory_space<vmem>>, vector<1x1x1x32xf32>
    %62 = vector.shape_cast %61 : vector<1x1x1x32xf32> to vector<1x32xf32>
    %63 = vector.shape_cast %59 : vector<1x32xf32> to vector<1x1x1x32xf32>
    tpu.vector_store %arg17[%c0_40, %c0_41, %60, %c0_42], %63 {strides = array<i32>} : memref<2x1x8x32xf32, #tpu.memory_space<vmem>>, vector<1x1x1x32xf32>,
    %64 = vector.extract_strided_slice %57 {offsets = [0, 0], sizes = [1, 32], strides = [1, 1]} : vector<8x32xf32> to vector<1x32xf32>
    %c0_43 = arith.constant 0 : index
    %c0_44 = arith.constant 0 : index
    %65 = arith.index_cast %58 : i32 to index
    %c0_45 = arith.constant 0 : index
    %66 = vector.load %arg18[%c0_43, %c0_44, %65, %c0_45] : memref<2x1x8x32xf32, #tpu.memory_space<vmem>>, vector<1x1x1x32xf32>
    %67 = vector.shape_cast %66 : vector<1x1x1x32xf32> to vector<1x32xf32>
    %68 = vector.shape_cast %64 : vector<1x32xf32> to vector<1x1x1x32xf32>
    tpu.vector_store %arg18[%c0_43, %c0_44, %65, %c0_45], %68 {strides = array<i32>} : memref<2x1x8x32xf32, #tpu.memory_space<vmem>>, vector<1x1x1x32xf32>,
    %c1 = arith.constant 1 : index
    %69 = memref.load %arg1[%c1] : memref<8xi32, #tpu.memory_space<smem>>
    %70 = vector.extract_strided_slice %56 {offsets = [1, 0], sizes = [1, 32], strides = [1, 1]} : vector<8x32xf32> to vector<1x32xf32>
    %c0_46 = arith.constant 0 : index
    %c0_47 = arith.constant 0 : index
    %71 = arith.index_cast %69 : i32 to index
    %c0_48 = arith.constant 0 : index
    %72 = vector.load %arg17[%c0_46, %c0_47, %71, %c0_48] : memref<2x1x8x32xf32, #tpu.memory_space<vmem>>, vector<1x1x1x32xf32>
    %73 = vector.shape_cast %72 : vector<1x1x1x32xf32> to vector<1x32xf32>
    %74 = vector.shape_cast %70 : vector<1x32xf32> to vector<1x1x1x32xf32>
    tpu.vector_store %arg17[%c0_46, %c0_47, %71, %c0_48], %74 {strides = array<i32>} : memref<2x1x8x32xf32, #tpu.memory_space<vmem>>, vector<1x1x1x32xf32>,
    %75 = vector.extract_strided_slice %57 {offsets = [1, 0], sizes = [1, 32], strides = [1, 1]} : vector<8x32xf32> to vector<1x32xf32>
    %c0_49 = arith.constant 0 : index
    %c0_50 = arith.constant 0 : index
    %76 = arith.index_cast %69 : i32 to index
    %c0_51 = arith.constant 0 : index
    %77 = vector.load %arg18[%c0_49, %c0_50, %76, %c0_51] : memref<2x1x8x32xf32, #tpu.memory_space<vmem>>, vector<1x1x1x32xf32>
    %78 = vector.shape_cast %77 : vector<1x1x1x32xf32> to vector<1x32xf32>
    %79 = vector.shape_cast %75 : vector<1x32xf32> to vector<1x1x1x32xf32>
    tpu.vector_store %arg18[%c0_49, %c0_50, %76, %c0_51], %79 {strides = array<i32>} : memref<2x1x8x32xf32, #tpu.memory_space<vmem>>, vector<1x1x1x32xf32>,
    %c2 = arith.constant 2 : index
    %80 = memref.load %arg1[%c2] : memref<8xi32, #tpu.memory_space<smem>>
    %81 = vector.extract_strided_slice %56 {offsets = [2, 0], sizes = [1, 32], strides = [1, 1]} : vector<8x32xf32> to vector<1x32xf32>
    %c0_52 = arith.constant 0 : index
    %c0_53 = arith.constant 0 : index
    %82 = arith.index_cast %80 : i32 to index
    %c0_54 = arith.constant 0 : index
    %83 = vector.load %arg17[%c0_52, %c0_53, %82, %c0_54] : memref<2x1x8x32xf32, #tpu.memory_space<vmem>>, vector<1x1x1x32xf32>
    %84 = vector.shape_cast %83 : vector<1x1x1x32xf32> to vector<1x32xf32>
    %85 = vector.shape_cast %81 : vector<1x32xf32> to vector<1x1x1x32xf32>
    tpu.vector_store %arg17[%c0_52, %c0_53, %82, %c0_54], %85 {strides = array<i32>} : memref<2x1x8x32xf32, #tpu.memory_space<vmem>>, vector<1x1x1x32xf32>,
    %86 = vector.extract_strided_slice %57 {offsets = [2, 0], sizes = [1, 32], strides = [1, 1]} : vector<8x32xf32> to vector<1x32xf32>
    %c0_55 = arith.constant 0 : index
    %c0_56 = arith.constant 0 : index
    %87 = arith.index_cast %80 : i32 to index
    %c0_57 = arith.constant 0 : index
    %88 = vector.load %arg18[%c0_55, %c0_56, %87, %c0_57] : memref<2x1x8x32xf32, #tpu.memory_space<vmem>>, vector<1x1x1x32xf32>
    %89 = vector.shape_cast %88 : vector<1x1x1x32xf32> to vector<1x32xf32>
    %90 = vector.shape_cast %86 : vector<1x32xf32> to vector<1x1x1x32xf32>
    tpu.vector_store %arg18[%c0_55, %c0_56, %87, %c0_57], %90 {strides = array<i32>} : memref<2x1x8x32xf32, #tpu.memory_space<vmem>>, vector<1x1x1x32xf32>,
    %c3 = arith.constant 3 : index
    %91 = memref.load %arg1[%c3] : memref<8xi32, #tpu.memory_space<smem>>
    %92 = vector.extract_strided_slice %56 {offsets = [3, 0], sizes = [1, 32], strides = [1, 1]} : vector<8x32xf32> to vector<1x32xf32>
    %c0_58 = arith.constant 0 : index
    %c0_59 = arith.constant 0 : index
    %93 = arith.index_cast %91 : i32 to index
    %c0_60 = arith.constant 0 : index
    %94 = vector.load %arg17[%c0_58, %c0_59, %93, %c0_60] : memref<2x1x8x32xf32, #tpu.memory_space<vmem>>, vector<1x1x1x32xf32>
    %95 = vector.shape_cast %94 : vector<1x1x1x32xf32> to vector<1x32xf32>
    %96 = vector.shape_cast %92 : vector<1x32xf32> to vector<1x1x1x32xf32>
    tpu.vector_store %arg17[%c0_58, %c0_59, %93, %c0_60], %96 {strides = array<i32>} : memref<2x1x8x32xf32, #tpu.memory_space<vmem>>, vector<1x1x1x32xf32>,
    %97 = vector.extract_strided_slice %57 {offsets = [3, 0], sizes = [1, 32], strides = [1, 1]} : vector<8x32xf32> to vector<1x32xf32>
    %c0_61 = arith.constant 0 : index
    %c0_62 = arith.constant 0 : index
    %98 = arith.index_cast %91 : i32 to index
    %c0_63 = arith.constant 0 : index
    %99 = vector.load %arg18[%c0_61, %c0_62, %98, %c0_63] : memref<2x1x8x32xf32, #tpu.memory_space<vmem>>, vector<1x1x1x32xf32>
    %100 = vector.shape_cast %99 : vector<1x1x1x32xf32> to vector<1x32xf32>
    %101 = vector.shape_cast %97 : vector<1x32xf32> to vector<1x1x1x32xf32>
    tpu.vector_store %arg18[%c0_61, %c0_62, %98, %c0_63], %101 {strides = array<i32>} : memref<2x1x8x32xf32, #tpu.memory_space<vmem>>, vector<1x1x1x32xf32>,
    %c4 = arith.constant 4 : index
    %102 = memref.load %arg1[%c4] : memref<8xi32, #tpu.memory_space<smem>>
    %103 = vector.extract_strided_slice %56 {offsets = [4, 0], sizes = [1, 32], strides = [1, 1]} : vector<8x32xf32> to vector<1x32xf32>
    %c0_64 = arith.constant 0 : index
    %c0_65 = arith.constant 0 : index
    %104 = arith.index_cast %102 : i32 to index
    %c0_66 = arith.constant 0 : index
    %105 = vector.load %arg17[%c0_64, %c0_65, %104, %c0_66] : memref<2x1x8x32xf32, #tpu.memory_space<vmem>>, vector<1x1x1x32xf32>
    %106 = vector.shape_cast %105 : vector<1x1x1x32xf32> to vector<1x32xf32>
    %107 = vector.shape_cast %103 : vector<1x32xf32> to vector<1x1x1x32xf32>
    tpu.vector_store %arg17[%c0_64, %c0_65, %104, %c0_66], %107 {strides = array<i32>} : memref<2x1x8x32xf32, #tpu.memory_space<vmem>>, vector<1x1x1x32xf32>,
    %108 = vector.extract_strided_slice %57 {offsets = [4, 0], sizes = [1, 32], strides = [1, 1]} : vector<8x32xf32> to vector<1x32xf32>
    %c0_67 = arith.constant 0 : index
    %c0_68 = arith.constant 0 : index
    %109 = arith.index_cast %102 : i32 to index
    %c0_69 = arith.constant 0 : index
    %110 = vector.load %arg18[%c0_67, %c0_68, %109, %c0_69] : memref<2x1x8x32xf32, #tpu.memory_space<vmem>>, vector<1x1x1x32xf32>
    %111 = vector.shape_cast %110 : vector<1x1x1x32xf32> to vector<1x32xf32>
    %112 = vector.shape_cast %108 : vector<1x32xf32> to vector<1x1x1x32xf32>
    tpu.vector_store %arg18[%c0_67, %c0_68, %109, %c0_69], %112 {strides = array<i32>} : memref<2x1x8x32xf32, #tpu.memory_space<vmem>>, vector<1x1x1x32xf32>,
    %c5 = arith.constant 5 : index
    %113 = memref.load %arg1[%c5] : memref<8xi32, #tpu.memory_space<smem>>
    %114 = vector.extract_strided_slice %56 {offsets = [5, 0], sizes = [1, 32], strides = [1, 1]} : vector<8x32xf32> to vector<1x32xf32>
    %c0_70 = arith.constant 0 : index
    %c0_71 = arith.constant 0 : index
    %115 = arith.index_cast %113 : i32 to index
    %c0_72 = arith.constant 0 : index
    %116 = vector.load %arg17[%c0_70, %c0_71, %115, %c0_72] : memref<2x1x8x32xf32, #tpu.memory_space<vmem>>, vector<1x1x1x32xf32>
    %117 = vector.shape_cast %116 : vector<1x1x1x32xf32> to vector<1x32xf32>
    %118 = vector.shape_cast %114 : vector<1x32xf32> to vector<1x1x1x32xf32>
    tpu.vector_store %arg17[%c0_70, %c0_71, %115, %c0_72], %118 {strides = array<i32>} : memref<2x1x8x32xf32, #tpu.memory_space<vmem>>, vector<1x1x1x32xf32>,
    %119 = vector.extract_strided_slice %57 {offsets = [5, 0], sizes = [1, 32], strides = [1, 1]} : vector<8x32xf32> to vector<1x32xf32>
    %c0_73 = arith.constant 0 : index
    %c0_74 = arith.constant 0 : index
    %120 = arith.index_cast %113 : i32 to index
    %c0_75 = arith.constant 0 : index
    %121 = vector.load %arg18[%c0_73, %c0_74, %120, %c0_75] : memref<2x1x8x32xf32, #tpu.memory_space<vmem>>, vector<1x1x1x32xf32>
    %122 = vector.shape_cast %121 : vector<1x1x1x32xf32> to vector<1x32xf32>
    %123 = vector.shape_cast %119 : vector<1x32xf32> to vector<1x1x1x32xf32>
    tpu.vector_store %arg18[%c0_73, %c0_74, %120, %c0_75], %123 {strides = array<i32>} : memref<2x1x8x32xf32, #tpu.memory_space<vmem>>, vector<1x1x1x32xf32>,
    %c6 = arith.constant 6 : index
    %124 = memref.load %arg1[%c6] : memref<8xi32, #tpu.memory_space<smem>>
    %125 = vector.extract_strided_slice %56 {offsets = [6, 0], sizes = [1, 32], strides = [1, 1]} : vector<8x32xf32> to vector<1x32xf32>
    %c0_76 = arith.constant 0 : index
    %c0_77 = arith.constant 0 : index
    %126 = arith.index_cast %124 : i32 to index
    %c0_78 = arith.constant 0 : index
    %127 = vector.load %arg17[%c0_76, %c0_77, %126, %c0_78] : memref<2x1x8x32xf32, #tpu.memory_space<vmem>>, vector<1x1x1x32xf32>
    %128 = vector.shape_cast %127 : vector<1x1x1x32xf32> to vector<1x32xf32>
    %129 = vector.shape_cast %125 : vector<1x32xf32> to vector<1x1x1x32xf32>
    tpu.vector_store %arg17[%c0_76, %c0_77, %126, %c0_78], %129 {strides = array<i32>} : memref<2x1x8x32xf32, #tpu.memory_space<vmem>>, vector<1x1x1x32xf32>,
    %130 = vector.extract_strided_slice %57 {offsets = [6, 0], sizes = [1, 32], strides = [1, 1]} : vector<8x32xf32> to vector<1x32xf32>
    %c0_79 = arith.constant 0 : index
    %c0_80 = arith.constant 0 : index
    %131 = arith.index_cast %124 : i32 to index
    %c0_81 = arith.constant 0 : index
    %132 = vector.load %arg18[%c0_79, %c0_80, %131, %c0_81] : memref<2x1x8x32xf32, #tpu.memory_space<vmem>>, vector<1x1x1x32xf32>
    %133 = vector.shape_cast %132 : vector<1x1x1x32xf32> to vector<1x32xf32>
    %134 = vector.shape_cast %130 : vector<1x32xf32> to vector<1x1x1x32xf32>
    tpu.vector_store %arg18[%c0_79, %c0_80, %131, %c0_81], %134 {strides = array<i32>} : memref<2x1x8x32xf32, #tpu.memory_space<vmem>>, vector<1x1x1x32xf32>,
    %c7 = arith.constant 7 : index
    %135 = memref.load %arg1[%c7] : memref<8xi32, #tpu.memory_space<smem>>
    %136 = vector.extract_strided_slice %56 {offsets = [7, 0], sizes = [1, 32], strides = [1, 1]} : vector<8x32xf32> to vector<1x32xf32>
    %c0_82 = arith.constant 0 : index
    %c0_83 = arith.constant 0 : index
    %137 = arith.index_cast %135 : i32 to index
    %c0_84 = arith.constant 0 : index
    %138 = vector.load %arg17[%c0_82, %c0_83, %137, %c0_84] : memref<2x1x8x32xf32, #tpu.memory_space<vmem>>, vector<1x1x1x32xf32>
    %139 = vector.shape_cast %138 : vector<1x1x1x32xf32> to vector<1x32xf32>
    %140 = vector.shape_cast %136 : vector<1x32xf32> to vector<1x1x1x32xf32>
    tpu.vector_store %arg17[%c0_82, %c0_83, %137, %c0_84], %140 {strides = array<i32>} : memref<2x1x8x32xf32, #tpu.memory_space<vmem>>, vector<1x1x1x32xf32>,
    %141 = vector.extract_strided_slice %57 {offsets = [7, 0], sizes = [1, 32], strides = [1, 1]} : vector<8x32xf32> to vector<1x32xf32>
    %c0_85 = arith.constant 0 : index
    %c0_86 = arith.constant 0 : index
    %142 = arith.index_cast %135 : i32 to index
    %c0_87 = arith.constant 0 : index
    %143 = vector.load %arg18[%c0_85, %c0_86, %142, %c0_87] : memref<2x1x8x32xf32, #tpu.memory_space<vmem>>, vector<1x1x1x32xf32>
    %144 = vector.shape_cast %143 : vector<1x1x1x32xf32> to vector<1x32xf32>
    %145 = vector.shape_cast %141 : vector<1x32xf32> to vector<1x1x1x32xf32>
    tpu.vector_store %arg18[%c0_85, %c0_86, %142, %c0_87], %145 {strides = array<i32>} : memref<2x1x8x32xf32, #tpu.memory_space<vmem>>, vector<1x1x1x32xf32>,
    %c0_88 = arith.constant 0 : index
    %c0_89 = arith.constant 0 : index
    %c0_90 = arith.constant 0 : index
    %c0_91 = arith.constant 0 : index
    %146 = vector.load %arg17[%c0_88, %c0_89, %c0_90, %c0_91] : memref<2x1x8x32xf32, #tpu.memory_space<vmem>>, vector<1x1x8x32xf32>
    %147 = vector.shape_cast %146 : vector<1x1x8x32xf32> to vector<8x32xf32>
    %c0_92 = arith.constant 0 : index
    %c0_93 = arith.constant 0 : index
    %c0_94 = arith.constant 0 : index
    %c0_95 = arith.constant 0 : index
    %148 = vector.load %arg18[%c0_92, %c0_93, %c0_94, %c0_95] : memref<2x1x8x32xf32, #tpu.memory_space<vmem>>, vector<1x1x8x32xf32>
    %149 = vector.shape_cast %148 : vector<1x1x8x32xf32> to vector<8x32xf32>
    %150 = vector.extract_strided_slice %55 {offsets = [0, 0], sizes = [8, 16], strides = [1, 1]} : vector<8x128xf32> to vector<8x16xf32>
    %151 = vector.extract_strided_slice %55 {offsets = [0, 16], sizes = [8, 16], strides = [1, 1]} : vector<8x128xf32> to vector<8x16xf32>
    %152 = tpu.concatenate %150, %151 in 0 : vector<8x16xf32>, vector<8x16xf32> -> vector<16x16xf32>
    %153 = vector.extract_strided_slice %147 {offsets = [0, 0], sizes = [8, 16], strides = [1, 1]} : vector<8x32xf32> to vector<8x16xf32>
    %154 = vector.extract_strided_slice %149 {offsets = [0, 0], sizes = [8, 16], strides = [1, 1]} : vector<8x32xf32> to vector<8x16xf32>
    %cst_96 = arith.constant dense<0.000000e+00> : vector<16x8xf32>
    %155 = tpu.matmul %152, %153, %cst_96 {dimension_numbers = #tpu.dot_dimension_numbers<[1], [1], [0], [0], [0, 0, 1, 0], [], []>} : vector<16x16xf32>, vector<8x16xf32>, vector<16x8xf32> -> vector<16x8xf32>
    %156 = arith.addf %155, %9 : vector<16x8xf32>
    %cst_97 = arith.constant dense<0xFF800000> : vector<16xf32>
    %157 = vector.multi_reduction <maximumf>, %156, %cst_97 [1] : vector<16x8xf32> to vector<16xf32>
    %158 = vector.shape_cast %157 : vector<16xf32> to vector<16x1xf32>
    %159 = vector.broadcast %158 : vector<16x1xf32> to vector<16x8xf32>
    %160 = arith.subf %156, %159 : vector<16x8xf32>
    %161 = math.exp %160 : vector<16x8xf32>
    %cst_98 = arith.constant dense<0.000000e+00> : vector<16xf32>
    %162 = vector.multi_reduction <add>, %161, %cst_98 [1] : vector<16x8xf32> to vector<16xf32>
    %163 = vector.shape_cast %162 : vector<16xf32> to vector<16x1xf32>
    %cst_99 = arith.constant dense<0.000000e+00> : vector<16x16xf32>
    %164 = tpu.matmul %161, %154, %cst_99 {dimension_numbers = #tpu.dot_dimension_numbers<[1], [0], [0], [1], [0, 0, 1, 1], [], []>} : vector<16x8xf32>, vector<8x16xf32>, vector<16x16xf32> -> vector<16x16xf32>
    %165 = tpu.reciprocal %163 {approx = true} : vector<16x1xf32> -> vector<16x1xf32>
    %166 = vector.broadcast %165 : vector<16x1xf32> to vector<16x16xf32>
    %167 = arith.mulf %164, %166 : vector<16x16xf32>
    %168 = vector.extract_strided_slice %167 {offsets = [0, 0], sizes = [8, 16], strides = [1, 1]} : vector<16x16xf32> to vector<8x16xf32>
    %169 = vector.extract_strided_slice %167 {offsets = [8, 0], sizes = [8, 16], strides = [1, 1]} : vector<16x16xf32> to vector<8x16xf32>
    %170 = tpu.concatenate %168, %169 in 1 : vector<8x16xf32>, vector<8x16xf32> -> vector<8x32xf32>
    %171 = vector.extract_strided_slice %55 {offsets = [0, 32], sizes = [8, 16], strides = [1, 1]} : vector<8x128xf32> to vector<8x16xf32>
    %172 = vector.extract_strided_slice %55 {offsets = [0, 48], sizes = [8, 16], strides = [1, 1]} : vector<8x128xf32> to vector<8x16xf32>
    %173 = tpu.concatenate %171, %172 in 0 : vector<8x16xf32>, vector<8x16xf32> -> vector<16x16xf32>
    %174 = vector.extract_strided_slice %147 {offsets = [0, 16], sizes = [8, 16], strides = [1, 1]} : vector<8x32xf32> to vector<8x16xf32>
    %175 = vector.extract_strided_slice %149 {offsets = [0, 16], sizes = [8, 16], strides = [1, 1]} : vector<8x32xf32> to vector<8x16xf32>
    %cst_100 = arith.constant dense<0.000000e+00> : vector<16x8xf32>
    %176 = tpu.matmul %173, %174, %cst_100 {dimension_numbers = #tpu.dot_dimension_numbers<[1], [1], [0], [0], [0, 0, 1, 0], [], []>} : vector<16x16xf32>, vector<8x16xf32>, vector<16x8xf32> -> vector<16x8xf32>
    %177 = arith.addf %176, %9 : vector<16x8xf32>
    %cst_101 = arith.constant dense<0xFF800000> : vector<16xf32>
    %178 = vector.multi_reduction <maximumf>, %177, %cst_101 [1] : vector<16x8xf32> to vector<16xf32>
    %179 = vector.shape_cast %178 : vector<16xf32> to vector<16x1xf32>
    %180 = vector.broadcast %179 : vector<16x1xf32> to vector<16x8xf32>
    %181 = arith.subf %177, %180 : vector<16x8xf32>
    %182 = math.exp %181 : vector<16x8xf32>
    %cst_102 = arith.constant dense<0.000000e+00> : vector<16xf32>
    %183 = vector.multi_reduction <add>, %182, %cst_102 [1] : vector<16x8xf32> to vector<16xf32>
    %184 = vector.shape_cast %183 : vector<16xf32> to vector<16x1xf32>
    %cst_103 = arith.constant dense<0.000000e+00> : vector<16x16xf32>
    %185 = tpu.matmul %182, %175, %cst_103 {dimension_numbers = #tpu.dot_dimension_numbers<[1], [0], [0], [1], [0, 0, 1, 1], [], []>} : vector<16x8xf32>, vector<8x16xf32>, vector<16x16xf32> -> vector<16x16xf32>
    %186 = tpu.reciprocal %184 {approx = true} : vector<16x1xf32> -> vector<16x1xf32>
    %187 = vector.broadcast %186 : vector<16x1xf32> to vector<16x16xf32>
    %188 = arith.mulf %185, %187 : vector<16x16xf32>
    %189 = vector.extract_strided_slice %188 {offsets = [0, 0], sizes = [8, 16], strides = [1, 1]} : vector<16x16xf32> to vector<8x16xf32>
    %190 = vector.extract_strided_slice %188 {offsets = [8, 0], sizes = [8, 16], strides = [1, 1]} : vector<16x16xf32> to vector<8x16xf32>
    %191 = tpu.concatenate %189, %190 in 1 : vector<8x16xf32>, vector<8x16xf32> -> vector<8x32xf32>
    %192 = tpu.concatenate %170, %191 in 1 : vector<8x32xf32>, vector<8x32xf32> -> vector<8x64xf32>
    %c0_104 = arith.constant 0 : index
    %c0_105 = arith.constant 0 : index
    %c0_106 = arith.constant 0 : index
    %193 = vector.load %arg5[%c0_104, %c0_105, %c0_106] : memref<2x64x32xf32, #tpu.memory_space<vmem>>, vector<1x64x32xf32>
    %194 = vector.shape_cast %193 : vector<1x64x32xf32> to vector<64x32xf32>
    %cst_107 = arith.constant dense<0.000000e+00> : vector<8x32xf32>
    %195 = tpu.matmul %192, %194, %cst_107 {dimension_numbers = #tpu.dot_dimension_numbers<[1], [0], [0], [1], [0, 0, 1, 1], [], []>} : vector<8x64xf32>, vector<64x32xf32>, vector<8x32xf32> -> vector<8x32xf32>
    %196 = arith.addf %5, %195 : vector<8x32xf32>
    %c0_108 = arith.constant 0 : index
    %c0_109 = arith.constant 0 : index
    %c0_110 = arith.constant 0 : index
    %197 = vector.load %arg6[%c0_108, %c0_109, %c0_110] : memref<2x1x32xf32, #tpu.memory_space<vmem>>, vector<1x1x32xf32>
    %198 = vector.shape_cast %197 : vector<1x1x32xf32> to vector<1x32xf32>
    %199 = arith.mulf %196, %196 : vector<8x32xf32>
    %cst_111 = arith.constant dense<0.000000e+00> : vector<8xf32>
    %200 = vector.multi_reduction <add>, %199, %cst_111 [1] : vector<8x32xf32> to vector<8xf32>
    %201 = vector.shape_cast %200 : vector<8xf32> to vector<8x1xf32>
    %cst_112 = arith.constant 3.200000e+01 : f32
    %202 = vector.broadcast %cst_112 : f32 to vector<8x1xf32>
    %203 = arith.divf %201, %202 : vector<8x1xf32>
    %cst_113 = arith.constant 9.99999997E-7 : f32
    %204 = vector.broadcast %cst_113 : f32 to vector<8x1xf32>
    %205 = arith.addf %203, %204 : vector<8x1xf32>
    %206 = math.rsqrt %205 : vector<8x1xf32>
    %207 = vector.broadcast %206 : vector<8x1xf32> to vector<8x32xf32>
    %208 = arith.mulf %196, %207 : vector<8x32xf32>
    %cst_114 = arith.constant 1.000000e+00 : f32
    %209 = vector.broadcast %cst_114 : f32 to vector<1x32xf32>
    %210 = arith.addf %209, %198 : vector<1x32xf32>
    %211 = vector.broadcast %210 : vector<1x32xf32> to vector<8x32xf32>
    %212 = arith.mulf %208, %211 : vector<8x32xf32>
    %c0_115 = arith.constant 0 : index
    %c0_116 = arith.constant 0 : index
    %c0_117 = arith.constant 0 : index
    %213 = vector.load %arg7[%c0_115, %c0_116, %c0_117] : memref<2x32x64xf32, #tpu.memory_space<vmem>>, vector<1x32x64xf32>
    %214 = vector.shape_cast %213 : vector<1x32x64xf32> to vector<32x64xf32>
    %cst_118 = arith.constant dense<0.000000e+00> : vector<8x64xf32>
    %215 = tpu.matmul %212, %214, %cst_118 {dimension_numbers = #tpu.dot_dimension_numbers<[1], [0], [0], [1], [0, 0, 1, 1], [], []>} : vector<8x32xf32>, vector<32x64xf32>, vector<8x64xf32> -> vector<8x64xf32>
    %cst_119 = arith.constant 5.000000e-01 : f32
    %216 = vector.broadcast %cst_119 : f32 to vector<8x64xf32>
    %217 = arith.mulf %216, %215 : vector<8x64xf32>
    %cst_120 = arith.constant 4.471500e-02 : f32
    %218 = vector.broadcast %cst_120 : f32 to vector<8x64xf32>
    %219 = arith.mulf %218, %215 : vector<8x64xf32>
    %220 = arith.mulf %219, %215 : vector<8x64xf32>
    %221 = arith.mulf %220, %215 : vector<8x64xf32>
    %222 = arith.addf %215, %221 : vector<8x64xf32>
    %cst_121 = arith.constant 0.797884583 : f32
    %223 = vector.broadcast %cst_121 : f32 to vector<8x64xf32>
    %224 = arith.mulf %223, %222 : vector<8x64xf32>
    %225 = math.tanh %224 : vector<8x64xf32>
    %cst_122 = arith.constant 1.000000e+00 : f32
    %226 = vector.broadcast %cst_122 : f32 to vector<8x64xf32>
    %227 = arith.addf %226, %225 : vector<8x64xf32>
    %228 = arith.mulf %217, %227 : vector<8x64xf32>
    %c0_123 = arith.constant 0 : index
    %c0_124 = arith.constant 0 : index
    %c0_125 = arith.constant 0 : index
    %229 = vector.load %arg8[%c0_123, %c0_124, %c0_125] : memref<2x32x64xf32, #tpu.memory_space<vmem>>, vector<1x32x64xf32>
    %230 = vector.shape_cast %229 : vector<1x32x64xf32> to vector<32x64xf32>
    %cst_126 = arith.constant dense<0.000000e+00> : vector<8x64xf32>
    %231 = tpu.matmul %212, %230, %cst_126 {dimension_numbers = #tpu.dot_dimension_numbers<[1], [0], [0], [1], [0, 0, 1, 1], [], []>} : vector<8x32xf32>, vector<32x64xf32>, vector<8x64xf32> -> vector<8x64xf32>
    %232 = arith.mulf %228, %231 : vector<8x64xf32>
    %c0_127 = arith.constant 0 : index
    %c0_128 = arith.constant 0 : index
    %c0_129 = arith.constant 0 : index
    %233 = vector.load %arg9[%c0_127, %c0_128, %c0_129] : memref<2x64x32xf32, #tpu.memory_space<vmem>>, vector<1x64x32xf32>
    %234 = vector.shape_cast %233 : vector<1x64x32xf32> to vector<64x32xf32>
    %cst_130 = arith.constant dense<0.000000e+00> : vector<8x32xf32>
    %235 = tpu.matmul %232, %234, %cst_130 {dimension_numbers = #tpu.dot_dimension_numbers<[1], [0], [0], [1], [0, 0, 1, 1], [], []>} : vector<8x64xf32>, vector<64x32xf32>, vector<8x32xf32> -> vector<8x32xf32>
    %236 = arith.addf %196, %235 : vector<8x32xf32>
    %c1_131 = arith.constant 1 : index
    %c0_132 = arith.constant 0 : index
    %c0_133 = arith.constant 0 : index
    %237 = vector.load %arg3[%c1_131, %c0_132, %c0_133] : memref<2x1x32xf32, #tpu.memory_space<vmem>>, vector<1x1x32xf32>
    %238 = vector.shape_cast %237 : vector<1x1x32xf32> to vector<1x32xf32>
    %239 = arith.mulf %236, %236 : vector<8x32xf32>
    %cst_134 = arith.constant dense<0.000000e+00> : vector<8xf32>
    %240 = vector.multi_reduction <add>, %239, %cst_134 [1] : vector<8x32xf32> to vector<8xf32>
    %241 = vector.shape_cast %240 : vector<8xf32> to vector<8x1xf32>
    %cst_135 = arith.constant 3.200000e+01 : f32
    %242 = vector.broadcast %cst_135 : f32 to vector<8x1xf32>
    %243 = arith.divf %241, %242 : vector<8x1xf32>
    %cst_136 = arith.constant 9.99999997E-7 : f32
    %244 = vector.broadcast %cst_136 : f32 to vector<8x1xf32>
    %245 = arith.addf %243, %244 : vector<8x1xf32>
    %246 = math.rsqrt %245 : vector<8x1xf32>
    %247 = vector.broadcast %246 : vector<8x1xf32> to vector<8x32xf32>
    %248 = arith.mulf %236, %247 : vector<8x32xf32>
    %cst_137 = arith.constant 1.000000e+00 : f32
    %249 = vector.broadcast %cst_137 : f32 to vector<1x32xf32>
    %250 = arith.addf %249, %238 : vector<1x32xf32>
    %251 = vector.broadcast %250 : vector<1x32xf32> to vector<8x32xf32>
    %252 = arith.mulf %248, %251 : vector<8x32xf32>
    %c1_138 = arith.constant 1 : index
    %c0_139 = arith.constant 0 : index
    %c0_140 = arith.constant 0 : index
    %253 = vector.load %arg4[%c1_138, %c0_139, %c0_140] : memref<2x32x128xf32, #tpu.memory_space<vmem>>, vector<1x32x128xf32>
    %254 = vector.shape_cast %253 : vector<1x32x128xf32> to vector<32x128xf32>
    %cst_141 = arith.constant dense<0.000000e+00> : vector<8x128xf32>
    %255 = tpu.matmul %252, %254, %cst_141 {dimension_numbers = #tpu.dot_dimension_numbers<[1], [0], [0], [1], [0, 0, 1, 1], [], []>} : vector<8x32xf32>, vector<32x128xf32>, vector<8x128xf32> -> vector<8x128xf32>
    %c8_i32_142 = arith.constant 8 : i32
    %256 = tpu.dynamic_rotate %255 by %c8_i32_142 dim 1 : vector<8x128xf32>, i32 -> vector<8x128xf32>
    %c120_i32_143 = arith.constant 120 : i32
    %257 = tpu.dynamic_rotate %255 by %c120_i32_143 dim 1 : vector<8x128xf32>, i32 -> vector<8x128xf32>
    %258 = vector.shape_cast %28 : vector<1x128xi1> to vector<1x128xi1>
    %259 = vector.broadcast %258 : vector<1x128xi1> to vector<8x128xi1>
    %260 = arith.select %259, %256, %257 : vector<8x128xi1>, vector<8x128xf32>
    %261 = arith.mulf %255, %6 : vector<8x128xf32>
    %262 = arith.mulf %260, %7 : vector<8x128xf32>
    %263 = arith.addf %261, %262 : vector<8x128xf32>
    %264 = vector.extract_strided_slice %263 {offsets = [0, 64], sizes = [8, 32], strides = [1, 1]} : vector<8x128xf32> to vector<8x32xf32>
    %265 = vector.extract_strided_slice %263 {offsets = [0, 96], sizes = [8, 32], strides = [1, 1]} : vector<8x128xf32> to vector<8x32xf32>
    %c0_144 = arith.constant 0 : index
    %266 = memref.load %arg1[%c0_144] : memref<8xi32, #tpu.memory_space<smem>>
    %267 = vector.extract_strided_slice %264 {offsets = [0, 0], sizes = [1, 32], strides = [1, 1]} : vector<8x32xf32> to vector<1x32xf32>
    %c1_145 = arith.constant 1 : index
    %c0_146 = arith.constant 0 : index
    %268 = arith.index_cast %266 : i32 to index
    %c0_147 = arith.constant 0 : index
    %269 = vector.load %arg17[%c1_145, %c0_146, %268, %c0_147] : memref<2x1x8x32xf32, #tpu.memory_space<vmem>>, vector<1x1x1x32xf32>
    %270 = vector.shape_cast %269 : vector<1x1x1x32xf32> to vector<1x32xf32>
    %271 = vector.shape_cast %267 : vector<1x32xf32> to vector<1x1x1x32xf32>
    tpu.vector_store %arg17[%c1_145, %c0_146, %268, %c0_147], %271 {strides = array<i32>} : memref<2x1x8x32xf32, #tpu.memory_space<vmem>>, vector<1x1x1x32xf32>,
    %272 = vector.extract_strided_slice %265 {offsets = [0, 0], sizes = [1, 32], strides = [1, 1]} : vector<8x32xf32> to vector<1x32xf32>
    %c1_148 = arith.constant 1 : index
    %c0_149 = arith.constant 0 : index
    %273 = arith.index_cast %266 : i32 to index
    %c0_150 = arith.constant 0 : index
    %274 = vector.load %arg18[%c1_148, %c0_149, %273, %c0_150] : memref<2x1x8x32xf32, #tpu.memory_space<vmem>>, vector<1x1x1x32xf32>
    %275 = vector.shape_cast %274 : vector<1x1x1x32xf32> to vector<1x32xf32>
    %276 = vector.shape_cast %272 : vector<1x32xf32> to vector<1x1x1x32xf32>
    tpu.vector_store %arg18[%c1_148, %c0_149, %273, %c0_150], %276 {strides = array<i32>} : memref<2x1x8x32xf32, #tpu.memory_space<vmem>>, vector<1x1x1x32xf32>,
    %c1_151 = arith.constant 1 : index
    %277 = memref.load %arg1[%c1_151] : memref<8xi32, #tpu.memory_space<smem>>
    %278 = vector.extract_strided_slice %264 {offsets = [1, 0], sizes = [1, 32], strides = [1, 1]} : vector<8x32xf32> to vector<1x32xf32>
    %c1_152 = arith.constant 1 : index
    %c0_153 = arith.constant 0 : index
    %279 = arith.index_cast %277 : i32 to index
    %c0_154 = arith.constant 0 : index
    %280 = vector.load %arg17[%c1_152, %c0_153, %279, %c0_154] : memref<2x1x8x32xf32, #tpu.memory_space<vmem>>, vector<1x1x1x32xf32>
    %281 = vector.shape_cast %280 : vector<1x1x1x32xf32> to vector<1x32xf32>
    %282 = vector.shape_cast %278 : vector<1x32xf32> to vector<1x1x1x32xf32>
    tpu.vector_store %arg17[%c1_152, %c0_153, %279, %c0_154], %282 {strides = array<i32>} : memref<2x1x8x32xf32, #tpu.memory_space<vmem>>, vector<1x1x1x32xf32>,
    %283 = vector.extract_strided_slice %265 {offsets = [1, 0], sizes = [1, 32], strides = [1, 1]} : vector<8x32xf32> to vector<1x32xf32>
    %c1_155 = arith.constant 1 : index
    %c0_156 = arith.constant 0 : index
    %284 = arith.index_cast %277 : i32 to index
    %c0_157 = arith.constant 0 : index
    %285 = vector.load %arg18[%c1_155, %c0_156, %284, %c0_157] : memref<2x1x8x32xf32, #tpu.memory_space<vmem>>, vector<1x1x1x32xf32>
    %286 = vector.shape_cast %285 : vector<1x1x1x32xf32> to vector<1x32xf32>
    %287 = vector.shape_cast %283 : vector<1x32xf32> to vector<1x1x1x32xf32>
    tpu.vector_store %arg18[%c1_155, %c0_156, %284, %c0_157], %287 {strides = array<i32>} : memref<2x1x8x32xf32, #tpu.memory_space<vmem>>, vector<1x1x1x32xf32>,
    %c2_158 = arith.constant 2 : index
    %288 = memref.load %arg1[%c2_158] : memref<8xi32, #tpu.memory_space<smem>>
    %289 = vector.extract_strided_slice %264 {offsets = [2, 0], sizes = [1, 32], strides = [1, 1]} : vector<8x32xf32> to vector<1x32xf32>
    %c1_159 = arith.constant 1 : index
    %c0_160 = arith.constant 0 : index
    %290 = arith.index_cast %288 : i32 to index
    %c0_161 = arith.constant 0 : index
    %291 = vector.load %arg17[%c1_159, %c0_160, %290, %c0_161] : memref<2x1x8x32xf32, #tpu.memory_space<vmem>>, vector<1x1x1x32xf32>
    %292 = vector.shape_cast %291 : vector<1x1x1x32xf32> to vector<1x32xf32>
    %293 = vector.shape_cast %289 : vector<1x32xf32> to vector<1x1x1x32xf32>
    tpu.vector_store %arg17[%c1_159, %c0_160, %290, %c0_161], %293 {strides = array<i32>} : memref<2x1x8x32xf32, #tpu.memory_space<vmem>>, vector<1x1x1x32xf32>,
    %294 = vector.extract_strided_slice %265 {offsets = [2, 0], sizes = [1, 32], strides = [1, 1]} : vector<8x32xf32> to vector<1x32xf32>
    %c1_162 = arith.constant 1 : index
    %c0_163 = arith.constant 0 : index
    %295 = arith.index_cast %288 : i32 to index
    %c0_164 = arith.constant 0 : index
    %296 = vector.load %arg18[%c1_162, %c0_163, %295, %c0_164] : memref<2x1x8x32xf32, #tpu.memory_space<vmem>>, vector<1x1x1x32xf32>
    %297 = vector.shape_cast %296 : vector<1x1x1x32xf32> to vector<1x32xf32>
    %298 = vector.shape_cast %294 : vector<1x32xf32> to vector<1x1x1x32xf32>
    tpu.vector_store %arg18[%c1_162, %c0_163, %295, %c0_164], %298 {strides = array<i32>} : memref<2x1x8x32xf32, #tpu.memory_space<vmem>>, vector<1x1x1x32xf32>,
    %c3_165 = arith.constant 3 : index
    %299 = memref.load %arg1[%c3_165] : memref<8xi32, #tpu.memory_space<smem>>
    %300 = vector.extract_strided_slice %264 {offsets = [3, 0], sizes = [1, 32], strides = [1, 1]} : vector<8x32xf32> to vector<1x32xf32>
    %c1_166 = arith.constant 1 : index
    %c0_167 = arith.constant 0 : index
    %301 = arith.index_cast %299 : i32 to index
    %c0_168 = arith.constant 0 : index
    %302 = vector.load %arg17[%c1_166, %c0_167, %301, %c0_168] : memref<2x1x8x32xf32, #tpu.memory_space<vmem>>, vector<1x1x1x32xf32>
    %303 = vector.shape_cast %302 : vector<1x1x1x32xf32> to vector<1x32xf32>
    %304 = vector.shape_cast %300 : vector<1x32xf32> to vector<1x1x1x32xf32>
    tpu.vector_store %arg17[%c1_166, %c0_167, %301, %c0_168], %304 {strides = array<i32>} : memref<2x1x8x32xf32, #tpu.memory_space<vmem>>, vector<1x1x1x32xf32>,
    %305 = vector.extract_strided_slice %265 {offsets = [3, 0], sizes = [1, 32], strides = [1, 1]} : vector<8x32xf32> to vector<1x32xf32>
    %c1_169 = arith.constant 1 : index
    %c0_170 = arith.constant 0 : index
    %306 = arith.index_cast %299 : i32 to index
    %c0_171 = arith.constant 0 : index
    %307 = vector.load %arg18[%c1_169, %c0_170, %306, %c0_171] : memref<2x1x8x32xf32, #tpu.memory_space<vmem>>, vector<1x1x1x32xf32>
    %308 = vector.shape_cast %307 : vector<1x1x1x32xf32> to vector<1x32xf32>
    %309 = vector.shape_cast %305 : vector<1x32xf32> to vector<1x1x1x32xf32>
    tpu.vector_store %arg18[%c1_169, %c0_170, %306, %c0_171], %309 {strides = array<i32>} : memref<2x1x8x32xf32, #tpu.memory_space<vmem>>, vector<1x1x1x32xf32>,
    %c4_172 = arith.constant 4 : index
    %310 = memref.load %arg1[%c4_172] : memref<8xi32, #tpu.memory_space<smem>>
    %311 = vector.extract_strided_slice %264 {offsets = [4, 0], sizes = [1, 32], strides = [1, 1]} : vector<8x32xf32> to vector<1x32xf32>
    %c1_173 = arith.constant 1 : index
    %c0_174 = arith.constant 0 : index
    %312 = arith.index_cast %310 : i32 to index
    %c0_175 = arith.constant 0 : index
    %313 = vector.load %arg17[%c1_173, %c0_174, %312, %c0_175] : memref<2x1x8x32xf32, #tpu.memory_space<vmem>>, vector<1x1x1x32xf32>
    %314 = vector.shape_cast %313 : vector<1x1x1x32xf32> to vector<1x32xf32>
    %315 = vector.shape_cast %311 : vector<1x32xf32> to vector<1x1x1x32xf32>
    tpu.vector_store %arg17[%c1_173, %c0_174, %312, %c0_175], %315 {strides = array<i32>} : memref<2x1x8x32xf32, #tpu.memory_space<vmem>>, vector<1x1x1x32xf32>,
    %316 = vector.extract_strided_slice %265 {offsets = [4, 0], sizes = [1, 32], strides = [1, 1]} : vector<8x32xf32> to vector<1x32xf32>
    %c1_176 = arith.constant 1 : index
    %c0_177 = arith.constant 0 : index
    %317 = arith.index_cast %310 : i32 to index
    %c0_178 = arith.constant 0 : index
    %318 = vector.load %arg18[%c1_176, %c0_177, %317, %c0_178] : memref<2x1x8x32xf32, #tpu.memory_space<vmem>>, vector<1x1x1x32xf32>
    %319 = vector.shape_cast %318 : vector<1x1x1x32xf32> to vector<1x32xf32>
    %320 = vector.shape_cast %316 : vector<1x32xf32> to vector<1x1x1x32xf32>
    tpu.vector_store %arg18[%c1_176, %c0_177, %317, %c0_178], %320 {strides = array<i32>} : memref<2x1x8x32xf32, #tpu.memory_space<vmem>>, vector<1x1x1x32xf32>,
    %c5_179 = arith.constant 5 : index
    %321 = memref.load %arg1[%c5_179] : memref<8xi32, #tpu.memory_space<smem>>
    %322 = vector.extract_strided_slice %264 {offsets = [5, 0], sizes = [1, 32], strides = [1, 1]} : vector<8x32xf32> to vector<1x32xf32>
    %c1_180 = arith.constant 1 : index
    %c0_181 = arith.constant 0 : index
    %323 = arith.index_cast %321 : i32 to index
    %c0_182 = arith.constant 0 : index
    %324 = vector.load %arg17[%c1_180, %c0_181, %323, %c0_182] : memref<2x1x8x32xf32, #tpu.memory_space<vmem>>, vector<1x1x1x32xf32>
    %325 = vector.shape_cast %324 : vector<1x1x1x32xf32> to vector<1x32xf32>
    %326 = vector.shape_cast %322 : vector<1x32xf32> to vector<1x1x1x32xf32>
    tpu.vector_store %arg17[%c1_180, %c0_181, %323, %c0_182], %326 {strides = array<i32>} : memref<2x1x8x32xf32, #tpu.memory_space<vmem>>, vector<1x1x1x32xf32>,
    %327 = vector.extract_strided_slice %265 {offsets = [5, 0], sizes = [1, 32], strides = [1, 1]} : vector<8x32xf32> to vector<1x32xf32>
    %c1_183 = arith.constant 1 : index
    %c0_184 = arith.constant 0 : index
    %328 = arith.index_cast %321 : i32 to index
    %c0_185 = arith.constant 0 : index
    %329 = vector.load %arg18[%c1_183, %c0_184, %328, %c0_185] : memref<2x1x8x32xf32, #tpu.memory_space<vmem>>, vector<1x1x1x32xf32>
    %330 = vector.shape_cast %329 : vector<1x1x1x32xf32> to vector<1x32xf32>
    %331 = vector.shape_cast %327 : vector<1x32xf32> to vector<1x1x1x32xf32>
    tpu.vector_store %arg18[%c1_183, %c0_184, %328, %c0_185], %331 {strides = array<i32>} : memref<2x1x8x32xf32, #tpu.memory_space<vmem>>, vector<1x1x1x32xf32>,
    %c6_186 = arith.constant 6 : index
    %332 = memref.load %arg1[%c6_186] : memref<8xi32, #tpu.memory_space<smem>>
    %333 = vector.extract_strided_slice %264 {offsets = [6, 0], sizes = [1, 32], strides = [1, 1]} : vector<8x32xf32> to vector<1x32xf32>
    %c1_187 = arith.constant 1 : index
    %c0_188 = arith.constant 0 : index
    %334 = arith.index_cast %332 : i32 to index
    %c0_189 = arith.constant 0 : index
    %335 = vector.load %arg17[%c1_187, %c0_188, %334, %c0_189] : memref<2x1x8x32xf32, #tpu.memory_space<vmem>>, vector<1x1x1x32xf32>
    %336 = vector.shape_cast %335 : vector<1x1x1x32xf32> to vector<1x32xf32>
    %337 = vector.shape_cast %333 : vector<1x32xf32> to vector<1x1x1x32xf32>
    tpu.vector_store %arg17[%c1_187, %c0_188, %334, %c0_189], %337 {strides = array<i32>} : memref<2x1x8x32xf32, #tpu.memory_space<vmem>>, vector<1x1x1x32xf32>,
    %338 = vector.extract_strided_slice %265 {offsets = [6, 0], sizes = [1, 32], strides = [1, 1]} : vector<8x32xf32> to vector<1x32xf32>
    %c1_190 = arith.constant 1 : index
    %c0_191 = arith.constant 0 : index
    %339 = arith.index_cast %332 : i32 to index
    %c0_192 = arith.constant 0 : index
    %340 = vector.load %arg18[%c1_190, %c0_191, %339, %c0_192] : memref<2x1x8x32xf32, #tpu.memory_space<vmem>>, vector<1x1x1x32xf32>
    %341 = vector.shape_cast %340 : vector<1x1x1x32xf32> to vector<1x32xf32>
    %342 = vector.shape_cast %338 : vector<1x32xf32> to vector<1x1x1x32xf32>
    tpu.vector_store %arg18[%c1_190, %c0_191, %339, %c0_192], %342 {strides = array<i32>} : memref<2x1x8x32xf32, #tpu.memory_space<vmem>>, vector<1x1x1x32xf32>,
    %c7_193 = arith.constant 7 : index
    %343 = memref.load %arg1[%c7_193] : memref<8xi32, #tpu.memory_space<smem>>
    %344 = vector.extract_strided_slice %264 {offsets = [7, 0], sizes = [1, 32], strides = [1, 1]} : vector<8x32xf32> to vector<1x32xf32>
    %c1_194 = arith.constant 1 : index
    %c0_195 = arith.constant 0 : index
    %345 = arith.index_cast %343 : i32 to index
    %c0_196 = arith.constant 0 : index
    %346 = vector.load %arg17[%c1_194, %c0_195, %345, %c0_196] : memref<2x1x8x32xf32, #tpu.memory_space<vmem>>, vector<1x1x1x32xf32>
    %347 = vector.shape_cast %346 : vector<1x1x1x32xf32> to vector<1x32xf32>
    %348 = vector.shape_cast %344 : vector<1x32xf32> to vector<1x1x1x32xf32>
    tpu.vector_store %arg17[%c1_194, %c0_195, %345, %c0_196], %348 {strides = array<i32>} : memref<2x1x8x32xf32, #tpu.memory_space<vmem>>, vector<1x1x1x32xf32>,
    %349 = vector.extract_strided_slice %265 {offsets = [7, 0], sizes = [1, 32], strides = [1, 1]} : vector<8x32xf32> to vector<1x32xf32>
    %c1_197 = arith.constant 1 : index
    %c0_198 = arith.constant 0 : index
    %350 = arith.index_cast %343 : i32 to index
    %c0_199 = arith.constant 0 : index
    %351 = vector.load %arg18[%c1_197, %c0_198, %350, %c0_199] : memref<2x1x8x32xf32, #tpu.memory_space<vmem>>, vector<1x1x1x32xf32>
    %352 = vector.shape_cast %351 : vector<1x1x1x32xf32> to vector<1x32xf32>
    %353 = vector.shape_cast %349 : vector<1x32xf32> to vector<1x1x1x32xf32>
    tpu.vector_store %arg18[%c1_197, %c0_198, %350, %c0_199], %353 {strides = array<i32>} : memref<2x1x8x32xf32, #tpu.memory_space<vmem>>, vector<1x1x1x32xf32>,
    %c1_200 = arith.constant 1 : index
    %c0_201 = arith.constant 0 : index
    %c0_202 = arith.constant 0 : index
    %c0_203 = arith.constant 0 : index
    %354 = vector.load %arg17[%c1_200, %c0_201, %c0_202, %c0_203] : memref<2x1x8x32xf32, #tpu.memory_space<vmem>>, vector<1x1x8x32xf32>
    %355 = vector.shape_cast %354 : vector<1x1x8x32xf32> to vector<8x32xf32>
    %c1_204 = arith.constant 1 : index
    %c0_205 = arith.constant 0 : index
    %c0_206 = arith.constant 0 : index
    %c0_207 = arith.constant 0 : index
    %356 = vector.load %arg18[%c1_204, %c0_205, %c0_206, %c0_207] : memref<2x1x8x32xf32, #tpu.memory_space<vmem>>, vector<1x1x8x32xf32>
    %357 = vector.shape_cast %356 : vector<1x1x8x32xf32> to vector<8x32xf32>
    %358 = vector.extract_strided_slice %263 {offsets = [0, 0], sizes = [8, 16], strides = [1, 1]} : vector<8x128xf32> to vector<8x16xf32>
    %359 = vector.extract_strided_slice %263 {offsets = [0, 16], sizes = [8, 16], strides = [1, 1]} : vector<8x128xf32> to vector<8x16xf32>
    %360 = tpu.concatenate %358, %359 in 0 : vector<8x16xf32>, vector<8x16xf32> -> vector<16x16xf32>
    %361 = vector.extract_strided_slice %355 {offsets = [0, 0], sizes = [8, 16], strides = [1, 1]} : vector<8x32xf32> to vector<8x16xf32>
    %362 = vector.extract_strided_slice %357 {offsets = [0, 0], sizes = [8, 16], strides = [1, 1]} : vector<8x32xf32> to vector<8x16xf32>
    %cst_208 = arith.constant dense<0.000000e+00> : vector<16x8xf32>
    %363 = tpu.matmul %360, %361, %cst_208 {dimension_numbers = #tpu.dot_dimension_numbers<[1], [1], [0], [0], [0, 0, 1, 0], [], []>} : vector<16x16xf32>, vector<8x16xf32>, vector<16x8xf32> -> vector<16x8xf32>
    %364 = arith.addf %363, %9 : vector<16x8xf32>
    %cst_209 = arith.constant dense<0xFF800000> : vector<16xf32>
    %365 = vector.multi_reduction <maximumf>, %364, %cst_209 [1] : vector<16x8xf32> to vector<16xf32>
    %366 = vector.shape_cast %365 : vector<16xf32> to vector<16x1xf32>
    %367 = vector.broadcast %366 : vector<16x1xf32> to vector<16x8xf32>
    %368 = arith.subf %364, %367 : vector<16x8xf32>
    %369 = math.exp %368 : vector<16x8xf32>
    %cst_210 = arith.constant dense<0.000000e+00> : vector<16xf32>
    %370 = vector.multi_reduction <add>, %369, %cst_210 [1] : vector<16x8xf32> to vector<16xf32>
    %371 = vector.shape_cast %370 : vector<16xf32> to vector<16x1xf32>
    %cst_211 = arith.constant dense<0.000000e+00> : vector<16x16xf32>
    %372 = tpu.matmul %369, %362, %cst_211 {dimension_numbers = #tpu.dot_dimension_numbers<[1], [0], [0], [1], [0, 0, 1, 1], [], []>} : vector<16x8xf32>, vector<8x16xf32>, vector<16x16xf32> -> vector<16x16xf32>
    %373 = tpu.reciprocal %371 {approx = true} : vector<16x1xf32> -> vector<16x1xf32>
    %374 = vector.broadcast %373 : vector<16x1xf32> to vector<16x16xf32>
    %375 = arith.mulf %372, %374 : vector<16x16xf32>
    %376 = vector.extract_strided_slice %375 {offsets = [0, 0], sizes = [8, 16], strides = [1, 1]} : vector<16x16xf32> to vector<8x16xf32>
    %377 = vector.extract_strided_slice %375 {offsets = [8, 0], sizes = [8, 16], strides = [1, 1]} : vector<16x16xf32> to vector<8x16xf32>
    %378 = tpu.concatenate %376, %377 in 1 : vector<8x16xf32>, vector<8x16xf32> -> vector<8x32xf32>
    %379 = vector.extract_strided_slice %263 {offsets = [0, 32], sizes = [8, 16], strides = [1, 1]} : vector<8x128xf32> to vector<8x16xf32>
    %380 = vector.extract_strided_slice %263 {offsets = [0, 48], sizes = [8, 16], strides = [1, 1]} : vector<8x128xf32> to vector<8x16xf32>
    %381 = tpu.concatenate %379, %380 in 0 : vector<8x16xf32>, vector<8x16xf32> -> vector<16x16xf32>
    %382 = vector.extract_strided_slice %355 {offsets = [0, 16], sizes = [8, 16], strides = [1, 1]} : vector<8x32xf32> to vector<8x16xf32>
    %383 = vector.extract_strided_slice %357 {offsets = [0, 16], sizes = [8, 16], strides = [1, 1]} : vector<8x32xf32> to vector<8x16xf32>
    %cst_212 = arith.constant dense<0.000000e+00> : vector<16x8xf32>
    %384 = tpu.matmul %381, %382, %cst_212 {dimension_numbers = #tpu.dot_dimension_numbers<[1], [1], [0], [0], [0, 0, 1, 0], [], []>} : vector<16x16xf32>, vector<8x16xf32>, vector<16x8xf32> -> vector<16x8xf32>
    %385 = arith.addf %384, %9 : vector<16x8xf32>
    %cst_213 = arith.constant dense<0xFF800000> : vector<16xf32>
    %386 = vector.multi_reduction <maximumf>, %385, %cst_213 [1] : vector<16x8xf32> to vector<16xf32>
    %387 = vector.shape_cast %386 : vector<16xf32> to vector<16x1xf32>
    %388 = vector.broadcast %387 : vector<16x1xf32> to vector<16x8xf32>
    %389 = arith.subf %385, %388 : vector<16x8xf32>
    %390 = math.exp %389 : vector<16x8xf32>
    %cst_214 = arith.constant dense<0.000000e+00> : vector<16xf32>
    %391 = vector.multi_reduction <add>, %390, %cst_214 [1] : vector<16x8xf32> to vector<16xf32>
    %392 = vector.shape_cast %391 : vector<16xf32> to vector<16x1xf32>
    %cst_215 = arith.constant dense<0.000000e+00> : vector<16x16xf32>
    %393 = tpu.matmul %390, %383, %cst_215 {dimension_numbers = #tpu.dot_dimension_numbers<[1], [0], [0], [1], [0, 0, 1, 1], [], []>} : vector<16x8xf32>, vector<8x16xf32>, vector<16x16xf32> -> vector<16x16xf32>
    %394 = tpu.reciprocal %392 {approx = true} : vector<16x1xf32> -> vector<16x1xf32>
    %395 = vector.broadcast %394 : vector<16x1xf32> to vector<16x16xf32>
    %396 = arith.mulf %393, %395 : vector<16x16xf32>
    %397 = vector.extract_strided_slice %396 {offsets = [0, 0], sizes = [8, 16], strides = [1, 1]} : vector<16x16xf32> to vector<8x16xf32>
    %398 = vector.extract_strided_slice %396 {offsets = [8, 0], sizes = [8, 16], strides = [1, 1]} : vector<16x16xf32> to vector<8x16xf32>
    %399 = tpu.concatenate %397, %398 in 1 : vector<8x16xf32>, vector<8x16xf32> -> vector<8x32xf32>
    %400 = tpu.concatenate %378, %399 in 1 : vector<8x32xf32>, vector<8x32xf32> -> vector<8x64xf32>
    %c1_216 = arith.constant 1 : index
    %c0_217 = arith.constant 0 : index
    %c0_218 = arith.constant 0 : index
    %401 = vector.load %arg5[%c1_216, %c0_217, %c0_218] : memref<2x64x32xf32, #tpu.memory_space<vmem>>, vector<1x64x32xf32>
    %402 = vector.shape_cast %401 : vector<1x64x32xf32> to vector<64x32xf32>
    %cst_219 = arith.constant dense<0.000000e+00> : vector<8x32xf32>
    %403 = tpu.matmul %400, %402, %cst_219 {dimension_numbers = #tpu.dot_dimension_numbers<[1], [0], [0], [1], [0, 0, 1, 1], [], []>} : vector<8x64xf32>, vector<64x32xf32>, vector<8x32xf32> -> vector<8x32xf32>
    %404 = arith.addf %236, %403 : vector<8x32xf32>
    %c1_220 = arith.constant 1 : index
    %c0_221 = arith.constant 0 : index
    %c0_222 = arith.constant 0 : index
    %405 = vector.load %arg6[%c1_220, %c0_221, %c0_222] : memref<2x1x32xf32, #tpu.memory_space<vmem>>, vector<1x1x32xf32>
    %406 = vector.shape_cast %405 : vector<1x1x32xf32> to vector<1x32xf32>
    %407 = arith.mulf %404, %404 : vector<8x32xf32>
    %cst_223 = arith.constant dense<0.000000e+00> : vector<8xf32>
    %408 = vector.multi_reduction <add>, %407, %cst_223 [1] : vector<8x32xf32> to vector<8xf32>
    %409 = vector.shape_cast %408 : vector<8xf32> to vector<8x1xf32>
    %cst_224 = arith.constant 3.200000e+01 : f32
    %410 = vector.broadcast %cst_224 : f32 to vector<8x1xf32>
    %411 = arith.divf %409, %410 : vector<8x1xf32>
    %cst_225 = arith.constant 9.99999997E-7 : f32
    %412 = vector.broadcast %cst_225 : f32 to vector<8x1xf32>
    %413 = arith.addf %411, %412 : vector<8x1xf32>
    %414 = math.rsqrt %413 : vector<8x1xf32>
    %415 = vector.broadcast %414 : vector<8x1xf32> to vector<8x32xf32>
    %416 = arith.mulf %404, %415 : vector<8x32xf32>
    %cst_226 = arith.constant 1.000000e+00 : f32
    %417 = vector.broadcast %cst_226 : f32 to vector<1x32xf32>
    %418 = arith.addf %417, %406 : vector<1x32xf32>
    %419 = vector.broadcast %418 : vector<1x32xf32> to vector<8x32xf32>
    %420 = arith.mulf %416, %419 : vector<8x32xf32>
    %c1_227 = arith.constant 1 : index
    %c0_228 = arith.constant 0 : index
    %c0_229 = arith.constant 0 : index
    %421 = vector.load %arg7[%c1_227, %c0_228, %c0_229] : memref<2x32x64xf32, #tpu.memory_space<vmem>>, vector<1x32x64xf32>
    %422 = vector.shape_cast %421 : vector<1x32x64xf32> to vector<32x64xf32>
    %cst_230 = arith.constant dense<0.000000e+00> : vector<8x64xf32>
    %423 = tpu.matmul %420, %422, %cst_230 {dimension_numbers = #tpu.dot_dimension_numbers<[1], [0], [0], [1], [0, 0, 1, 1], [], []>} : vector<8x32xf32>, vector<32x64xf32>, vector<8x64xf32> -> vector<8x64xf32>
    %cst_231 = arith.constant 5.000000e-01 : f32
    %424 = vector.broadcast %cst_231 : f32 to vector<8x64xf32>
    %425 = arith.mulf %424, %423 : vector<8x64xf32>
    %cst_232 = arith.constant 4.471500e-02 : f32
    %426 = vector.broadcast %cst_232 : f32 to vector<8x64xf32>
    %427 = arith.mulf %426, %423 : vector<8x64xf32>
    %428 = arith.mulf %427, %423 : vector<8x64xf32>
    %429 = arith.mulf %428, %423 : vector<8x64xf32>
    %430 = arith.addf %423, %429 : vector<8x64xf32>
    %cst_233 = arith.constant 0.797884583 : f32
    %431 = vector.broadcast %cst_233 : f32 to vector<8x64xf32>
    %432 = arith.mulf %431, %430 : vector<8x64xf32>
    %433 = math.tanh %432 : vector<8x64xf32>
    %cst_234 = arith.constant 1.000000e+00 : f32
    %434 = vector.broadcast %cst_234 : f32 to vector<8x64xf32>
    %435 = arith.addf %434, %433 : vector<8x64xf32>
    %436 = arith.mulf %425, %435 : vector<8x64xf32>
    %c1_235 = arith.constant 1 : index
    %c0_236 = arith.constant 0 : index
    %c0_237 = arith.constant 0 : index
    %437 = vector.load %arg8[%c1_235, %c0_236, %c0_237] : memref<2x32x64xf32, #tpu.memory_space<vmem>>, vector<1x32x64xf32>
    %438 = vector.shape_cast %437 : vector<1x32x64xf32> to vector<32x64xf32>
    %cst_238 = arith.constant dense<0.000000e+00> : vector<8x64xf32>
    %439 = tpu.matmul %420, %438, %cst_238 {dimension_numbers = #tpu.dot_dimension_numbers<[1], [0], [0], [1], [0, 0, 1, 1], [], []>} : vector<8x32xf32>, vector<32x64xf32>, vector<8x64xf32> -> vector<8x64xf32>
    %440 = arith.mulf %436, %439 : vector<8x64xf32>
    %c1_239 = arith.constant 1 : index
    %c0_240 = arith.constant 0 : index
    %c0_241 = arith.constant 0 : index
    %441 = vector.load %arg9[%c1_239, %c0_240, %c0_241] : memref<2x64x32xf32, #tpu.memory_space<vmem>>, vector<1x64x32xf32>
    %442 = vector.shape_cast %441 : vector<1x64x32xf32> to vector<64x32xf32>
    %cst_242 = arith.constant dense<0.000000e+00> : vector<8x32xf32>
    %443 = tpu.matmul %440, %442, %cst_242 {dimension_numbers = #tpu.dot_dimension_numbers<[1], [0], [0], [1], [0, 0, 1, 1], [], []>} : vector<8x64xf32>, vector<64x32xf32>, vector<8x32xf32> -> vector<8x32xf32>
    %444 = arith.addf %404, %443 : vector<8x32xf32>
    %c0_243 = arith.constant 0 : index
    %c0_244 = arith.constant 0 : index
    %445 = vector.load %arg10[%c0_243, %c0_244] : memref<1x32xf32, #tpu.memory_space<vmem>>, vector<1x32xf32>
    %446 = arith.mulf %444, %444 : vector<8x32xf32>
    %cst_245 = arith.constant dense<0.000000e+00> : vector<8xf32>
    %447 = vector.multi_reduction <add>, %446, %cst_245 [1] : vector<8x32xf32> to vector<8xf32>
    %448 = vector.shape_cast %447 : vector<8xf32> to vector<8x1xf32>
    %cst_246 = arith.constant 3.200000e+01 : f32
    %449 = vector.broadcast %cst_246 : f32 to vector<8x1xf32>
    %450 = arith.divf %448, %449 : vector<8x1xf32>
    %cst_247 = arith.constant 9.99999997E-7 : f32
    %451 = vector.broadcast %cst_247 : f32 to vector<8x1xf32>
    %452 = arith.addf %450, %451 : vector<8x1xf32>
    %453 = math.rsqrt %452 : vector<8x1xf32>
    %454 = vector.broadcast %453 : vector<8x1xf32> to vector<8x32xf32>
    %455 = arith.mulf %444, %454 : vector<8x32xf32>
    %cst_248 = arith.constant 1.000000e+00 : f32
    %456 = vector.broadcast %cst_248 : f32 to vector<1x32xf32>
    %457 = arith.addf %456, %445 : vector<1x32xf32>
    %458 = vector.broadcast %457 : vector<1x32xf32> to vector<8x32xf32>
    %459 = arith.mulf %455, %458 : vector<8x32xf32>
    %c0_249 = arith.constant 0 : index
    %c0_250 = arith.constant 0 : index
    %c0_251 = arith.constant 0 : index
    %460 = vector.load %arg16[%c0_249, %c0_250, %c0_251] : memref<1x8x32xf32, #tpu.memory_space<vmem>>, vector<1x8x32xf32>
    %461 = vector.shape_cast %460 : vector<1x8x32xf32> to vector<8x32xf32>
    %462 = vector.shape_cast %459 : vector<8x32xf32> to vector<1x8x32xf32>
    tpu.vector_store %arg16[%c0_249, %c0_250, %c0_251], %462 {strides = array<i32>} : memref<1x8x32xf32, #tpu.memory_space<vmem>>, vector<1x8x32xf32>,
    return
  }
  func.func @transform_0(%arg0: i32, %arg1: memref<8xi32, #tpu.memory_space<smem>>) -> (i32, i32, i32) {
    %c0_i32 = arith.constant 0 : i32
    %c0_i32_0 = arith.constant 0 : i32
    %c0_i32_1 = arith.constant 0 : i32
    return %arg0, %c0_i32, %c0_i32_0 : i32, i32, i32
  }
  func.func @transform_1(%arg0: i32, %arg1: memref<8xi32, #tpu.memory_space<smem>>) -> (i32, i32, i32) {
    %c0_i32 = arith.constant 0 : i32
    %c0_i32_0 = arith.constant 0 : i32
    %c0_i32_1 = arith.constant 0 : i32
    %c0_i32_2 = arith.constant 0 : i32
    return %c0_i32, %c0_i32_0, %c0_i32_1 : i32, i32, i32
  }
  func.func @transform_2(%arg0: i32, %arg1: memref<8xi32, #tpu.memory_space<smem>>) -> (i32, i32, i32) {
    %c0_i32 = arith.constant 0 : i32
    %c0_i32_0 = arith.constant 0 : i32
    %c0_i32_1 = arith.constant 0 : i32
    %c0_i32_2 = arith.constant 0 : i32
    return %c0_i32, %c0_i32_0, %c0_i32_1 : i32, i32, i32
  }
  func.func @transform_3(%arg0: i32, %arg1: memref<8xi32, #tpu.memory_space<smem>>) -> (i32, i32, i32) {
    %c0_i32 = arith.constant 0 : i32
    %c0_i32_0 = arith.constant 0 : i32
    %c0_i32_1 = arith.constant 0 : i32
    %c0_i32_2 = arith.constant 0 : i32
    return %c0_i32, %c0_i32_0, %c0_i32_1 : i32, i32, i32
  }
  func.func @transform_4(%arg0: i32, %arg1: memref<8xi32, #tpu.memory_space<smem>>) -> (i32, i32, i32) {
    %c0_i32 = arith.constant 0 : i32
    %c0_i32_0 = arith.constant 0 : i32
    %c0_i32_1 = arith.constant 0 : i32
    %c0_i32_2 = arith.constant 0 : i32
    return %c0_i32, %c0_i32_0, %c0_i32_1 : i32, i32, i32
  }
  func.func @transform_5(%arg0: i32, %arg1: memref<8xi32, #tpu.memory_space<smem>>) -> (i32, i32, i32) {
    %c0_i32 = arith.constant 0 : i32
    %c0_i32_0 = arith.constant 0 : i32
    %c0_i32_1 = arith.constant 0 : i32
    %c0_i32_2 = arith.constant 0 : i32
    return %c0_i32, %c0_i32_0, %c0_i32_1 : i32, i32, i32
  }
  func.func @transform_6(%arg0: i32, %arg1: memref<8xi32, #tpu.memory_space<smem>>) -> (i32, i32, i32) {
    %c0_i32 = arith.constant 0 : i32
    %c0_i32_0 = arith.constant 0 : i32
    %c0_i32_1 = arith.constant 0 : i32
    %c0_i32_2 = arith.constant 0 : i32
    return %c0_i32, %c0_i32_0, %c0_i32_1 : i32, i32, i32
  }
  func.func @transform_7(%arg0: i32, %arg1: memref<8xi32, #tpu.memory_space<smem>>) -> (i32, i32, i32) {
    %c0_i32 = arith.constant 0 : i32
    %c0_i32_0 = arith.constant 0 : i32
    %c0_i32_1 = arith.constant 0 : i32
    %c0_i32_2 = arith.constant 0 : i32
    return %c0_i32, %c0_i32_0, %c0_i32_1 : i32, i32, i32
  }
  func.func @transform_8(%arg0: i32, %arg1: memref<8xi32, #tpu.memory_space<smem>>) -> (i32, i32) {
    %c0_i32 = arith.constant 0 : i32
    %c0_i32_0 = arith.constant 0 : i32
    %c0_i32_1 = arith.constant 0 : i32
    return %c0_i32, %c0_i32_0 : i32, i32
  }
  func.func @transform_9(%arg0: i32, %arg1: memref<8xi32, #tpu.memory_space<smem>>) -> (i32, i32) {
    %c0_i32 = arith.constant 0 : i32
    %c0_i32_0 = arith.constant 0 : i32
    %c0_i32_1 = arith.constant 0 : i32
    return %c0_i32, %c0_i32_0 : i32, i32
  }
  func.func @transform_10(%arg0: i32, %arg1: memref<8xi32, #tpu.memory_space<smem>>) -> (i32, i32) {
    %c0_i32 = arith.constant 0 : i32
    %c0_i32_0 = arith.constant 0 : i32
    %c0_i32_1 = arith.constant 0 : i32
    return %c0_i32, %c0_i32_0 : i32, i32
  }
  func.func @transform_11(%arg0: i32, %arg1: memref<8xi32, #tpu.memory_space<smem>>) -> (i32, i32, i32) {
    %c0_i32 = arith.constant 0 : i32
    %c0_i32_0 = arith.constant 0 : i32
    %c0_i32_1 = arith.constant 0 : i32
    return %arg0, %c0_i32, %c0_i32_0 : i32, i32, i32
  }
  func.func @transform_12(%arg0: i32, %arg1: memref<8xi32, #tpu.memory_space<smem>>) -> (i32, i32, i32, i32) {
    %c0_i32 = arith.constant 0 : i32
    %c0_i32_0 = arith.constant 0 : i32
    %c0_i32_1 = arith.constant 0 : i32
    %c0_i32_2 = arith.constant 0 : i32
    return %c0_i32, %arg0, %c0_i32_0, %c0_i32_1 : i32, i32, i32, i32
  }
  func.func @transform_13(%arg0: i32, %arg1: memref<8xi32, #tpu.memory_space<smem>>) -> (i32, i32, i32, i32) {
    %c0_i32 = arith.constant 0 : i32
    %c0_i32_0 = arith.constant 0 : i32
    %c0_i32_1 = arith.constant 0 : i32
    %c0_i32_2 = arith.constant 0 : i32
    return %c0_i32, %arg0, %c0_i32_0, %c0_i32_1 : i32, i32, i32, i32
  }
  func.func @transform_14(%arg0: i32, %arg1: memref<8xi32, #tpu.memory_space<smem>>) -> (i32, i32, i32) {
    %c0_i32 = arith.constant 0 : i32
    %c0_i32_0 = arith.constant 0 : i32
    %c0_i32_1 = arith.constant 0 : i32
    return %arg0, %c0_i32, %c0_i32_0 : i32, i32, i32
  }
  func.func @transform_15(%arg0: i32, %arg1: memref<8xi32, #tpu.memory_space<smem>>) -> (i32, i32, i32, i32) {
    %c0_i32 = arith.constant 0 : i32
    %c0_i32_0 = arith.constant 0 : i32
    %c0_i32_1 = arith.constant 0 : i32
    %c0_i32_2 = arith.constant 0 : i32
    return %c0_i32, %arg0, %c0_i32_0, %c0_i32_1 : i32, i32, i32, i32
  }
  func.func @transform_16(%arg0: i32, %arg1: memref<8xi32, #tpu.memory_space<smem>>) -> (i32, i32, i32, i32) {
    %c0_i32 = arith.constant 0 : i32
    %c0_i32_0 = arith.constant 0 : i32
    %c0_i32_1 = arith.constant 0 : i32
    %c0_i32_2 = arith.constant 0 : i32
    return %c0_i32, %arg0, %c0_i32_0, %c0_i32_1 : i32, i32, i32, i32
  }
}

</mosaic_0001>

<llo_original>
// kernel: neg.1
$region0: #{neg.1}
  #allocation0 [shape = 's32[1]{0}', space=sflag, size = 0x4, scoped, tag = 'scoped memory for neg.1']
  %s0 = inlined_call_operand.vmem [shape: f32[8,8], index: 0, kind: input, shape index: {}]
  %s1 = inlined_call_operand.vmem [shape: f32[8,8], index: 1, kind: output, shape index: {}]
  %v2 = vld [vmem:[%s0] sm:$0xff]
  %3 = xla_tuple %v2
  %4 = xla_tuple %3
  %v5 = vxor.u32 %v2, 2147483648
  %6 = xla_tuple %v5
  %7 = vst [vmem:[%s1] sm:$0xff] %v5

// kernel: tile.24
$region0: #{tile.24}
  %s0 = inlined_call_operand.vmem [shape: f32[8,6,16], index: 0, kind: input, shape index: {}]
  %s1 = inlined_call_operand.vmem [shape: f32[8,96], index: 1, kind: output, shape index: {}]
  %v2 = vld [vmem:[%s0] ss:$8 sm:$0xf]
  %v3 = vld [vmem:[%s0] ss:$8 sm:$0xf0]
  %vm4 = vcmask 1047556
  %v5 = vsel %vm4, %v3, %v2
  %vm6 = vcmask 130048
  %7 = vst.msk [vmem:[%s1] sm:$0xff] %vm6, %v5
  %s8 = scalar_lea.vmem %s0, 5
  %v9 = vld [vmem:[%s8] ss:$8 sm:$0xf]
  %s10 = scalar_lea.vmem %s0, 5
  %v11 = vld [vmem:[%s10] ss:$8 sm:$0xf0]
  %vm12 = vcmask 1047556
  %v13 = vsel %vm12, %v11, %v9
  %14 = vrot.lane.b32.xlu0 %v13, 80
  %v15 = vpop.permute.xlu0 %14
  %vm16 = vcmask 786048
  %17 = vst.msk [vmem:[%s1] sm:$0xff] %vm16, %v15
  %s18 = scalar_lea.vmem %s0, 4
  %v19 = vld [vmem:[%s18] ss:$8 sm:$0xf]
  %s20 = scalar_lea.vmem %s0, 4
  %v21 = vld [vmem:[%s20] ss:$8 sm:$0xf0]
  %vm22 = vcmask 1047556
  %v23 = vsel %vm22, %v21, %v19
  %24 = vrot.lane.b32.xlu0 %v23, 64
  %v25 = vpop.permute.xlu0 %24
  %vm26 = vcmask 654848
  %27 = vst.msk [vmem:[%s1] sm:$0xff] %vm26, %v25
  %s28 = scalar_lea.vmem %s0, 3
  %v29 = vld [vmem:[%s28] ss:$8 sm:$0xf]
  %s30 = scalar_lea.vmem %s0, 3
  %v31 = vld [vmem:[%s30] ss:$8 sm:$0xf0]
  %vm32 = vcmask 1047556
  %v33 = vsel %vm32, %v31, %v29
  %34 = vrot.lane.b32.xlu0 %v33, 48
  %v35 = vpop.permute.xlu0 %34
  %vm36 = vcmask 523648
  %37 = vst.msk [vmem:[%s1] sm:$0xff] %vm36, %v35
  %s38 = scalar_lea.vmem %s0, 2
  %v39 = vld [vmem:[%s38] ss:$8 sm:$0xf]
  %s40 = scalar_lea.vmem %s0, 2
  %v41 = vld [vmem:[%s40] ss:$8 sm:$0xf0]
  %vm42 = vcmask 1047556
  %v43 = vsel %vm42, %v41, %v39
  %44 = vrot.lane.b32.xlu0 %v43, 32
  %v45 = vpop.permute.xlu0 %44
  %vm46 = vcmask 392448
  %47 = vst.msk [vmem:[%s1] sm:$0xff] %vm46, %v45
  %s48 = scalar_lea.vmem %s0, 1
  %v49 = vld [vmem:[%s48] ss:$8 sm:$0xf]
  %s50 = scalar_lea.vmem %s0, 1
  %v51 = vld [vmem:[%s50] ss:$8 sm:$0xf0]
  %vm52 = vcmask 1047556
  %v53 = vsel %vm52, %v51, %v49
  %54 = vrot.lane.b32.xlu0 %v53, 16
  %v55 = vpop.permute.xlu0 %54
  %vm56 = vcmask 261248
  %57 = vst.msk [vmem:[%s1] sm:$0xff] %vm56, %v55

// kernel: squeeze.4
$region0: #{squeeze.4}
  %s0 = inlined_call_operand.vmem [shape: f32[1,2,8,32], index: 0, kind: input, shape index: {}]
  %s1 = inlined_call_operand.hbm [shape: f32[2,8,2,16], index: 1, kind: output, shape index: {}]
  $region1: #{squeeze.4} parent=0
    #allocation0 [shape = 'u8[16384]{0}', space=vmem, size = 0x4000, scoped, tag = 'operand span for operand 1']
    #allocation1 [shape = 's32[1]{0}', space=sflag, size = 0x4, scoped, tag = 'scoped memory for squeeze.4']
    #allocation2 [shape = 'u8[65536]{0}', space=vmem, size = 0x10000, scoped, tag = 'scoped mem for output reshape']
    %2 = vsyncpa [#allocation1], 0
    %v3 = vld [vmem:[%s0] sm:$0xff]
    %vm4 = vcmask 130048
    %5 = vst.msk [vmem:[#allocation2] ss:$8 sm:$0xf] %vm4, %v3
    %6 = vst.msk [vmem:[#allocation2] ss:$8 sm:$0xf0] %vm4, %v3
    %s7 = scalar_lea.vmem %s0, 8
    %v8 = vld [vmem:[%s7] sm:$0xff]
    %vm9 = vcmask 130048
    %s10 = scalar_lea.vmem [#allocation2], 64
    %11 = vst.msk [vmem:[%s10] ss:$8 sm:$0xf] %vm9, %v8
    %s12 = scalar_lea.vmem [#allocation2], 64
    %13 = vst.msk [vmem:[%s12] ss:$8 sm:$0xf0] %vm9, %v8
    %v14 = vld [vmem:[%s0] sm:$0xff]
    %15 = vrot.lane.b32.xlu0 %v14, 112
    %v16 = vpop.permute.xlu0 %15
    %vm17 = vcmask 130048
    %s18 = scalar_lea.vmem [#allocation2], 1
    %19 = vst.msk [vmem:[%s18] ss:$8 sm:$0xf] %vm17, %v16
    %s20 = scalar_lea.vmem [#allocation2], 1
    %21 = vst.msk [vmem:[%s20] ss:$8 sm:$0xf0] %vm17, %v16
    %s22 = scalar_lea.vmem %s0, 8
    %v23 = vld [vmem:[%s22] sm:$0xff]
    %24 = vrot.lane.b32.xlu0 %v23, 112
    %v25 = vpop.permute.xlu0 %24
    %vm26 = vcmask 130048
    %s27 = scalar_lea.vmem [#allocation2], 65
    %28 = vst.msk [vmem:[%s27] ss:$8 sm:$0xf] %vm26, %v25
    %s29 = scalar_lea.vmem [#allocation2], 65
    %30 = vst.msk [vmem:[%s29] ss:$8 sm:$0xf0] %vm26, %v25
    %s32 = ssub.s32 4, 1
    %v33 = vld [vmem:[#allocation2] sm:%s32]
    %s35 = ssub.s32 4, 1
    %36 = vst [vmem:[#allocation0] sm:%s35] %v33
    %s37 = scalar_lea.vmem [#allocation2], 8
    %v38 = vld [vmem:[%s37] sm:%s32]
    %s40 = ssub.s32 4, 1
    %s41 = scalar_lea.vmem [#allocation0], 2
    %42 = vst [vmem:[%s41] sm:%s40] %v38
    %s43 = scalar_lea.vmem [#allocation2], 16
    %v44 = vld [vmem:[%s43] sm:%s32]
    %s46 = ssub.s32 4, 1
    %s47 = scalar_lea.vmem [#allocation0], 4
    %48 = vst [vmem:[%s47] sm:%s46] %v44
    %s49 = scalar_lea.vmem [#allocation2], 24
    %v50 = vld [vmem:[%s49] sm:%s32]
    %s52 = ssub.s32 4, 1
    %s53 = scalar_lea.vmem [#allocation0], 6
    %54 = vst [vmem:[%s53] sm:%s52] %v50
    %s55 = scalar_lea.vmem [#allocation2], 32
    %v56 = vld [vmem:[%s55] sm:%s32]
    %s58 = ssub.s32 4, 1
    %s59 = scalar_lea.vmem [#allocation0], 8
    %60 = vst [vmem:[%s59] sm:%s58] %v56
    %s61 = scalar_lea.vmem [#allocation2], 40
    %v62 = vld [vmem:[%s61] sm:%s32]
    %s64 = ssub.s32 4, 1
    %s65 = scalar_lea.vmem [#allocation0], 10
    %66 = vst [vmem:[%s65] sm:%s64] %v62
    %s67 = scalar_lea.vmem [#allocation2], 48
    %v68 = vld [vmem:[%s67] sm:%s32]
    %s70 = ssub.s32 4, 1
    %s71 = scalar_lea.vmem [#allocation0], 12
    %72 = vst [vmem:[%s71] sm:%s70] %v68
    %s73 = scalar_lea.vmem [#allocation2], 56
    %v74 = vld [vmem:[%s73] sm:%s32]
    %s76 = ssub.s32 4, 1
    %s77 = scalar_lea.vmem [#allocation0], 14
    %78 = vst [vmem:[%s77] sm:%s76] %v74
    %s79 = scalar_lea.vmem [#allocation2], 64
    %v80 = vld [vmem:[%s79] sm:%s32]
    %s82 = ssub.s32 4, 1
    %s83 = scalar_lea.vmem [#allocation0], 16
    %84 = vst [vmem:[%s83] sm:%s82] %v80
    %s85 = scalar_lea.vmem [#allocation2], 72
    %v86 = vld [vmem:[%s85] sm:%s32]
    %s88 = ssub.s32 4, 1
    %s89 = scalar_lea.vmem [#allocation0], 18
    %90 = vst [vmem:[%s89] sm:%s88] %v86
    %s91 = scalar_lea.vmem [#allocation2], 80
    %v92 = vld [vmem:[%s91] sm:%s32]
    %s94 = ssub.s32 4, 1
    %s95 = scalar_lea.vmem [#allocation0], 20
    %96 = vst [vmem:[%s95] sm:%s94] %v92
    %s97 = scalar_lea.vmem [#allocation2], 88
    %v98 = vld [vmem:[%s97] sm:%s32]
    %s100 = ssub.s32 4, 1
    %s101 = scalar_lea.vmem [#allocation0], 22
    %102 = vst [vmem:[%s101] sm:%s100] %v98
    %s103 = scalar_lea.vmem [#allocation2], 96
    %v104 = vld [vmem:[%s103] sm:%s32]
    %s106 = ssub.s32 4, 1
    %s107 = scalar_lea.vmem [#allocation0], 24
    %108 = vst [vmem:[%s107] sm:%s106] %v104
    %s109 = scalar_lea.vmem [#allocation2], 104
    %v110 = vld [vmem:[%s109] sm:%s32]
    %s112 = ssub.s32 4, 1
    %s113 = scalar_lea.vmem [#allocation0], 26
    %114 = vst [vmem:[%s113] sm:%s112] %v110
    %s115 = scalar_lea.vmem [#allocation2], 112
    %v116 = vld [vmem:[%s115] sm:%s32]
    %s118 = ssub.s32 4, 1
    %s119 = scalar_lea.vmem [#allocation0], 28
    %120 = vst [vmem:[%s119] sm:%s118] %v116
    %s121 = scalar_lea.vmem [#allocation2], 120
    %v122 = vld [vmem:[%s121] sm:%s32]
    %s124 = ssub.s32 4, 1
    %s125 = scalar_lea.vmem [#allocation0], 30
    %126 = vst [vmem:[%s125] sm:%s124] %v122
    %128 = vsyncadd [#allocation1], 0
    %s130 = sshll.u32 [#allocation0], 4
    %s131 = int_to_ptr.vmem [resolvable:$true] %s130
    %s132 = sshll.u32 %s1, 4
    %s133 = int_to_ptr.hbm [resolvable:$true] %s132
    %135 = dma.vmem_to_hbm [thread:$0]  %s131, 512, %s133, [#allocation1]
    %137 = dma.done [#allocation1], 512
    %138 = vsyncpa [#allocation1], 1

// kernel: gemma_model_pallas.1
$region0: #{gemma_model_pallas.1}
  #allocation0 [shape = 'u32[]', space=smem, size = 0x4, offset = 0x4, fixed_abs, tag = 'smem constant byte address 0x4 - core index']
  #allocation1 [shape = 'u32[72,128]{1,0:T(1,128)}', space=vmem, size = 0x9000, scoped, tag = 'internal scratch']
  #allocation2 [shape = 's32[1]{0}', space=sflag, size = 0x4, scoped, tag = 'scoped memory for gemma_model_pallas.1']
  #allocation3 [shape = 'u8[512]{0}', space=smem, size = 0x200, scoped, tag = 'prefetched SMEM operand 0']
  %s0 = inlined_call_operand.vmem [shape: s32[8], index: 0, kind: input, shape index: {}]
  %s1 = inlined_call_operand.vmem [shape: f32[2,8,32], index: 1, kind: input, shape index: {}]
  %s2 = inlined_call_operand.vmem [shape: f32[2,1,32], index: 2, kind: input, shape index: {}]
  %s3 = inlined_call_operand.vmem [shape: f32[2,32,128], index: 3, kind: input, shape index: {}]
  %s4 = inlined_call_operand.vmem [shape: f32[2,64,32], index: 4, kind: input, shape index: {}]
  %s5 = inlined_call_operand.vmem [shape: f32[2,1,32], index: 5, kind: input, shape index: {}]
  %s6 = inlined_call_operand.vmem [shape: f32[2,32,64], index: 6, kind: input, shape index: {}]
  %s7 = inlined_call_operand.vmem [shape: f32[2,32,64], index: 7, kind: input, shape index: {}]
  %s8 = inlined_call_operand.vmem [shape: f32[2,64,32], index: 8, kind: input, shape index: {}]
  %s9 = inlined_call_operand.vmem [shape: f32[1,32], index: 9, kind: input, shape index: {}]
  %s10 = inlined_call_operand.vmem [shape: f32[8,128], index: 10, kind: input, shape index: {}]
  %s11 = inlined_call_operand.vmem [shape: f32[8,128], index: 11, kind: input, shape index: {}]
  %s12 = inlined_call_operand.vmem [shape: f32[2,16,8], index: 12, kind: input, shape index: {}]
  %s13 = inlined_call_operand.vmem [shape: f32[2,2,8,32], index: 13, kind: input, shape index: {}, may-alias: {13,16}]
  %s14 = inlined_call_operand.vmem [shape: f32[2,2,8,32], index: 14, kind: input, shape index: {}, may-alias: {14,17}]
  %s15 = inlined_call_operand.hbm [shape: f32[2,8,32], index: 15, kind: output, shape index: {0}]
  %s16 = inlined_call_operand.vmem [shape: f32[2,2,8,32], index: 16, kind: output, shape index: {1}, may-alias: {13,16}]
  %s17 = inlined_call_operand.vmem [shape: f32[2,2,8,32], index: 17, kind: output, shape index: {2}, may-alias: {14,17}]
  %18 = xla_tuple %s15, %s16, %s17
  %s19 = sld [smem:[#allocation0]]
  $region249: #{gemma_model_pallas.1} parent=0
    _
  %s21 = ssub.s32 1, %s19
  %s22 = scalar_select 0, %s21, %s19
  %s24 = sshll.u32 %s0, 4
  %s25 = int_to_ptr.vmem [resolvable:$true] %s24
  %27 = dma.vmem_to_smem %s25, 16, [#allocation3], [#allocation2]
  %29 = dma.done [#allocation2], 16
  %30 = sfence
  $region1: #{gemma_model_pallas.1} parent=0
    #allocation4 [shape = 'u8[16384]{0}', space=vmem, size = 0x4000, scoped, tag = 'input window, operand 13']
    #allocation5 [shape = 'u8[16384]{0}', space=vmem, size = 0x4000, scoped, tag = 'input window, operand 14']
    #allocation6 [shape = 'u8[8192]{0}', space=vmem, size = 0x2000, scoped, tag = 'output window, operand 0']
    #allocation7 [shape = 's32[2]{0}', space=sflag, size = 0x8, scoped, tag = 'scoped memory for gemma_model_pallas.1']
    #allocation8 [shape = 'u8[16384]{0}', space=vmem, size = 0x4000, scoped, tag = 'output window, operand 1']
    #allocation9 [shape = 'u8[16384]{0}', space=vmem, size = 0x4000, scoped, tag = 'output window, operand 2']
    %31 = vsyncpa [#allocation7], 0
    %s32 = scalar_lea.sflag [#allocation7], 1
    %33 = vsyncpa %s32, 0
    loop: start=0, step=1, limit=4
    $region2: #{gemma_model_pallas.1} parent=1 // loop_pre_header
      _
    $region3: #{gemma_model_pallas.1} parent=1 // loop_header
      %s35 = sphi 0, %s39
      %p36 = scmp.ge.s32.totalorder %s35, 4
      %s45 = sphi 0, %s47
      %s48 = sphi 0, %s45
      %s49 = sphi 0, %s48
      %s65 = sphi 0, %s49
      %s69 = sphi 0, %s69
      %s71 = sphi 0, %s69
      %s72 = sphi 0, %s71
      %s86 = sphi 0, %s72
      %s90 = sphi 0, %s90
      %s92 = sphi 0, %s90
      %s93 = sphi 0, %s92
      %s107 = sphi 0, %s93
      %s111 = sphi 0, %s111
      %s113 = sphi 0, %s111
      %s114 = sphi 0, %s113
      %s128 = sphi 0, %s114
      %s132 = sphi 0, %s132
      %s134 = sphi 0, %s132
      %s135 = sphi 0, %s134
      %s149 = sphi 0, %s135
      %s153 = sphi 0, %s153
      %s155 = sphi 0, %s153
      %s156 = sphi 0, %s155
      %s170 = sphi 0, %s156
      %s174 = sphi 0, %s174
      %s176 = sphi 0, %s174
      %s177 = sphi 0, %s176
      %s191 = sphi 0, %s177
      %s195 = sphi 0, %s195
      %s197 = sphi 0, %s195
      %s198 = sphi 0, %s197
      %s212 = sphi 0, %s198
      %s216 = sphi 0, %s216
      %s218 = sphi 0, %s216
      %s219 = sphi 0, %s218
      %s233 = sphi 0, %s219
      %s237 = sphi 0, %s237
      %s239 = sphi 0, %s237
      %s240 = sphi 0, %s239
      %s254 = sphi 0, %s240
      %s258 = sphi 0, %s258
      %s260 = sphi 0, %s258
      %s261 = sphi 0, %s260
      %s275 = sphi 0, %s261
      %s281 = sphi 0, %s283
      %s284 = sphi 0, %s281
      %s285 = sphi 0, %s284
      %s301 = sphi 0, %s285
      %s307 = sphi 0, %s309
      %s310 = sphi 0, %s307
      %s311 = sphi 0, %s310
      %s327 = sphi 0, %s311
      %s333 = sphi 0, %s335
      %s336 = sphi 0, %s333
      %s337 = sphi 0, %s336
      %s353 = sphi 0, %s337
      %s359 = sphi 0, %s361
      %s362 = sphi 0, %s359
      %s363 = sphi 0, %s362
      %s379 = sphi 0, %s363
      %s385 = sphi 0, %s387
      %s388 = sphi 0, %s385
      %s389 = sphi 0, %s388
      %s405 = sphi 0, %s389
      %s411 = sphi 0, %s413
      %s414 = sphi 0, %s411
      %s415 = sphi 0, %s414
      %s431 = sphi 0, %s415
    $region4: #{gemma_model_pallas.1} parent=1 // loop_header_branch
      %38 = sbr.rel (%p36) target = $region8
    $region5: #{gemma_model_pallas.1} parent=1 // loop_body
      %s40 = ssub.s32 %s35, 1
      %s41 = ssub.s32 %s35, 2
      %s42 = sadd.s32 %s35, 1
      %s43 = ssub.s32 %s35, %s42
      %p44 = scmp.eq.s32.totalorder %s43, 0
      %s46 = sadd.s32 %s45, 1
      %s47 = scalar_select %p44, %s45, %s46
      %p50 = pneg %p44
      %p51 = scmp.eq.s32.totalorder %s35, 1
      %p52 = por %p50, %p51
      %p53 = scmp.ne.s32.totalorder %s45, %s48
      %p54 = scmp.eq.s32.totalorder %s35, 0
      %p55 = por %p53, %p54
      %p56 = scmp.ne.s32.totalorder %s45, %s48
      %p57 = scmp.eq.s32.totalorder %s40, 1
      %p58 = por %p56, %p57
      %p59 = scmp.ne.s32.totalorder %s48, %s49
      %p60 = scmp.eq.s32.totalorder %s40, 0
      %p61 = por %p59, %p60
      %p62 = scmp.ne.s32.totalorder %s48, %s49
      %p63 = scmp.eq.s32.totalorder %s41, 1
      %p64 = por %p62, %p63
      %p66 = scmp.ne.s32.totalorder %s49, %s65
      %p67 = scmp.eq.s32.totalorder %s41, 0
      %p68 = por %p66, %p67
      %s70 = sadd.s32 %s69, 1
      %p73 = scmp.eq.s32.totalorder %s35, 1
      %p74 = scmp.ne.s32.totalorder %s69, %s71
      %p75 = scmp.eq.s32.totalorder %s35, 0
      %p76 = por %p74, %p75
      %p77 = scmp.ne.s32.totalorder %s69, %s71
      %p78 = scmp.eq.s32.totalorder %s40, 1
      %p79 = por %p77, %p78
      %p80 = scmp.ne.s32.totalorder %s71, %s72
      %p81 = scmp.eq.s32.totalorder %s40, 0
      %p82 = por %p80, %p81
      %p83 = scmp.ne.s32.totalorder %s71, %s72
      %p84 = scmp.eq.s32.totalorder %s41, 1
      %p85 = por %p83, %p84
      %p87 = scmp.ne.s32.totalorder %s72, %s86
      %p88 = scmp.eq.s32.totalorder %s41, 0
      %p89 = por %p87, %p88
      %s91 = sadd.s32 %s90, 1
      %p94 = scmp.eq.s32.totalorder %s35, 1
      %p95 = scmp.ne.s32.totalorder %s90, %s92
      %p96 = scmp.eq.s32.totalorder %s35, 0
      %p97 = por %p95, %p96
      %p98 = scmp.ne.s32.totalorder %s90, %s92
      %p99 = scmp.eq.s32.totalorder %s40, 1
      %p100 = por %p98, %p99
      %p101 = scmp.ne.s32.totalorder %s92, %s93
      %p102 = scmp.eq.s32.totalorder %s40, 0
      %p103 = por %p101, %p102
      %p104 = scmp.ne.s32.totalorder %s92, %s93
      %p105 = scmp.eq.s32.totalorder %s41, 1
      %p106 = por %p104, %p105
      %p108 = scmp.ne.s32.totalorder %s93, %s107
      %p109 = scmp.eq.s32.totalorder %s41, 0
      %p110 = por %p108, %p109
      %s112 = sadd.s32 %s111, 1
      %p115 = scmp.eq.s32.totalorder %s35, 1
      %p116 = scmp.ne.s32.totalorder %s111, %s113
      %p117 = scmp.eq.s32.totalorder %s35, 0
      %p118 = por %p116, %p117
      %p119 = scmp.ne.s32.totalorder %s111, %s113
      %p120 = scmp.eq.s32.totalorder %s40, 1
      %p121 = por %p119, %p120
      %p122 = scmp.ne.s32.totalorder %s113, %s114
      %p123 = scmp.eq.s32.totalorder %s40, 0
      %p124 = por %p122, %p123
      %p125 = scmp.ne.s32.totalorder %s113, %s114
      %p126 = scmp.eq.s32.totalorder %s41, 1
      %p127 = por %p125, %p126
      %p129 = scmp.ne.s32.totalorder %s114, %s128
      %p130 = scmp.eq.s32.totalorder %s41, 0
      %p131 = por %p129, %p130
      %s133 = sadd.s32 %s132, 1
      %p136 = scmp.eq.s32.totalorder %s35, 1
      %p137 = scmp.ne.s32.totalorder %s132, %s134
      %p138 = scmp.eq.s32.totalorder %s35, 0
      %p139 = por %p137, %p138
      %p140 = scmp.ne.s32.totalorder %s132, %s134
      %p141 = scmp.eq.s32.totalorder %s40, 1
      %p142 = por %p140, %p141
      %p143 = scmp.ne.s32.totalorder %s134, %s135
      %p144 = scmp.eq.s32.totalorder %s40, 0
      %p145 = por %p143, %p144
      %p146 = scmp.ne.s32.totalorder %s134, %s135
      %p147 = scmp.eq.s32.totalorder %s41, 1
      %p148 = por %p146, %p147
      %p150 = scmp.ne.s32.totalorder %s135, %s149
      %p151 = scmp.eq.s32.totalorder %s41, 0
      %p152 = por %p150, %p151
      %s154 = sadd.s32 %s153, 1
      %p157 = scmp.eq.s32.totalorder %s35, 1
      %p158 = scmp.ne.s32.totalorder %s153, %s155
      %p159 = scmp.eq.s32.totalorder %s35, 0
      %p160 = por %p158, %p159
      %p161 = scmp.ne.s32.totalorder %s153, %s155
      %p162 = scmp.eq.s32.totalorder %s40, 1
      %p163 = por %p161, %p162
      %p164 = scmp.ne.s32.totalorder %s155, %s156
      %p165 = scmp.eq.s32.totalorder %s40, 0
      %p166 = por %p164, %p165
      %p167 = scmp.ne.s32.totalorder %s155, %s156
      %p168 = scmp.eq.s32.totalorder %s41, 1
      %p169 = por %p167, %p168
      %p171 = scmp.ne.s32.totalorder %s156, %s170
      %p172 = scmp.eq.s32.totalorder %s41, 0
      %p173 = por %p171, %p172
      %s175 = sadd.s32 %s174, 1
      %p178 = scmp.eq.s32.totalorder %s35, 1
      %p179 = scmp.ne.s32.totalorder %s174, %s176
      %p180 = scmp.eq.s32.totalorder %s35, 0
      %p181 = por %p179, %p180
      %p182 = scmp.ne.s32.totalorder %s174, %s176
      %p183 = scmp.eq.s32.totalorder %s40, 1
      %p184 = por %p182, %p183
      %p185 = scmp.ne.s32.totalorder %s176, %s177
      %p186 = scmp.eq.s32.totalorder %s40, 0
      %p187 = por %p185, %p186
      %p188 = scmp.ne.s32.totalorder %s176, %s177
      %p189 = scmp.eq.s32.totalorder %s41, 1
      %p190 = por %p188, %p189
      %p192 = scmp.ne.s32.totalorder %s177, %s191
      %p193 = scmp.eq.s32.totalorder %s41, 0
      %p194 = por %p192, %p193
      %s196 = sadd.s32 %s195, 1
      %p199 = scmp.eq.s32.totalorder %s35, 1
      %p200 = scmp.ne.s32.totalorder %s195, %s197
      %p201 = scmp.eq.s32.totalorder %s35, 0
      %p202 = por %p200, %p201
      %p203 = scmp.ne.s32.totalorder %s195, %s197
      %p204 = scmp.eq.s32.totalorder %s40, 1
      %p205 = por %p203, %p204
      %p206 = scmp.ne.s32.totalorder %s197, %s198
      %p207 = scmp.eq.s32.totalorder %s40, 0
      %p208 = por %p206, %p207
      %p209 = scmp.ne.s32.totalorder %s197, %s198
      %p210 = scmp.eq.s32.totalorder %s41, 1
      %p211 = por %p209, %p210
      %p213 = scmp.ne.s32.totalorder %s198, %s212
      %p214 = scmp.eq.s32.totalorder %s41, 0
      %p215 = por %p213, %p214
      %s217 = sadd.s32 %s216, 1
      %p220 = scmp.eq.s32.totalorder %s35, 1
      %p221 = scmp.ne.s32.totalorder %s216, %s218
      %p222 = scmp.eq.s32.totalorder %s35, 0
      %p223 = por %p221, %p222
      %p224 = scmp.ne.s32.totalorder %s216, %s218
      %p225 = scmp.eq.s32.totalorder %s40, 1
      %p226 = por %p224, %p225
      %p227 = scmp.ne.s32.totalorder %s218, %s219
      %p228 = scmp.eq.s32.totalorder %s40, 0
      %p229 = por %p227, %p228
      %p230 = scmp.ne.s32.totalorder %s218, %s219
      %p231 = scmp.eq.s32.totalorder %s41, 1
      %p232 = por %p230, %p231
      %p234 = scmp.ne.s32.totalorder %s219, %s233
      %p235 = scmp.eq.s32.totalorder %s41, 0
      %p236 = por %p234, %p235
      %s238 = sadd.s32 %s237, 1
      %p241 = scmp.eq.s32.totalorder %s35, 1
      %p242 = scmp.ne.s32.totalorder %s237, %s239
      %p243 = scmp.eq.s32.totalorder %s35, 0
      %p244 = por %p242, %p243
      %p245 = scmp.ne.s32.totalorder %s237, %s239
      %p246 = scmp.eq.s32.totalorder %s40, 1
      %p247 = por %p245, %p246
      %p248 = scmp.ne.s32.totalorder %s239, %s240
      %p249 = scmp.eq.s32.totalorder %s40, 0
      %p250 = por %p248, %p249
      %p251 = scmp.ne.s32.totalorder %s239, %s240
      %p252 = scmp.eq.s32.totalorder %s41, 1
      %p253 = por %p251, %p252
      %p255 = scmp.ne.s32.totalorder %s240, %s254
      %p256 = scmp.eq.s32.totalorder %s41, 0
      %p257 = por %p255, %p256
      %s259 = sadd.s32 %s258, 1
      %p262 = scmp.eq.s32.totalorder %s35, 1
      %p263 = scmp.ne.s32.totalorder %s258, %s260
      %p264 = scmp.eq.s32.totalorder %s35, 0
      %p265 = por %p263, %p264
      %p266 = scmp.ne.s32.totalorder %s258, %s260
      %p267 = scmp.eq.s32.totalorder %s40, 1
      %p268 = por %p266, %p267
      %p269 = scmp.ne.s32.totalorder %s260, %s261
      %p270 = scmp.eq.s32.totalorder %s40, 0
      %p271 = por %p269, %p270
      %p272 = scmp.ne.s32.totalorder %s260, %s261
      %p273 = scmp.eq.s32.totalorder %s41, 1
      %p274 = por %p272, %p273
      %p276 = scmp.ne.s32.totalorder %s261, %s275
      %p277 = scmp.eq.s32.totalorder %s41, 0
      %p278 = por %p276, %p277
      %s279 = ssub.s32 %s35, %s42
      %p280 = scmp.eq.s32.totalorder %s279, 0
      %s282 = sadd.s32 %s281, 1
      %s283 = scalar_select %p280, %s281, %s282
      %p286 = pneg %p280
      %p287 = scmp.eq.s32.totalorder %s35, 1
      %p288 = por %p286, %p287
      %p289 = scmp.ne.s32.totalorder %s281, %s284
      %p290 = scmp.eq.s32.totalorder %s35, 0
      %p291 = por %p289, %p290
      %p292 = scmp.ne.s32.totalorder %s281, %s284
      %p293 = scmp.eq.s32.totalorder %s40, 1
      %p294 = por %p292, %p293
      %p295 = scmp.ne.s32.totalorder %s284, %s285
      %p296 = scmp.eq.s32.totalorder %s40, 0
      %p297 = por %p295, %p296
      %p298 = scmp.ne.s32.totalorder %s284, %s285
      %p299 = scmp.eq.s32.totalorder %s41, 1
      %p300 = por %p298, %p299
      %p302 = scmp.ne.s32.totalorder %s285, %s301
      %p303 = scmp.eq.s32.totalorder %s41, 0
      %p304 = por %p302, %p303
      %s305 = ssub.s32 %s35, %s42
      %p306 = scmp.eq.s32.totalorder %s305, 0
      %s308 = sadd.s32 %s307, 1
      %s309 = scalar_select %p306, %s307, %s308
      %p312 = pneg %p306
      %p313 = scmp.eq.s32.totalorder %s35, 1
      %p314 = por %p312, %p313
      %p315 = scmp.ne.s32.totalorder %s307, %s310
      %p316 = scmp.eq.s32.totalorder %s35, 0
      %p317 = por %p315, %p316
      %p318 = scmp.ne.s32.totalorder %s307, %s310
      %p319 = scmp.eq.s32.totalorder %s40, 1
      %p320 = por %p318, %p319
      %p321 = scmp.ne.s32.totalorder %s310, %s311
      %p322 = scmp.eq.s32.totalorder %s40, 0
      %p323 = por %p321, %p322
      %p324 = scmp.ne.s32.totalorder %s310, %s311
      %p325 = scmp.eq.s32.totalorder %s41, 1
      %p326 = por %p324, %p325
      %p328 = scmp.ne.s32.totalorder %s311, %s327
      %p329 = scmp.eq.s32.totalorder %s41, 0
      %p330 = por %p328, %p329
      %s331 = ssub.s32 %s35, %s42
      %p332 = scmp.eq.s32.totalorder %s331, 0
      %s334 = sadd.s32 %s333, 1
      %s335 = scalar_select %p332, %s333, %s334
      %p338 = pneg %p332
      %p339 = scmp.eq.s32.totalorder %s35, 1
      %p340 = por %p338, %p339
      %p341 = scmp.ne.s32.totalorder %s333, %s336
      %p342 = scmp.eq.s32.totalorder %s35, 0
      %p343 = por %p341, %p342
      %p344 = scmp.ne.s32.totalorder %s333, %s336
      %p345 = scmp.eq.s32.totalorder %s40, 1
      %p346 = por %p344, %p345
      %p347 = scmp.ne.s32.totalorder %s336, %s337
      %p348 = scmp.eq.s32.totalorder %s40, 0
      %p349 = por %p347, %p348
      %p350 = scmp.ne.s32.totalorder %s336, %s337
      %p351 = scmp.eq.s32.totalorder %s41, 1
      %p352 = por %p350, %p351
      %p354 = scmp.ne.s32.totalorder %s337, %s353
      %p355 = scmp.eq.s32.totalorder %s41, 0
      %p356 = por %p354, %p355
      %s357 = ssub.s32 %s35, %s42
      %p358 = scmp.eq.s32.totalorder %s357, 0
      %s360 = sadd.s32 %s359, 1
      %s361 = scalar_select %p358, %s359, %s360
      %p364 = pneg %p358
      %p365 = scmp.eq.s32.totalorder %s35, 1
      %p366 = por %p364, %p365
      %p367 = scmp.ne.s32.totalorder %s359, %s362
      %p368 = scmp.eq.s32.totalorder %s35, 0
      %p369 = por %p367, %p368
      %p370 = scmp.ne.s32.totalorder %s359, %s362
      %p371 = scmp.eq.s32.totalorder %s40, 1
      %p372 = por %p370, %p371
      %p373 = scmp.ne.s32.totalorder %s362, %s363
      %p374 = scmp.eq.s32.totalorder %s40, 0
      %p375 = por %p373, %p374
      %p376 = scmp.ne.s32.totalorder %s362, %s363
      %p377 = scmp.eq.s32.totalorder %s41, 1
      %p378 = por %p376, %p377
      %p380 = scmp.ne.s32.totalorder %s363, %s379
      %p381 = scmp.eq.s32.totalorder %s41, 0
      %p382 = por %p380, %p381
      %s383 = ssub.s32 %s35, %s42
      %p384 = scmp.eq.s32.totalorder %s383, 0
      %s386 = sadd.s32 %s385, 1
      %s387 = scalar_select %p384, %s385, %s386
      %p390 = pneg %p384
      %p391 = scmp.eq.s32.totalorder %s35, 1
      %p392 = por %p390, %p391
      %p393 = scmp.ne.s32.totalorder %s385, %s388
      %p394 = scmp.eq.s32.totalorder %s35, 0
      %p395 = por %p393, %p394
      %p396 = scmp.ne.s32.totalorder %s385, %s388
      %p397 = scmp.eq.s32.totalorder %s40, 1
      %p398 = por %p396, %p397
      %p399 = scmp.ne.s32.totalorder %s388, %s389
      %p400 = scmp.eq.s32.totalorder %s40, 0
      %p401 = por %p399, %p400
      %p402 = scmp.ne.s32.totalorder %s388, %s389
      %p403 = scmp.eq.s32.totalorder %s41, 1
      %p404 = por %p402, %p403
      %p406 = scmp.ne.s32.totalorder %s389, %s405
      %p407 = scmp.eq.s32.totalorder %s41, 0
      %p408 = por %p406, %p407
      %s409 = ssub.s32 %s35, %s42
      %p410 = scmp.eq.s32.totalorder %s409, 0
      %s412 = sadd.s32 %s411, 1
      %s413 = scalar_select %p410, %s411, %s412
      %p416 = pneg %p410
      %p417 = scmp.eq.s32.totalorder %s35, 1
      %p418 = por %p416, %p417
      %p419 = scmp.ne.s32.totalorder %s411, %s414
      %p420 = scmp.eq.s32.totalorder %s35, 0
      %p421 = por %p419, %p420
      %p422 = scmp.ne.s32.totalorder %s411, %s414
      %p423 = scmp.eq.s32.totalorder %s40, 1
      %p424 = por %p422, %p423
      %p425 = scmp.ne.s32.totalorder %s414, %s415
      %p426 = scmp.eq.s32.totalorder %s40, 0
      %p427 = por %p425, %p426
      %p428 = scmp.ne.s32.totalorder %s414, %s415
      %p429 = scmp.eq.s32.totalorder %s41, 1
      %p430 = por %p428, %p429
      %p432 = scmp.ne.s32.totalorder %s415, %s431
      %p433 = scmp.eq.s32.totalorder %s41, 0
      %p434 = por %p432, %p433
      %p435 = scmp.le.s32.totalorder 1, %s35
      %p436 = scmp.lt.s32.totalorder %s35, 3
      %p437 = pnand %p435, %p436
      %p438 = pneg %p437
      // Predicated region
      $region9: #{gemma_model_pallas.1} parent=5 // pred_check
        _
      $region10: #{gemma_model_pallas.1} parent=5 // pred_check_branch
        %440 = sbr.rel (%p437) target = $region12
      $region11: #{gemma_model_pallas.1} parent=5 // pred_region
        %s441 = ssub.s32 %s35, 1
        // Predicated region
        $region13: #{gemma_model_pallas.1} parent=11 // pred_check
          %p442 = pneg %p82
        $region14: #{gemma_model_pallas.1} parent=11 // pred_check_branch
          %444 = sbr.rel (%p442) target = $region16
        $region15: #{gemma_model_pallas.1} parent=11 // pred_region
          _
        $region16: #{gemma_model_pallas.1} parent=11 // pred_fallthru
          _
        // Predicated region
        $region17: #{gemma_model_pallas.1} parent=11 // pred_check
          %p445 = pneg %p103
        $region18: #{gemma_model_pallas.1} parent=11 // pred_check_branch
          %447 = sbr.rel (%p445) target = $region20
        $region19: #{gemma_model_pallas.1} parent=11 // pred_region
          _
        $region20: #{gemma_model_pallas.1} parent=11 // pred_fallthru
          _
        // Predicated region
        $region21: #{gemma_model_pallas.1} parent=11 // pred_check
          %p448 = pneg %p124
        $region22: #{gemma_model_pallas.1} parent=11 // pred_check_branch
          %450 = sbr.rel (%p448) target = $region24
        $region23: #{gemma_model_pallas.1} parent=11 // pred_region
          _
        $region24: #{gemma_model_pallas.1} parent=11 // pred_fallthru
          _
        // Predicated region
        $region25: #{gemma_model_pallas.1} parent=11 // pred_check
          %p451 = pneg %p145
        $region26: #{gemma_model_pallas.1} parent=11 // pred_check_branch
          %453 = sbr.rel (%p451) target = $region28
        $region27: #{gemma_model_pallas.1} parent=11 // pred_region
          _
        $region28: #{gemma_model_pallas.1} parent=11 // pred_fallthru
          _
        // Predicated region
        $region29: #{gemma_model_pallas.1} parent=11 // pred_check
          %p454 = pneg %p166
        $region30: #{gemma_model_pallas.1} parent=11 // pred_check_branch
          %456 = sbr.rel (%p454) target = $region32
        $region31: #{gemma_model_pallas.1} parent=11 // pred_region
          _
        $region32: #{gemma_model_pallas.1} parent=11 // pred_fallthru
          _
        // Predicated region
        $region33: #{gemma_model_pallas.1} parent=11 // pred_check
          %p457 = pneg %p187
        $region34: #{gemma_model_pallas.1} parent=11 // pred_check_branch
          %459 = sbr.rel (%p457) target = $region36
        $region35: #{gemma_model_pallas.1} parent=11 // pred_region
          _
        $region36: #{gemma_model_pallas.1} parent=11 // pred_fallthru
          _
        // Predicated region
        $region37: #{gemma_model_pallas.1} parent=11 // pred_check
          %p460 = pneg %p208
        $region38: #{gemma_model_pallas.1} parent=11 // pred_check_branch
          %462 = sbr.rel (%p460) target = $region40
        $region39: #{gemma_model_pallas.1} parent=11 // pred_region
          _
        $region40: #{gemma_model_pallas.1} parent=11 // pred_fallthru
          _
        // Predicated region
        $region41: #{gemma_model_pallas.1} parent=11 // pred_check
          %p463 = pneg %p229
        $region42: #{gemma_model_pallas.1} parent=11 // pred_check_branch
          %465 = sbr.rel (%p463) target = $region44
        $region43: #{gemma_model_pallas.1} parent=11 // pred_region
          _
        $region44: #{gemma_model_pallas.1} parent=11 // pred_fallthru
          _
        // Predicated region
        $region45: #{gemma_model_pallas.1} parent=11 // pred_check
          %p466 = pneg %p250
        $region46: #{gemma_model_pallas.1} parent=11 // pred_check_branch
          %468 = sbr.rel (%p466) target = $region48
        $region47: #{gemma_model_pallas.1} parent=11 // pred_region
          _
        $region48: #{gemma_model_pallas.1} parent=11 // pred_fallthru
          _
        // Predicated region
        $region49: #{gemma_model_pallas.1} parent=11 // pred_check
          %p469 = pneg %p271
        $region50: #{gemma_model_pallas.1} parent=11 // pred_check_branch
          %471 = sbr.rel (%p469) target = $region52
        $region51: #{gemma_model_pallas.1} parent=11 // pred_region
          _
        $region52: #{gemma_model_pallas.1} parent=11 // pred_fallthru
          _
      $region12: #{gemma_model_pallas.1} parent=5 // pred_fallthru
        _
      %p472 = scmp.lt.s32.totalorder %s35, 2
      // Predicated region
      $region53: #{gemma_model_pallas.1} parent=5 // pred_check
        %p473 = pneg %p472
      $region54: #{gemma_model_pallas.1} parent=5 // pred_check_branch
        %475 = sbr.rel (%p473) target = $region56
      $region55: #{gemma_model_pallas.1} parent=5 // pred_region
        // Predicated region
        $region57: #{gemma_model_pallas.1} parent=55 // pred_check
          %p476 = pneg %p55
        $region58: #{gemma_model_pallas.1} parent=55 // pred_check_branch
          %478 = sbr.rel (%p476) target = $region60
        $region59: #{gemma_model_pallas.1} parent=55 // pred_region
          %p479 = scmp.lt.s32.totalorder %s35, 1
          %s480 = scalar_select %p479, %s35, 1
          %s481 = smul.addr %s480, 8
          %s482 = scalar_lea.vmem %s1, %s481
        $region60: #{gemma_model_pallas.1} parent=55 // pred_fallthru
          _
        // Predicated region
        $region61: #{gemma_model_pallas.1} parent=55 // pred_check
          %p483 = pneg %p291
        $region62: #{gemma_model_pallas.1} parent=55 // pred_check_branch
          %485 = sbr.rel (%p483) target = $region64
        $region63: #{gemma_model_pallas.1} parent=55 // pred_region
          %p486 = scmp.lt.s32.totalorder %s35, 1
          %s487 = scalar_select %p486, %s35, 1
          %s488 = smul.addr %s487, 2
          %s489 = smul.addr %s488, 8
          %s490 = scalar_lea.vmem %s12, %s489
        $region64: #{gemma_model_pallas.1} parent=55 // pred_fallthru
          _
        // Predicated region
        $region65: #{gemma_model_pallas.1} parent=55 // pred_check
          %p491 = pneg %p317
        $region66: #{gemma_model_pallas.1} parent=55 // pred_check_branch
          %493 = sbr.rel (%p491) target = $region68
        $region67: #{gemma_model_pallas.1} parent=55 // pred_region
          %s494 = sand.u32 %s307, 1
          %s495 = sand.u32 %s307, 1
          %s496 = smul.addr %s495, 16
          %s497 = scalar_lea.vmem [#allocation4], %s496
          %s498 = smul.addr %s35, 8
          %s499 = scalar_lea.vmem %s13, %s498
          // Predicated region
          $region69: #{gemma_model_pallas.1} parent=67 // pred_check
            _
          $region70: #{gemma_model_pallas.1} parent=67 // pred_check_branch
            %501 = sbr.rel (0) target = $region72
          $region71: #{gemma_model_pallas.1} parent=67 // pred_region
            // Predicated region
            $region73: #{gemma_model_pallas.1} parent=71 // pred_check
              _
            $region74: #{gemma_model_pallas.1} parent=71 // pred_check_branch
              %503 = sbr.rel (0) target = $region76
            $region75: #{gemma_model_pallas.1} parent=71 // pred_region
              // Predicated region
              $region88: #{gemma_model_pallas.1} parent=75 // pred_check
                _
              $region89: #{gemma_model_pallas.1} parent=75 // pred_check_branch
                %521 = sbr.rel (0) target = $region91
              $region90: #{gemma_model_pallas.1} parent=75 // pred_region
                loop: start=0, step=1, limit=1
                $region92: #{gemma_model_pallas.1} parent=90 // loop_pre_header
                  _
                $region93: #{gemma_model_pallas.1} parent=90 // loop_header
                  %s523 = sphi 0, %s527
                  %p524 = scmp.ge.s32.totalorder %s523, 1
                  %s528 = sphi %s499, %s499
                  %s529 = sphi %s497, %s497
                $region94: #{gemma_model_pallas.1} parent=90 // loop_header_branch
                  %526 = sbr.rel (%p524) target = $region98
                $region95: #{gemma_model_pallas.1} parent=90 // loop_body
                  %v530 = vld [vmem:[%s528] sm:$0xff]
                  %531 = vst [vmem:[%s529] sm:$0xff] %v530
                  %v532 = vld [vmem:[%s528 + $0x10] sm:$0xff]
                  %533 = vst [vmem:[%s529 + $0x8] sm:$0xff] %v532
                $region96: #{gemma_model_pallas.1} parent=90 // loop_footer
                  %s527 = sadd.s32 1, %s523
                $region97: #{gemma_model_pallas.1} parent=90 // loop_footer_branch
                  %522 = sbr.rel target = $region93
                $region98: #{gemma_model_pallas.1} parent=90 // loop_exit
                  _
              $region91: #{gemma_model_pallas.1} parent=75 // pred_fallthru
                _
              // Predicated region
              $region99: #{gemma_model_pallas.1} parent=75 // pred_check
                _
              $region100: #{gemma_model_pallas.1} parent=75 // pred_check_branch
                %535 = sbr.rel target = $region102
              $region101: #{gemma_model_pallas.1} parent=75 // pred_region
                _
              $region102: #{gemma_model_pallas.1} parent=75 // pred_fallthru
                _
            $region76: #{gemma_model_pallas.1} parent=71 // pred_fallthru
              _
            // Predicated region
            $region77: #{gemma_model_pallas.1} parent=71 // pred_check
              _
            $region78: #{gemma_model_pallas.1} parent=71 // pred_check_branch
              %505 = sbr.rel target = $region80
            $region79: #{gemma_model_pallas.1} parent=71 // pred_region
              %s507 = ssub.s32 256, 1
              loop: start=0, step=1, limit=1
              $region81: #{gemma_model_pallas.1} parent=79 // loop_pre_header
                _
              $region82: #{gemma_model_pallas.1} parent=79 // loop_header
                %s509 = sphi 0, %s513
                %p510 = scmp.ge.s32.totalorder %s509, 1
                %s514 = sphi %s499, %s499
                %s515 = sphi %s497, %s497
              $region83: #{gemma_model_pallas.1} parent=79 // loop_header_branch
                %512 = sbr.rel (%p510) target = $region87
              $region84: #{gemma_model_pallas.1} parent=79 // loop_body
                %v516 = vld [vmem:[%s514] sm:%s507]
                %517 = vst [vmem:[%s515] sm:%s507] %v516
                %v518 = vld [vmem:[%s514 + $0x10] sm:%s507]
                %519 = vst [vmem:[%s515 + $0x8] sm:%s507] %v518
              $region85: #{gemma_model_pallas.1} parent=79 // loop_footer
                %s513 = sadd.s32 1, %s509
              $region86: #{gemma_model_pallas.1} parent=79 // loop_footer_branch
                %508 = sbr.rel target = $region82
              $region87: #{gemma_model_pallas.1} parent=79 // loop_exit
                _
            $region80: #{gemma_model_pallas.1} parent=71 // pred_fallthru
              _
          $region72: #{gemma_model_pallas.1} parent=67 // pred_fallthru
            _
          %536 = vnop
        $region68: #{gemma_model_pallas.1} parent=55 // pred_fallthru
          _
        // Predicated region
        $region103: #{gemma_model_pallas.1} parent=55 // pred_check
          %p537 = pneg %p343
        $region104: #{gemma_model_pallas.1} parent=55 // pred_check_branch
          %539 = sbr.rel (%p537) target = $region106
        $region105: #{gemma_model_pallas.1} parent=55 // pred_region
          %s540 = sand.u32 %s333, 1
          %s541 = sand.u32 %s333, 1
          %s542 = smul.addr %s541, 16
          %s543 = scalar_lea.vmem [#allocation5], %s542
          %s544 = smul.addr %s35, 8
          %s545 = scalar_lea.vmem %s14, %s544
          // Predicated region
          $region107: #{gemma_model_pallas.1} parent=105 // pred_check
            _
          $region108: #{gemma_model_pallas.1} parent=105 // pred_check_branch
            %547 = sbr.rel (0) target = $region110
          $region109: #{gemma_model_pallas.1} parent=105 // pred_region
            // Predicated region
            $region111: #{gemma_model_pallas.1} parent=109 // pred_check
              _
            $region112: #{gemma_model_pallas.1} parent=109 // pred_check_branch
              %549 = sbr.rel (0) target = $region114
            $region113: #{gemma_model_pallas.1} parent=109 // pred_region
              // Predicated region
              $region126: #{gemma_model_pallas.1} parent=113 // pred_check
                _
              $region127: #{gemma_model_pallas.1} parent=113 // pred_check_branch
                %567 = sbr.rel (0) target = $region129
              $region128: #{gemma_model_pallas.1} parent=113 // pred_region
                loop: start=0, step=1, limit=1
                $region130: #{gemma_model_pallas.1} parent=128 // loop_pre_header
                  _
                $region131: #{gemma_model_pallas.1} parent=128 // loop_header
                  %s569 = sphi 0, %s573
                  %p570 = scmp.ge.s32.totalorder %s569, 1
                  %s574 = sphi %s545, %s545
                  %s575 = sphi %s543, %s543
                $region132: #{gemma_model_pallas.1} parent=128 // loop_header_branch
                  %572 = sbr.rel (%p570) target = $region136
                $region133: #{gemma_model_pallas.1} parent=128 // loop_body
                  %v576 = vld [vmem:[%s574] sm:$0xff]
                  %577 = vst [vmem:[%s575] sm:$0xff] %v576
                  %v578 = vld [vmem:[%s574 + $0x10] sm:$0xff]
                  %579 = vst [vmem:[%s575 + $0x8] sm:$0xff] %v578
                $region134: #{gemma_model_pallas.1} parent=128 // loop_footer
                  %s573 = sadd.s32 1, %s569
                $region135: #{gemma_model_pallas.1} parent=128 // loop_footer_branch
                  %568 = sbr.rel target = $region131
                $region136: #{gemma_model_pallas.1} parent=128 // loop_exit
                  _
              $region129: #{gemma_model_pallas.1} parent=113 // pred_fallthru
                _
              // Predicated region
              $region137: #{gemma_model_pallas.1} parent=113 // pred_check
                _
              $region138: #{gemma_model_pallas.1} parent=113 // pred_check_branch
                %581 = sbr.rel target = $region140
              $region139: #{gemma_model_pallas.1} parent=113 // pred_region
                _
              $region140: #{gemma_model_pallas.1} parent=113 // pred_fallthru
                _
            $region114: #{gemma_model_pallas.1} parent=109 // pred_fallthru
              _
            // Predicated region
            $region115: #{gemma_model_pallas.1} parent=109 // pred_check
              _
            $region116: #{gemma_model_pallas.1} parent=109 // pred_check_branch
              %551 = sbr.rel target = $region118
            $region117: #{gemma_model_pallas.1} parent=109 // pred_region
              %s553 = ssub.s32 256, 1
              loop: start=0, step=1, limit=1
              $region119: #{gemma_model_pallas.1} parent=117 // loop_pre_header
                _
              $region120: #{gemma_model_pallas.1} parent=117 // loop_header
                %s555 = sphi 0, %s559
                %p556 = scmp.ge.s32.totalorder %s555, 1
                %s560 = sphi %s545, %s545
                %s561 = sphi %s543, %s543
              $region121: #{gemma_model_pallas.1} parent=117 // loop_header_branch
                %558 = sbr.rel (%p556) target = $region125
              $region122: #{gemma_model_pallas.1} parent=117 // loop_body
                %v562 = vld [vmem:[%s560] sm:%s553]
                %563 = vst [vmem:[%s561] sm:%s553] %v562
                %v564 = vld [vmem:[%s560 + $0x10] sm:%s553]
                %565 = vst [vmem:[%s561 + $0x8] sm:%s553] %v564
              $region123: #{gemma_model_pallas.1} parent=117 // loop_footer
                %s559 = sadd.s32 1, %s555
              $region124: #{gemma_model_pallas.1} parent=117 // loop_footer_branch
                %554 = sbr.rel target = $region120
              $region125: #{gemma_model_pallas.1} parent=117 // loop_exit
                _
            $region118: #{gemma_model_pallas.1} parent=109 // pred_fallthru
              _
          $region110: #{gemma_model_pallas.1} parent=105 // pred_fallthru
            _
          %582 = vnop
        $region106: #{gemma_model_pallas.1} parent=55 // pred_fallthru
          _
      $region56: #{gemma_model_pallas.1} parent=5 // pred_fallthru
        _
      %p583 = scmp.le.s32.totalorder 1, %s35
      %p584 = scmp.lt.s32.totalorder %s35, 3
      %p585 = pnand %p583, %p584
      %p586 = pneg %p585
      // Predicated region
      $region141: #{gemma_model_pallas.1} parent=5 // pred_check
        _
      $region142: #{gemma_model_pallas.1} parent=5 // pred_check_branch
        %588 = sbr.rel (%p585) target = $region144
      $region143: #{gemma_model_pallas.1} parent=5 // pred_region
        %s589 = ssub.s32 %s35, 1
        %s590 = sand.u32 %s310, 1
        %s591 = sand.u32 %s310, 1
        %s592 = smul.addr %s591, 16
        %s593 = scalar_lea.vmem [#allocation4], %s592
        // Predicated region
        $region145: #{gemma_model_pallas.1} parent=143 // pred_check
          %p594 = pneg %p323
        $region146: #{gemma_model_pallas.1} parent=143 // pred_check_branch
          %596 = sbr.rel (%p594) target = $region148
        $region147: #{gemma_model_pallas.1} parent=143 // pred_region
          _
        $region148: #{gemma_model_pallas.1} parent=143 // pred_fallthru
          _
        %s597 = sand.u32 %s336, 1
        %s598 = sand.u32 %s336, 1
        %s599 = smul.addr %s598, 16
        %s600 = scalar_lea.vmem [#allocation5], %s599
        // Predicated region
        $region149: #{gemma_model_pallas.1} parent=143 // pred_check
          %p601 = pneg %p349
        $region150: #{gemma_model_pallas.1} parent=143 // pred_check_branch
          %603 = sbr.rel (%p601) target = $region152
        $region151: #{gemma_model_pallas.1} parent=143 // pred_region
          _
        $region152: #{gemma_model_pallas.1} parent=143 // pred_fallthru
          _
        %p604 = scmp.lt.s32.totalorder %s40, 1
        %s605 = scalar_select %p604, %s40, 1
        %s606 = smul.addr %s605, 8
        %s607 = scalar_lea.vmem %s1, %s606
        %p608 = pneg %p61
        %p609 = pneg %p58
        %p610 = pneg %p82
        %p611 = pneg %p79
        %p612 = pneg %p103
        %p613 = pneg %p100
        %p614 = pneg %p124
        %p615 = pneg %p121
        %p616 = pneg %p145
        %p617 = pneg %p142
        %p618 = pneg %p166
        %p619 = pneg %p163
        %p620 = pneg %p187
        %p621 = pneg %p184
        %p622 = pneg %p208
        %p623 = pneg %p205
        %p624 = pneg %p229
        %p625 = pneg %p226
        %p626 = pneg %p250
        %p627 = pneg %p247
        %p628 = pneg %p271
        %p629 = pneg %p268
        %p630 = scmp.lt.s32.totalorder %s40, 1
        %s631 = scalar_select %p630, %s40, 1
        %s632 = smul.addr %s631, 2
        %s633 = smul.addr %s632, 8
        %s634 = scalar_lea.vmem %s12, %s633
        %p635 = pneg %p297
        %p636 = pneg %p294
        %s637 = sand.u32 %s310, 1
        %s638 = sand.u32 %s310, 1
        %s639 = smul.addr %s638, 16
        %s640 = scalar_lea.vmem [#allocation4], %s639
        %p641 = pneg %p323
        %p642 = pneg %p320
        %s643 = sand.u32 %s336, 1
        %s644 = sand.u32 %s336, 1
        %s645 = smul.addr %s644, 16
        %s646 = scalar_lea.vmem [#allocation5], %s645
        %p647 = pneg %p349
        %p648 = pneg %p346
        %p649 = pneg %p375
        %p650 = pneg %p372
        %s651 = sand.u32 %s362, 1
        %s652 = scalar_lea.sflag [#allocation7], %s651
        %s653 = sand.u32 %s362, 1
        %s654 = smul.addr %s653, 8
        %s655 = scalar_lea.vmem [#allocation6], %s654
        %p656 = pneg %p401
        %p657 = pneg %p398
        %s658 = sand.u32 %s388, 1
        %s659 = sand.u32 %s388, 1
        %s660 = smul.addr %s659, 16
        %s661 = scalar_lea.vmem [#allocation8], %s660
        %p662 = pneg %p427
        %p663 = pneg %p424
        %s664 = sand.u32 %s414, 1
        %s665 = sand.u32 %s414, 1
        %s666 = smul.addr %s665, 16
        %s667 = scalar_lea.vmem [#allocation9], %s666
        %p668 = scmp.lt.s32.totalorder %s40, 1
        %s669 = scalar_select %p668, %s40, 1
        %s670 = smul.addr %s669, 8
        %s671 = scalar_lea.vmem %s1, %s670
        %p672 = scmp.lt.s32.totalorder %s40, 1
        %s673 = scalar_select %p672, %s40, 1
        %s674 = smul.addr %s673, 2
        %s675 = smul.addr %s674, 8
        %s676 = scalar_lea.vmem %s12, %s675
        %v677 = vld [vmem:[%s593] sm:$0xff]
        %v678 = vld [vmem:[%s593 + $0x8] sm:$0xff]
        %vm679 = vcmask 261120
        %680 = vst.msk [vmem:[%s661] sm:$0xff] %vm679, %v677
        %681 = vst.msk [vmem:[%s661 + $0x8] sm:$0xff] %vm679, %v678
        %v682 = vld [vmem:[%s600] sm:$0xff]
        %v683 = vld [vmem:[%s600 + $0x8] sm:$0xff]
        %684 = vst.msk [vmem:[%s667] sm:$0xff] %vm679, %v682
        %685 = vst.msk [vmem:[%s667 + $0x8] sm:$0xff] %vm679, %v683
        %v686 = vld [vmem:[%s671] sm:$0xff]
        %v687 = vld [vmem:[%s10] sm:$0xff]
        %v688 = vld [vmem:[%s11] sm:$0xff]
        %v689 = vld [vmem:[%s676] sm:$0xff]
        %v690 = vld [vmem:[%s676 + $0x8] sm:$0xff]
        %v691 = vlaneseq
        %v692 = vand.u32 %v691, 127
        %vm693 = vcmp.lt.s32.totalorder %v692, 0
        %v694 = vsub.s32 0, %v692
        %v695 = vsel %vm693, %v694, %v692
        %v696 = vshrl.u32 %v695, 4
        %v697 = vand.u32 %v695, 15
        %v698 = vsub.s32 0, %v697
        %v699 = vsel %vm693, %v698, %v697
        %vm700 = vcmp.ne.s32.totalorder %v699, 0
        %vm701 = vcmp.lt.s32.totalorder %v699, 0
        %vm702 = vmand %vm701, %vm700
        %v703 = vadd.s32 %v699, 16
        %v704 = vsel %vm702, %v703, %v699
        %vm705 = vcmp.ge.s32.totalorder %v704, 8
        %v706 = vld [vmem:[%s2] sm:$0x1]
        %v707 = vmul.f32 %v686, %v686
        %v708 = vsel %vm679, %v707, 0.0
        %709 = vadd.xlane.f32.xlu0 %v708
        %v710 = vpop.xlane.xlu0 %709
        %v711 = vrcp.pop 32.0
        %v712 = vmul.f32 32.0, %v711
        %v713 = vsub.f32 1.0, %v712
        %v714 = vmul.f32 %v711, %v713
        %v715 = vadd.f32 %v711, %v714
        %vm716 = vweird.f32 %v711
        %v717 = vsel %vm716, %v711, %v715
        %v718 = vmul.f32 %v710, %v717
        %v719 = vadd.f32 %v718, 1e-06
        %v720 = vrsqrt.pop %v719
        %v721 = vmul.f32 %v720, %v719
        %v722 = vmul.f32 %v721, %v720
        %v723 = vmul.f32 0.5, %v722
        %v724 = vsub.f32 1.5, %v723
        %v725 = vmul.f32 %v720, %v724
        %vm726 = vweird.f32 %v719
        %vm727 = vweird.f32 %v720
        %vm728 = vmor %vm726, %vm727
        %v729 = vsel %vm728, %v720, %v725
        %v730 = vmul.f32 %v686, %v729
        %v731 = vadd.f32 %v706, 1.0
        %v733 = vperm.slane %v731, 0
        %v735 = vmul.f32 %v730, %v733
        %v736 = vld [vmem:[%s3] sm:$0xff]
        %v737 = vld [vmem:[%s3 + $0x8] sm:$0xff]
        %v738 = vld [vmem:[%s3 + $0x10] sm:$0xff]
        %v739 = vld [vmem:[%s3 + $0x18] sm:$0xff]
        %v741 = vsel %vm679, %v735, 0
        %743 = vmatpush.msra.mxu0 0.0
        %744 = vmatpush.msra.mxu0 0.0
        %745 = vmatpush.msra.mxu0 0.0
        %746 = vmatpush.msra.mxu0 0.0
        %747 = vmatpush.msra.mxu0 0.0
        %748 = vmatpush.msra.mxu0 0.0
        %749 = vmatpush.msra.mxu0 0.0
        %750 = vmatpush.msra.mxu0 0.0
        %751 = vmatpush.msra.mxu0 0.0
        %752 = vmatpush.msra.mxu0 0.0
        %753 = vmatpush.msra.mxu0 0.0
        %754 = vmatpush.msra.mxu0 0.0
        %755 = vmatpush.msra.mxu0 %v739
        %756 = vmatpush.msra.mxu0 %v738
        %757 = vmatpush.msra.mxu0 %v737
        %758 = vmatpush.msra.mxu0 %v736
        %759 = vmatmul.f32.gmra.mxu0 %v741
        %v760 = vpop.f32.mrf.mxu0
        %v761 = vadd.f32 0.0, %v760
        %762 = vdwg.mxu0
        %763 = vrot.lane.b32.xlu0 %v761, 8
        %v764 = vpop.permute.xlu0 %763
        %765 = vrot.lane.b32.xlu0 %v761, 120
        %v766 = vpop.permute.xlu0 %765
        %v767 = vsel %vm705, 1, 0
        %vm768 = vcmp.eq.s32.totalorder %v767, 1
        %v769 = vsel %vm768, %v764, %v766
        %v770 = vmul.f32 %v761, %v687
        %v771 = vmul.f32 %v769, %v688
        %v772 = vadd.f32 %v770, %v771
        %s773 = sld [smem:[#allocation3]]
        %775 = vrot.lane.b32.xlu0 %v772, 64
        %v776 = vpop.permute.xlu0 %775
        %s778 = scalar_lea.vmem %s661, %s773 [#allocation8]
        %vm779 = vcmask 253952
        %780 = vst.msk [vmem:[%s778] sm:$0x1] %vm779, %v776
        %781 = vrot.lane.b32.xlu0 %v772, 32
        %v782 = vpop.permute.xlu0 %781
        %s784 = scalar_lea.vmem %s667, %s773 [#allocation9]
        %785 = vst.msk [vmem:[%s784] sm:$0x1] %vm779, %v782
        %s786 = sld [smem:[#allocation3 + $0x1]]
        %s787 = scalar_lea.vmem %s661, %s786 [#allocation8]
        %vm788 = vcmask 254977
        %789 = vst.msk [vmem:[%s787 - $0x1] sm:$0x2] %vm788, %v776
        %s790 = scalar_lea.vmem %s667, %s786 [#allocation9]
        %791 = vst.msk [vmem:[%s790 - $0x1] sm:$0x2] %vm788, %v782
        %s792 = sld [smem:[#allocation3 + $0x2]]
        %s793 = scalar_lea.vmem %s661, %s792 [#allocation8]
        %vm794 = vcmask 256002
        %795 = vst.msk [vmem:[%s793 - $0x2] sm:$0x4] %vm794, %v776
        %s796 = scalar_lea.vmem %s667, %s792 [#allocation9]
        %797 = vst.msk [vmem:[%s796 - $0x2] sm:$0x4] %vm794, %v782
        %s798 = sld [smem:[#allocation3 + $0x3]]
        %s799 = scalar_lea.vmem %s661, %s798 [#allocation8]
        %vm800 = vcmask 257027
        %801 = vst.msk [vmem:[%s799 - $0x3] sm:$0x8] %vm800, %v776
        %s802 = scalar_lea.vmem %s667, %s798 [#allocation9]
        %803 = vst.msk [vmem:[%s802 - $0x3] sm:$0x8] %vm800, %v782
        %s804 = sld [smem:[#allocation3 + $0x4]]
        %s805 = scalar_lea.vmem %s661, %s804 [#allocation8]
        %vm806 = vcmask 258052
        %807 = vst.msk [vmem:[%s805 - $0x4] sm:$0x10] %vm806, %v776
        %s808 = scalar_lea.vmem %s667, %s804 [#allocation9]
        %809 = vst.msk [vmem:[%s808 - $0x4] sm:$0x10] %vm806, %v782
        %s810 = sld [smem:[#allocation3 + $0x5]]
        %s811 = scalar_lea.vmem %s661, %s810 [#allocation8]
        %vm812 = vcmask 259077
        %813 = vst.msk [vmem:[%s811 - $0x5] sm:$0x20] %vm812, %v776
        %s814 = scalar_lea.vmem %s667, %s810 [#allocation9]
        %815 = vst.msk [vmem:[%s814 - $0x5] sm:$0x20] %vm812, %v782
        %s816 = sld [smem:[#allocation3 + $0x6]]
        %s817 = scalar_lea.vmem %s661, %s816 [#allocation8]
        %vm818 = vcmask 260102
        %819 = vst.msk [vmem:[%s817 - $0x6] sm:$0x40] %vm818, %v776
        %s820 = scalar_lea.vmem %s667, %s816 [#allocation9]
        %821 = vst.msk [vmem:[%s820 - $0x6] sm:$0x40] %vm818, %v782
        %s822 = sld [smem:[#allocation3 + $0x7]]
        %s823 = scalar_lea.vmem %s661, %s822 [#allocation8]
        %vm824 = vcmask 261127
        %825 = vst.msk [vmem:[%s823 - $0x7] sm:$0x80] %vm824, %v776
        %s826 = scalar_lea.vmem %s667, %s822 [#allocation9]
        %827 = vst.msk [vmem:[%s826 - $0x7] sm:$0x80] %vm824, %v782
        %v828 = vld [vmem:[%s661] sm:$0xff]
        %v829 = vld [vmem:[%s667] sm:$0xff]
        %830 = vrot.lane.b32.xlu0 %v772, 112
        %v831 = vpop.permute.xlu0 %830
        %vm832 = vcmask 130048
        %v833 = vsel %vm832, %v772, 0
        %v835 = vsel %vm832, %v831, 0
        %v838 = vsel %vm832, %v828, 0
        %840 = vmatpush.xpose.msra.mxu0 0.0
        %841 = vmatpush.xpose.msra.mxu0 0.0
        %842 = vmatpush.xpose.msra.mxu0 0.0
        %843 = vmatpush.xpose.msra.mxu0 0.0
        %844 = vmatpush.xpose.msra.mxu0 0.0
        %845 = vmatpush.xpose.msra.mxu0 0.0
        %846 = vmatpush.xpose.msra.mxu0 0.0
        %847 = vmatpush.xpose.msra.mxu0 0.0
        %848 = vmatpush.xpose.msra.mxu0 0.0
        %849 = vmatpush.xpose.msra.mxu0 0.0
        %850 = vmatpush.xpose.msra.mxu0 0.0
        %851 = vmatpush.xpose.msra.mxu0 0.0
        %852 = vmatpush.xpose.msra.mxu0 0.0
        %853 = vmatpush.xpose.msra.mxu0 0.0
        %854 = vmatpush.xpose.msra.mxu0 0.0
        %855 = vmatpush.xpose.msra.mxu0 %v838
        %856 = vmatmul.f32.gmra.mxu0 %v833
        %v857 = vpop.f32.mrf.mxu0
        %v858 = vadd.f32 %v689, %v857
        %859 = vmatmul.f32.gmra.mxu0 %v835
        %v860 = vpop.f32.mrf.mxu0
        %v861 = vadd.f32 %v690, %v860
        %862 = vdwg.mxu0
        %vm863 = vcmask 64512
        %v864 = vsel %vm863, %v858, -inf
        %865 = vmax.xlane.f32.xlu0 %v864
        %v866 = vpop.xlane.xlu0 %865
        %v867 = vsel %vm863, %v861, -inf
        %868 = vmax.xlane.f32.xlu0 %v867
        %v869 = vpop.xlane.xlu0 %868
        %v870 = vsub.f32 %v858, %v866
        %v871 = vsub.f32 %v861, %v869
        %v872 = vmul.f32 %v870, 1.442695
        %v873 = vpow.pop %v872
        %v874 = vmul.f32 %v871, 1.442695
        %v875 = vpow.pop %v874
        %v876 = vsel %vm863, %v873, 0.0
        %877 = vadd.xlane.f32.xlu0 %v876
        %v878 = vpop.xlane.xlu0 %877
        %v879 = vsel %vm863, %v875, 0.0
        %880 = vadd.xlane.f32.xlu0 %v879
        %v881 = vpop.xlane.xlu0 %880
        %v883 = vsel %vm863, %v873, 0
        %v886 = vsel %vm863, %v875, 0
        %888 = vmatpush.msra.mxu0 0.0
        %889 = vmatpush.msra.mxu0 0.0
        %890 = vmatpush.msra.mxu0 0.0
        %891 = vmatpush.msra.mxu0 0.0
        %892 = vmatpush.msra.mxu0 0.0
        %893 = vmatpush.msra.mxu0 0.0
        %894 = vmatpush.msra.mxu0 0.0
        %895 = vmatpush.msra.mxu0 0.0
        %896 = vmatpush.msra.mxu0 0.0
        %897 = vmatpush.msra.mxu0 0.0
        %898 = vmatpush.msra.mxu0 0.0
        %899 = vmatpush.msra.mxu0 0.0
        %900 = vmatpush.msra.mxu0 0.0
        %901 = vmatpush.msra.mxu0 0.0
        %902 = vmatpush.msra.mxu0 0.0
        %903 = vmatpush.msra.mxu0 %v829
        %904 = vmatmul.f32.gmra.mxu0 %v883
        %v905 = vpop.f32.mrf.mxu0
        %v906 = vadd.f32 0.0, %v905
        %907 = vmatmul.f32.gmra.mxu0 %v886
        %v908 = vpop.f32.mrf.mxu0
        %v909 = vadd.f32 0.0, %v908
        %910 = vdwg.mxu0
        %v911 = vrcp.pop %v878
        %v912 = vrcp.pop %v881
        %v913 = vmul.f32 %v906, %v911
        %v914 = vmul.f32 %v909, %v912
        %916 = vrot.lane.b32.xlu0 %v914, 16
        %v917 = vpop.permute.xlu0 %916
        %v919 = vsel %vm832, %v913, %v917
        %920 = vrot.lane.b32.xlu0 %v772, 96
        %v921 = vpop.permute.xlu0 %920
        %922 = vrot.lane.b32.xlu0 %v831, 96
        %v923 = vpop.permute.xlu0 %922
        %924 = vrot.lane.b32.xlu0 %v828, 112
        %v925 = vpop.permute.xlu0 %924
        %v926 = vsel %vm832, %v921, 0
        %v928 = vsel %vm832, %v923, 0
        %v930 = vsel %vm832, %v925, 0
        %932 = vmatpush.xpose.msra.mxu0 0.0
        %933 = vmatpush.xpose.msra.mxu0 0.0
        %934 = vmatpush.xpose.msra.mxu0 0.0
        %935 = vmatpush.xpose.msra.mxu0 0.0
        %936 = vmatpush.xpose.msra.mxu0 0.0
        %937 = vmatpush.xpose.msra.mxu0 0.0
        %938 = vmatpush.xpose.msra.mxu0 0.0
        %939 = vmatpush.xpose.msra.mxu0 0.0
        %940 = vmatpush.xpose.msra.mxu0 0.0
        %941 = vmatpush.xpose.msra.mxu0 0.0
        %942 = vmatpush.xpose.msra.mxu0 0.0
        %943 = vmatpush.xpose.msra.mxu0 0.0
        %944 = vmatpush.xpose.msra.mxu0 0.0
        %945 = vmatpush.xpose.msra.mxu0 0.0
        %946 = vmatpush.xpose.msra.mxu0 0.0
        %947 = vmatpush.xpose.msra.mxu0 %v930
        %948 = vmatmul.f32.gmra.mxu0 %v926
        %v949 = vpop.f32.mrf.mxu0
        %v950 = vadd.f32 %v689, %v949
        %951 = vmatmul.f32.gmra.mxu0 %v928
        %v952 = vpop.f32.mrf.mxu0
        %v953 = vadd.f32 %v690, %v952
        %954 = vdwg.mxu0
        %v955 = vsel %vm863, %v950, -inf
        %956 = vmax.xlane.f32.xlu0 %v955
        %v957 = vpop.xlane.xlu0 %956
        %v958 = vsel %vm863, %v953, -inf
        %959 = vmax.xlane.f32.xlu0 %v958
        %v960 = vpop.xlane.xlu0 %959
        %v961 = vsub.f32 %v950, %v957
        %v962 = vsub.f32 %v953, %v960
        %v963 = vmul.f32 %v961, 1.442695
        %v964 = vpow.pop %v963
        %v965 = vmul.f32 %v962, 1.442695
        %v966 = vpow.pop %v965
        %v967 = vsel %vm863, %v964, 0.0
        %968 = vadd.xlane.f32.xlu0 %v967
        %v969 = vpop.xlane.xlu0 %968
        %v970 = vsel %vm863, %v966, 0.0
        %971 = vadd.xlane.f32.xlu0 %v970
        %v972 = vpop.xlane.xlu0 %971
        %974 = vrot.lane.b32.xlu0 %v829, 112
        %v975 = vpop.permute.xlu0 %974
        %v978 = vsel %vm863, %v964, 0
        %v981 = vsel %vm863, %v966, 0
        %983 = vmatpush.msra.mxu0 0.0
        %984 = vmatpush.msra.mxu0 0.0
        %985 = vmatpush.msra.mxu0 0.0
        %986 = vmatpush.msra.mxu0 0.0
        %987 = vmatpush.msra.mxu0 0.0
        %988 = vmatpush.msra.mxu0 0.0
        %989 = vmatpush.msra.mxu0 0.0
        %990 = vmatpush.msra.mxu0 0.0
        %991 = vmatpush.msra.mxu0 0.0
        %992 = vmatpush.msra.mxu0 0.0
        %993 = vmatpush.msra.mxu0 0.0
        %994 = vmatpush.msra.mxu0 0.0
        %995 = vmatpush.msra.mxu0 0.0
        %996 = vmatpush.msra.mxu0 0.0
        %997 = vmatpush.msra.mxu0 0.0
        %998 = vmatpush.msra.mxu0 %v975
        %999 = vmatmul.f32.gmra.mxu0 %v978
        %v1000 = vpop.f32.mrf.mxu0
        %v1001 = vadd.f32 0.0, %v1000
        %1002 = vmatmul.f32.gmra.mxu0 %v981
        %v1003 = vpop.f32.mrf.mxu0
        %v1004 = vadd.f32 0.0, %v1003
        %1005 = vdwg.mxu0
        %v1006 = vrcp.pop %v969
        %v1007 = vrcp.pop %v972
        %v1008 = vmul.f32 %v1001, %v1006
        %v1009 = vmul.f32 %v1004, %v1007
        %1011 = vrot.lane.b32.xlu0 %v1009, 16
        %v1012 = vpop.permute.xlu0 %1011
        %v1014 = vsel %vm832, %v1008, %v1012
        %1016 = vrot.lane.b32.xlu0 %v1014, 32
        %v1017 = vpop.permute.xlu0 %1016
        %v1019 = vsel %vm679, %v919, %v1017
        %v1020 = vld [vmem:[%s4] sm:$0xff]
        %v1021 = vld [vmem:[%s4 + $0x8] sm:$0xff]
        %v1022 = vld [vmem:[%s4 + $0x10] sm:$0xff]
        %v1023 = vld [vmem:[%s4 + $0x18] sm:$0xff]
        %v1024 = vld [vmem:[%s4 + $0x20] sm:$0xff]
        %v1025 = vld [vmem:[%s4 + $0x28] sm:$0xff]
        %v1026 = vld [vmem:[%s4 + $0x30] sm:$0xff]
        %v1027 = vld [vmem:[%s4 + $0x38] sm:$0xff]
        %vm1028 = vcmask 523264
        %v1030 = vsel %vm1028, %v1019, 0
        %1032 = vmatpush.msra.mxu0 0.0
        %1033 = vmatpush.msra.mxu0 0.0
        %1034 = vmatpush.msra.mxu0 0.0
        %1035 = vmatpush.msra.mxu0 0.0
        %1036 = vmatpush.msra.mxu0 0.0
        %1037 = vmatpush.msra.mxu0 0.0
        %1038 = vmatpush.msra.mxu0 0.0
        %1039 = vmatpush.msra.mxu0 0.0
        %1040 = vmatpush.msra.mxu0 %v1027
        %1041 = vmatpush.msra.mxu0 %v1026
        %1042 = vmatpush.msra.mxu0 %v1025
        %1043 = vmatpush.msra.mxu0 %v1024
        %1044 = vmatpush.msra.mxu0 %v1023
        %1045 = vmatpush.msra.mxu0 %v1022
        %1046 = vmatpush.msra.mxu0 %v1021
        %1047 = vmatpush.msra.mxu0 %v1020
        %1048 = vmatmul.f32.gmra.mxu0 %v1030
        %v1049 = vpop.f32.mrf.mxu0
        %v1050 = vadd.f32 0.0, %v1049
        %1051 = vdwg.mxu0
        %v1052 = vadd.f32 %v686, %v1050
        %v1053 = vld [vmem:[%s5] sm:$0x1]
        %v1054 = vmul.f32 %v1052, %v1052
        %v1055 = vsel %vm679, %v1054, 0.0
        %1056 = vadd.xlane.f32.xlu0 %v1055
        %v1057 = vpop.xlane.xlu0 %1056
        %v1058 = vmul.f32 %v1057, %v717
        %v1059 = vadd.f32 %v1058, 1e-06
        %v1060 = vrsqrt.pop %v1059
        %v1061 = vmul.f32 %v1060, %v1059
        %v1062 = vmul.f32 %v1061, %v1060
        %v1063 = vmul.f32 0.5, %v1062
        %v1064 = vsub.f32 1.5, %v1063
        %v1065 = vmul.f32 %v1060, %v1064
        %vm1066 = vweird.f32 %v1059
        %vm1067 = vweird.f32 %v1060
        %vm1068 = vmor %vm1066, %vm1067
        %v1069 = vsel %vm1068, %v1060, %v1065
        %v1070 = vmul.f32 %v1052, %v1069
        %v1071 = vadd.f32 %v1053, 1.0
        %v1073 = vperm.slane %v1071, 0
        %v1075 = vmul.f32 %v1070, %v1073
        %v1076 = vld [vmem:[%s6] sm:$0xff]
        %v1077 = vld [vmem:[%s6 + $0x8] sm:$0xff]
        %v1078 = vld [vmem:[%s6 + $0x10] sm:$0xff]
        %v1079 = vld [vmem:[%s6 + $0x18] sm:$0xff]
        %v1081 = vsel %vm679, %v1075, 0
        %1083 = vmatpush.msra.mxu0 0.0
        %1084 = vmatpush.msra.mxu0 0.0
        %1085 = vmatpush.msra.mxu0 0.0
        %1086 = vmatpush.msra.mxu0 0.0
        %1087 = vmatpush.msra.mxu0 0.0
        %1088 = vmatpush.msra.mxu0 0.0
        %1089 = vmatpush.msra.mxu0 0.0
        %1090 = vmatpush.msra.mxu0 0.0
        %1091 = vmatpush.msra.mxu0 0.0
        %1092 = vmatpush.msra.mxu0 0.0
        %1093 = vmatpush.msra.mxu0 0.0
        %1094 = vmatpush.msra.mxu0 0.0
        %1095 = vmatpush.msra.mxu0 %v1079
        %1096 = vmatpush.msra.mxu0 %v1078
        %1097 = vmatpush.msra.mxu0 %v1077
        %1098 = vmatpush.msra.mxu0 %v1076
        %1099 = vmatmul.f32.gmra.mxu0 %v1081
        %v1100 = vpop.f32.mrf.mxu0
        %v1101 = vadd.f32 0.0, %v1100
        %1102 = vdwg.mxu0
        %v1103 = vmul.f32 %v1101, 0.5
        %v1104 = vmul.f32 %v1101, 0.044715
        %v1105 = vmul.f32 %v1104, %v1101
        %v1106 = vmul.f32 %v1105, %v1101
        %v1107 = vadd.f32 %v1101, %v1106
        %v1108 = vmul.f32 %v1107, 0.7978846
        %v1109 = vtanh.pop %v1108
        %v1110 = vadd.f32 %v1109, 1.0
        %v1111 = vmul.f32 %v1103, %v1110
        %v1112 = vld [vmem:[%s7] sm:$0xff]
        %v1113 = vld [vmem:[%s7 + $0x8] sm:$0xff]
        %v1114 = vld [vmem:[%s7 + $0x10] sm:$0xff]
        %v1115 = vld [vmem:[%s7 + $0x18] sm:$0xff]
        %1116 = vmatpush.msra.mxu0 0.0
        %1117 = vmatpush.msra.mxu0 0.0
        %1118 = vmatpush.msra.mxu0 0.0
        %1119 = vmatpush.msra.mxu0 0.0
        %1120 = vmatpush.msra.mxu0 0.0
        %1121 = vmatpush.msra.mxu0 0.0
        %1122 = vmatpush.msra.mxu0 0.0
        %1123 = vmatpush.msra.mxu0 0.0
        %1124 = vmatpush.msra.mxu0 0.0
        %1125 = vmatpush.msra.mxu0 0.0
        %1126 = vmatpush.msra.mxu0 0.0
        %1127 = vmatpush.msra.mxu0 0.0
        %1128 = vmatpush.msra.mxu0 %v1115
        %1129 = vmatpush.msra.mxu0 %v1114
        %1130 = vmatpush.msra.mxu0 %v1113
        %1131 = vmatpush.msra.mxu0 %v1112
        %1132 = vmatmul.f32.gmra.mxu0 %v1081
        %v1133 = vpop.f32.mrf.mxu0
        %v1134 = vadd.f32 0.0, %v1133
        %1135 = vdwg.mxu0
        %v1136 = vmul.f32 %v1111, %v1134
        %v1137 = vld [vmem:[%s8] sm:$0xff]
        %v1138 = vld [vmem:[%s8 + $0x8] sm:$0xff]
        %v1139 = vld [vmem:[%s8 + $0x10] sm:$0xff]
        %v1140 = vld [vmem:[%s8 + $0x18] sm:$0xff]
        %v1141 = vld [vmem:[%s8 + $0x20] sm:$0xff]
        %v1142 = vld [vmem:[%s8 + $0x28] sm:$0xff]
        %v1143 = vld [vmem:[%s8 + $0x30] sm:$0xff]
        %v1144 = vld [vmem:[%s8 + $0x38] sm:$0xff]
        %v1146 = vsel %vm1028, %v1136, 0
        %1148 = vmatpush.msra.mxu0 0.0
        %1149 = vmatpush.msra.mxu0 0.0
        %1150 = vmatpush.msra.mxu0 0.0
        %1151 = vmatpush.msra.mxu0 0.0
        %1152 = vmatpush.msra.mxu0 0.0
        %1153 = vmatpush.msra.mxu0 0.0
        %1154 = vmatpush.msra.mxu0 0.0
        %1155 = vmatpush.msra.mxu0 0.0
        %1156 = vmatpush.msra.mxu0 %v1144
        %1157 = vmatpush.msra.mxu0 %v1143
        %1158 = vmatpush.msra.mxu0 %v1142
        %1159 = vmatpush.msra.mxu0 %v1141
        %1160 = vmatpush.msra.mxu0 %v1140
        %1161 = vmatpush.msra.mxu0 %v1139
        %1162 = vmatpush.msra.mxu0 %v1138
        %1163 = vmatpush.msra.mxu0 %v1137
        %1164 = vmatmul.f32.gmra.mxu0 %v1146
        %v1165 = vpop.f32.mrf.mxu0
        %v1166 = vadd.f32 0.0, %v1165
        %1167 = vdwg.mxu0
        %v1168 = vadd.f32 %v1052, %v1166
        %s1169 = scalar_lea.vmem %s2, 1
        %v1170 = vld [vmem:[%s1169] sm:$0x1]
        %v1171 = vmul.f32 %v1168, %v1168
        %v1172 = vsel %vm679, %v1171, 0.0
        %1173 = vadd.xlane.f32.xlu0 %v1172
        %v1174 = vpop.xlane.xlu0 %1173
        %v1175 = vmul.f32 %v1174, %v717
        %v1176 = vadd.f32 %v1175, 1e-06
        %v1177 = vrsqrt.pop %v1176
        %v1178 = vmul.f32 %v1177, %v1176
        %v1179 = vmul.f32 %v1178, %v1177
        %v1180 = vmul.f32 0.5, %v1179
        %v1181 = vsub.f32 1.5, %v1180
        %v1182 = vmul.f32 %v1177, %v1181
        %vm1183 = vweird.f32 %v1176
        %vm1184 = vweird.f32 %v1177
        %vm1185 = vmor %vm1183, %vm1184
        %v1186 = vsel %vm1185, %v1177, %v1182
        %v1187 = vmul.f32 %v1168, %v1186
        %v1188 = vadd.f32 %v1170, 1.0
        %v1190 = vperm.slane %v1188, 0
        %v1192 = vmul.f32 %v1187, %v1190
        %s1193 = scalar_lea.vmem %s3, 32
        %v1194 = vld [vmem:[%s1193] sm:$0xff]
        %v1195 = vld [vmem:[%s1193 + $0x8] sm:$0xff]
        %v1196 = vld [vmem:[%s1193 + $0x10] sm:$0xff]
        %v1197 = vld [vmem:[%s1193 + $0x18] sm:$0xff]
        %v1199 = vsel %vm679, %v1192, 0
        %1201 = vmatpush.msra.mxu0 0.0
        %1202 = vmatpush.msra.mxu0 0.0
        %1203 = vmatpush.msra.mxu0 0.0
        %1204 = vmatpush.msra.mxu0 0.0
        %1205 = vmatpush.msra.mxu0 0.0
        %1206 = vmatpush.msra.mxu0 0.0
        %1207 = vmatpush.msra.mxu0 0.0
        %1208 = vmatpush.msra.mxu0 0.0
        %1209 = vmatpush.msra.mxu0 0.0
        %1210 = vmatpush.msra.mxu0 0.0
        %1211 = vmatpush.msra.mxu0 0.0
        %1212 = vmatpush.msra.mxu0 0.0
        %1213 = vmatpush.msra.mxu0 %v1197
        %1214 = vmatpush.msra.mxu0 %v1196
        %1215 = vmatpush.msra.mxu0 %v1195
        %1216 = vmatpush.msra.mxu0 %v1194
        %1217 = vmatmul.f32.gmra.mxu0 %v1199
        %v1218 = vpop.f32.mrf.mxu0
        %v1219 = vadd.f32 0.0, %v1218
        %1220 = vdwg.mxu0
        %1221 = vrot.lane.b32.xlu0 %v1219, 8
        %v1222 = vpop.permute.xlu0 %1221
        %1223 = vrot.lane.b32.xlu0 %v1219, 120
        %v1224 = vpop.permute.xlu0 %1223
        %v1225 = vsel %vm768, %v1222, %v1224
        %v1226 = vmul.f32 %v1219, %v687
        %v1227 = vmul.f32 %v1225, %v688
        %v1228 = vadd.f32 %v1226, %v1227
        %s1229 = sld [smem:[#allocation3]]
        %1231 = vrot.lane.b32.xlu0 %v1228, 64
        %v1232 = vpop.permute.xlu0 %1231
        %s1234 = sadd.s32 %s1229, 8
        %s1235 = scalar_lea.vmem %s661, %s1234 [#allocation8]
        %1236 = vst.msk [vmem:[%s1235] sm:$0x1] %vm779, %v1232
        %1237 = vrot.lane.b32.xlu0 %v1228, 32
        %v1238 = vpop.permute.xlu0 %1237
        %s1240 = scalar_lea.vmem %s667, %s1234 [#allocation9]
        %1241 = vst.msk [vmem:[%s1240] sm:$0x1] %vm779, %v1238
        %s1242 = sld [smem:[#allocation3 + $0x1]]
        %s1243 = sadd.s32 %s1242, 8
        %s1244 = scalar_lea.vmem %s661, %s1243 [#allocation8]
        %1245 = vst.msk [vmem:[%s1244 - $0x1] sm:$0x2] %vm788, %v1232
        %s1246 = scalar_lea.vmem %s667, %s1243 [#allocation9]
        %1247 = vst.msk [vmem:[%s1246 - $0x1] sm:$0x2] %vm788, %v1238
        %s1248 = sld [smem:[#allocation3 + $0x2]]
        %s1249 = sadd.s32 %s1248, 8
        %s1250 = scalar_lea.vmem %s661, %s1249 [#allocation8]
        %1251 = vst.msk [vmem:[%s1250 - $0x2] sm:$0x4] %vm794, %v1232
        %s1252 = scalar_lea.vmem %s667, %s1249 [#allocation9]
        %1253 = vst.msk [vmem:[%s1252 - $0x2] sm:$0x4] %vm794, %v1238
        %s1254 = sld [smem:[#allocation3 + $0x3]]
        %s1255 = sadd.s32 %s1254, 8
        %s1256 = scalar_lea.vmem %s661, %s1255 [#allocation8]
        %1257 = vst.msk [vmem:[%s1256 - $0x3] sm:$0x8] %vm800, %v1232
        %s1258 = scalar_lea.vmem %s667, %s1255 [#allocation9]
        %1259 = vst.msk [vmem:[%s1258 - $0x3] sm:$0x8] %vm800, %v1238
        %s1260 = sld [smem:[#allocation3 + $0x4]]
        %s1261 = sadd.s32 %s1260, 8
        %s1262 = scalar_lea.vmem %s661, %s1261 [#allocation8]
        %1263 = vst.msk [vmem:[%s1262 - $0x4] sm:$0x10] %vm806, %v1232
        %s1264 = scalar_lea.vmem %s667, %s1261 [#allocation9]
        %1265 = vst.msk [vmem:[%s1264 - $0x4] sm:$0x10] %vm806, %v1238
        %s1266 = sld [smem:[#allocation3 + $0x5]]
        %s1267 = sadd.s32 %s1266, 8
        %s1268 = scalar_lea.vmem %s661, %s1267 [#allocation8]
        %1269 = vst.msk [vmem:[%s1268 - $0x5] sm:$0x20] %vm812, %v1232
        %s1270 = scalar_lea.vmem %s667, %s1267 [#allocation9]
        %1271 = vst.msk [vmem:[%s1270 - $0x5] sm:$0x20] %vm812, %v1238
        %s1272 = sld [smem:[#allocation3 + $0x6]]
        %s1273 = sadd.s32 %s1272, 8
        %s1274 = scalar_lea.vmem %s661, %s1273 [#allocation8]
        %1275 = vst.msk [vmem:[%s1274 - $0x6] sm:$0x40] %vm818, %v1232
        %s1276 = scalar_lea.vmem %s667, %s1273 [#allocation9]
        %1277 = vst.msk [vmem:[%s1276 - $0x6] sm:$0x40] %vm818, %v1238
        %s1278 = sld [smem:[#allocation3 + $0x7]]
        %s1279 = sadd.s32 %s1278, 8
        %s1280 = scalar_lea.vmem %s661, %s1279 [#allocation8]
        %1281 = vst.msk [vmem:[%s1280 - $0x7] sm:$0x80] %vm824, %v1232
        %s1282 = scalar_lea.vmem %s667, %s1279 [#allocation9]
        %1283 = vst.msk [vmem:[%s1282 - $0x7] sm:$0x80] %vm824, %v1238
        %s1284 = scalar_lea.vmem %s661, 8 [#allocation8]
        %v1285 = vld [vmem:[%s1284] sm:$0xff]
        %s1286 = scalar_lea.vmem %s667, 8 [#allocation9]
        %v1287 = vld [vmem:[%s1286] sm:$0xff]
        %1288 = vrot.lane.b32.xlu0 %v1228, 112
        %v1289 = vpop.permute.xlu0 %1288
        %v1290 = vsel %vm832, %v1228, 0
        %v1292 = vsel %vm832, %v1289, 0
        %v1295 = vsel %vm832, %v1285, 0
        %1297 = vmatpush.xpose.msra.mxu0 0.0
        %1298 = vmatpush.xpose.msra.mxu0 0.0
        %1299 = vmatpush.xpose.msra.mxu0 0.0
        %1300 = vmatpush.xpose.msra.mxu0 0.0
        %1301 = vmatpush.xpose.msra.mxu0 0.0
        %1302 = vmatpush.xpose.msra.mxu0 0.0
        %1303 = vmatpush.xpose.msra.mxu0 0.0
        %1304 = vmatpush.xpose.msra.mxu0 0.0
        %1305 = vmatpush.xpose.msra.mxu0 0.0
        %1306 = vmatpush.xpose.msra.mxu0 0.0
        %1307 = vmatpush.xpose.msra.mxu0 0.0
        %1308 = vmatpush.xpose.msra.mxu0 0.0
        %1309 = vmatpush.xpose.msra.mxu0 0.0
        %1310 = vmatpush.xpose.msra.mxu0 0.0
        %1311 = vmatpush.xpose.msra.mxu0 0.0
        %1312 = vmatpush.xpose.msra.mxu0 %v1295
        %1313 = vmatmul.f32.gmra.mxu0 %v1290
        %v1314 = vpop.f32.mrf.mxu0
        %v1315 = vadd.f32 %v689, %v1314
        %1316 = vmatmul.f32.gmra.mxu0 %v1292
        %v1317 = vpop.f32.mrf.mxu0
        %v1318 = vadd.f32 %v690, %v1317
        %1319 = vdwg.mxu0
        %v1320 = vsel %vm863, %v1315, -inf
        %1321 = vmax.xlane.f32.xlu0 %v1320
        %v1322 = vpop.xlane.xlu0 %1321
        %v1323 = vsel %vm863, %v1318, -inf
        %1324 = vmax.xlane.f32.xlu0 %v1323
        %v1325 = vpop.xlane.xlu0 %1324
        %v1326 = vsub.f32 %v1315, %v1322
        %v1327 = vsub.f32 %v1318, %v1325
        %v1328 = vmul.f32 %v1326, 1.442695
        %v1329 = vpow.pop %v1328
        %v1330 = vmul.f32 %v1327, 1.442695
        %v1331 = vpow.pop %v1330
        %v1332 = vsel %vm863, %v1329, 0.0
        %1333 = vadd.xlane.f32.xlu0 %v1332
        %v1334 = vpop.xlane.xlu0 %1333
        %v1335 = vsel %vm863, %v1331, 0.0
        %1336 = vadd.xlane.f32.xlu0 %v1335
        %v1337 = vpop.xlane.xlu0 %1336
        %v1339 = vsel %vm863, %v1329, 0
        %v1342 = vsel %vm863, %v1331, 0
        %1344 = vmatpush.msra.mxu0 0.0
        %1345 = vmatpush.msra.mxu0 0.0
        %1346 = vmatpush.msra.mxu0 0.0
        %1347 = vmatpush.msra.mxu0 0.0
        %1348 = vmatpush.msra.mxu0 0.0
        %1349 = vmatpush.msra.mxu0 0.0
        %1350 = vmatpush.msra.mxu0 0.0
        %1351 = vmatpush.msra.mxu0 0.0
        %1352 = vmatpush.msra.mxu0 0.0
        %1353 = vmatpush.msra.mxu0 0.0
        %1354 = vmatpush.msra.mxu0 0.0
        %1355 = vmatpush.msra.mxu0 0.0
        %1356 = vmatpush.msra.mxu0 0.0
        %1357 = vmatpush.msra.mxu0 0.0
        %1358 = vmatpush.msra.mxu0 0.0
        %1359 = vmatpush.msra.mxu0 %v1287
        %1360 = vmatmul.f32.gmra.mxu0 %v1339
        %v1361 = vpop.f32.mrf.mxu0
        %v1362 = vadd.f32 0.0, %v1361
        %1363 = vmatmul.f32.gmra.mxu0 %v1342
        %v1364 = vpop.f32.mrf.mxu0
        %v1365 = vadd.f32 0.0, %v1364
        %1366 = vdwg.mxu0
        %v1367 = vrcp.pop %v1334
        %v1368 = vrcp.pop %v1337
        %v1369 = vmul.f32 %v1362, %v1367
        %v1370 = vmul.f32 %v1365, %v1368
        %1372 = vrot.lane.b32.xlu0 %v1370, 16
        %v1373 = vpop.permute.xlu0 %1372
        %v1375 = vsel %vm832, %v1369, %v1373
        %1376 = vrot.lane.b32.xlu0 %v1228, 96
        %v1377 = vpop.permute.xlu0 %1376
        %1378 = vrot.lane.b32.xlu0 %v1289, 96
        %v1379 = vpop.permute.xlu0 %1378
        %1380 = vrot.lane.b32.xlu0 %v1285, 112
        %v1381 = vpop.permute.xlu0 %1380
        %v1382 = vsel %vm832, %v1377, 0
        %v1384 = vsel %vm832, %v1379, 0
        %v1386 = vsel %vm832, %v1381, 0
        %1388 = vmatpush.xpose.msra.mxu0 0.0
        %1389 = vmatpush.xpose.msra.mxu0 0.0
        %1390 = vmatpush.xpose.msra.mxu0 0.0
        %1391 = vmatpush.xpose.msra.mxu0 0.0
        %1392 = vmatpush.xpose.msra.mxu0 0.0
        %1393 = vmatpush.xpose.msra.mxu0 0.0
        %1394 = vmatpush.xpose.msra.mxu0 0.0
        %1395 = vmatpush.xpose.msra.mxu0 0.0
        %1396 = vmatpush.xpose.msra.mxu0 0.0
        %1397 = vmatpush.xpose.msra.mxu0 0.0
        %1398 = vmatpush.xpose.msra.mxu0 0.0
        %1399 = vmatpush.xpose.msra.mxu0 0.0
        %1400 = vmatpush.xpose.msra.mxu0 0.0
        %1401 = vmatpush.xpose.msra.mxu0 0.0
        %1402 = vmatpush.xpose.msra.mxu0 0.0
        %1403 = vmatpush.xpose.msra.mxu0 %v1386
        %1404 = vmatmul.f32.gmra.mxu0 %v1382
        %v1405 = vpop.f32.mrf.mxu0
        %v1406 = vadd.f32 %v689, %v1405
        %1407 = vmatmul.f32.gmra.mxu0 %v1384
        %v1408 = vpop.f32.mrf.mxu0
        %v1409 = vadd.f32 %v690, %v1408
        %1410 = vdwg.mxu0
        %v1411 = vsel %vm863, %v1406, -inf
        %1412 = vmax.xlane.f32.xlu0 %v1411
        %v1413 = vpop.xlane.xlu0 %1412
        %v1414 = vsel %vm863, %v1409, -inf
        %1415 = vmax.xlane.f32.xlu0 %v1414
        %v1416 = vpop.xlane.xlu0 %1415
        %v1417 = vsub.f32 %v1406, %v1413
        %v1418 = vsub.f32 %v1409, %v1416
        %v1419 = vmul.f32 %v1417, 1.442695
        %v1420 = vpow.pop %v1419
        %v1421 = vmul.f32 %v1418, 1.442695
        %v1422 = vpow.pop %v1421
        %v1423 = vsel %vm863, %v1420, 0.0
        %1424 = vadd.xlane.f32.xlu0 %v1423
        %v1425 = vpop.xlane.xlu0 %1424
        %v1426 = vsel %vm863, %v1422, 0.0
        %1427 = vadd.xlane.f32.xlu0 %v1426
        %v1428 = vpop.xlane.xlu0 %1427
        %1430 = vrot.lane.b32.xlu0 %v1287, 112
        %v1431 = vpop.permute.xlu0 %1430
        %v1434 = vsel %vm863, %v1420, 0
        %v1437 = vsel %vm863, %v1422, 0
        %1439 = vmatpush.msra.mxu0 0.0
        %1440 = vmatpush.msra.mxu0 0.0
        %1441 = vmatpush.msra.mxu0 0.0
        %1442 = vmatpush.msra.mxu0 0.0
        %1443 = vmatpush.msra.mxu0 0.0
        %1444 = vmatpush.msra.mxu0 0.0
        %1445 = vmatpush.msra.mxu0 0.0
        %1446 = vmatpush.msra.mxu0 0.0
        %1447 = vmatpush.msra.mxu0 0.0
        %1448 = vmatpush.msra.mxu0 0.0
        %1449 = vmatpush.msra.mxu0 0.0
        %1450 = vmatpush.msra.mxu0 0.0
        %1451 = vmatpush.msra.mxu0 0.0
        %1452 = vmatpush.msra.mxu0 0.0
        %1453 = vmatpush.msra.mxu0 0.0
        %1454 = vmatpush.msra.mxu0 %v1431
        %1455 = vmatmul.f32.gmra.mxu0 %v1434
        %v1456 = vpop.f32.mrf.mxu0
        %v1457 = vadd.f32 0.0, %v1456
        %1458 = vmatmul.f32.gmra.mxu0 %v1437
        %v1459 = vpop.f32.mrf.mxu0
        %v1460 = vadd.f32 0.0, %v1459
        %1461 = vdwg.mxu0
        %v1462 = vrcp.pop %v1425
        %v1463 = vrcp.pop %v1428
        %v1464 = vmul.f32 %v1457, %v1462
        %v1465 = vmul.f32 %v1460, %v1463
        %1467 = vrot.lane.b32.xlu0 %v1465, 16
        %v1468 = vpop.permute.xlu0 %1467
        %v1470 = vsel %vm832, %v1464, %v1468
        %1472 = vrot.lane.b32.xlu0 %v1470, 32
        %v1473 = vpop.permute.xlu0 %1472
        %v1475 = vsel %vm679, %v1375, %v1473
        %s1476 = scalar_lea.vmem %s4, 64
        %v1477 = vld [vmem:[%s1476] sm:$0xff]
        %v1478 = vld [vmem:[%s1476 + $0x8] sm:$0xff]
        %v1479 = vld [vmem:[%s1476 + $0x10] sm:$0xff]
        %v1480 = vld [vmem:[%s1476 + $0x18] sm:$0xff]
        %v1481 = vld [vmem:[%s1476 + $0x20] sm:$0xff]
        %v1482 = vld [vmem:[%s1476 + $0x28] sm:$0xff]
        %v1483 = vld [vmem:[%s1476 + $0x30] sm:$0xff]
        %v1484 = vld [vmem:[%s1476 + $0x38] sm:$0xff]
        %v1486 = vsel %vm1028, %v1475, 0
        %1488 = vmatpush.msra.mxu0 0.0
        %1489 = vmatpush.msra.mxu0 0.0
        %1490 = vmatpush.msra.mxu0 0.0
        %1491 = vmatpush.msra.mxu0 0.0
        %1492 = vmatpush.msra.mxu0 0.0
        %1493 = vmatpush.msra.mxu0 0.0
        %1494 = vmatpush.msra.mxu0 0.0
        %1495 = vmatpush.msra.mxu0 0.0
        %1496 = vmatpush.msra.mxu0 %v1484
        %1497 = vmatpush.msra.mxu0 %v1483
        %1498 = vmatpush.msra.mxu0 %v1482
        %1499 = vmatpush.msra.mxu0 %v1481
        %1500 = vmatpush.msra.mxu0 %v1480
        %1501 = vmatpush.msra.mxu0 %v1479
        %1502 = vmatpush.msra.mxu0 %v1478
        %1503 = vmatpush.msra.mxu0 %v1477
        %1504 = vmatmul.f32.gmra.mxu0 %v1486
        %v1505 = vpop.f32.mrf.mxu0
        %v1506 = vadd.f32 0.0, %v1505
        %1507 = vdwg.mxu0
        %v1508 = vadd.f32 %v1168, %v1506
        %s1509 = scalar_lea.vmem %s5, 1
        %v1510 = vld [vmem:[%s1509] sm:$0x1]
        %v1511 = vmul.f32 %v1508, %v1508
        %v1512 = vsel %vm679, %v1511, 0.0
        %1513 = vadd.xlane.f32.xlu0 %v1512
        %v1514 = vpop.xlane.xlu0 %1513
        %v1515 = vmul.f32 %v1514, %v717
        %v1516 = vadd.f32 %v1515, 1e-06
        %v1517 = vrsqrt.pop %v1516
        %v1518 = vmul.f32 %v1517, %v1516
        %v1519 = vmul.f32 %v1518, %v1517
        %v1520 = vmul.f32 0.5, %v1519
        %v1521 = vsub.f32 1.5, %v1520
        %v1522 = vmul.f32 %v1517, %v1521
        %vm1523 = vweird.f32 %v1516
        %vm1524 = vweird.f32 %v1517
        %vm1525 = vmor %vm1523, %vm1524
        %v1526 = vsel %vm1525, %v1517, %v1522
        %v1527 = vmul.f32 %v1508, %v1526
        %v1528 = vadd.f32 %v1510, 1.0
        %v1530 = vperm.slane %v1528, 0
        %v1532 = vmul.f32 %v1527, %v1530
        %s1533 = scalar_lea.vmem %s6, 32
        %v1534 = vld [vmem:[%s1533] sm:$0xff]
        %v1535 = vld [vmem:[%s1533 + $0x8] sm:$0xff]
        %v1536 = vld [vmem:[%s1533 + $0x10] sm:$0xff]
        %v1537 = vld [vmem:[%s1533 + $0x18] sm:$0xff]
        %v1539 = vsel %vm679, %v1532, 0
        %1541 = vmatpush.msra.mxu0 0.0
        %1542 = vmatpush.msra.mxu0 0.0
        %1543 = vmatpush.msra.mxu0 0.0
        %1544 = vmatpush.msra.mxu0 0.0
        %1545 = vmatpush.msra.mxu0 0.0
        %1546 = vmatpush.msra.mxu0 0.0
        %1547 = vmatpush.msra.mxu0 0.0
        %1548 = vmatpush.msra.mxu0 0.0
        %1549 = vmatpush.msra.mxu0 0.0
        %1550 = vmatpush.msra.mxu0 0.0
        %1551 = vmatpush.msra.mxu0 0.0
        %1552 = vmatpush.msra.mxu0 0.0
        %1553 = vmatpush.msra.mxu0 %v1537
        %1554 = vmatpush.msra.mxu0 %v1536
        %1555 = vmatpush.msra.mxu0 %v1535
        %1556 = vmatpush.msra.mxu0 %v1534
        %1557 = vmatmul.f32.gmra.mxu0 %v1539
        %v1558 = vpop.f32.mrf.mxu0
        %v1559 = vadd.f32 0.0, %v1558
        %1560 = vdwg.mxu0
        %v1561 = vmul.f32 %v1559, 0.5
        %v1562 = vmul.f32 %v1559, 0.044715
        %v1563 = vmul.f32 %v1562, %v1559
        %v1564 = vmul.f32 %v1563, %v1559
        %v1565 = vadd.f32 %v1559, %v1564
        %v1566 = vmul.f32 %v1565, 0.7978846
        %v1567 = vtanh.pop %v1566
        %v1568 = vadd.f32 %v1567, 1.0
        %v1569 = vmul.f32 %v1561, %v1568
        %s1570 = scalar_lea.vmem %s7, 32
        %v1571 = vld [vmem:[%s1570] sm:$0xff]
        %v1572 = vld [vmem:[%s1570 + $0x8] sm:$0xff]
        %v1573 = vld [vmem:[%s1570 + $0x10] sm:$0xff]
        %v1574 = vld [vmem:[%s1570 + $0x18] sm:$0xff]
        %1575 = vmatpush.msra.mxu0 0.0
        %1576 = vmatpush.msra.mxu0 0.0
        %1577 = vmatpush.msra.mxu0 0.0
        %1578 = vmatpush.msra.mxu0 0.0
        %1579 = vmatpush.msra.mxu0 0.0
        %1580 = vmatpush.msra.mxu0 0.0
        %1581 = vmatpush.msra.mxu0 0.0
        %1582 = vmatpush.msra.mxu0 0.0
        %1583 = vmatpush.msra.mxu0 0.0
        %1584 = vmatpush.msra.mxu0 0.0
        %1585 = vmatpush.msra.mxu0 0.0
        %1586 = vmatpush.msra.mxu0 0.0
        %1587 = vmatpush.msra.mxu0 %v1574
        %1588 = vmatpush.msra.mxu0 %v1573
        %1589 = vmatpush.msra.mxu0 %v1572
        %1590 = vmatpush.msra.mxu0 %v1571
        %1591 = vmatmul.f32.gmra.mxu0 %v1539
        %v1592 = vpop.f32.mrf.mxu0
        %v1593 = vadd.f32 0.0, %v1592
        %1594 = vdwg.mxu0
        %v1595 = vmul.f32 %v1569, %v1593
        %s1596 = scalar_lea.vmem %s8, 64
        %v1597 = vld [vmem:[%s1596] sm:$0xff]
        %v1598 = vld [vmem:[%s1596 + $0x8] sm:$0xff]
        %v1599 = vld [vmem:[%s1596 + $0x10] sm:$0xff]
        %v1600 = vld [vmem:[%s1596 + $0x18] sm:$0xff]
        %v1601 = vld [vmem:[%s1596 + $0x20] sm:$0xff]
        %v1602 = vld [vmem:[%s1596 + $0x28] sm:$0xff]
        %v1603 = vld [vmem:[%s1596 + $0x30] sm:$0xff]
        %v1604 = vld [vmem:[%s1596 + $0x38] sm:$0xff]
        %v1606 = vsel %vm1028, %v1595, 0
        %1608 = vmatpush.msra.mxu0 0.0
        %1609 = vmatpush.msra.mxu0 0.0
        %1610 = vmatpush.msra.mxu0 0.0
        %1611 = vmatpush.msra.mxu0 0.0
        %1612 = vmatpush.msra.mxu0 0.0
        %1613 = vmatpush.msra.mxu0 0.0
        %1614 = vmatpush.msra.mxu0 0.0
        %1615 = vmatpush.msra.mxu0 0.0
        %1616 = vmatpush.msra.mxu0 %v1604
        %1617 = vmatpush.msra.mxu0 %v1603
        %1618 = vmatpush.msra.mxu0 %v1602
        %1619 = vmatpush.msra.mxu0 %v1601
        %1620 = vmatpush.msra.mxu0 %v1600
        %1621 = vmatpush.msra.mxu0 %v1599
        %1622 = vmatpush.msra.mxu0 %v1598
        %1623 = vmatpush.msra.mxu0 %v1597
        %1624 = vmatmul.f32.gmra.mxu0 %v1606
        %v1625 = vpop.f32.mrf.mxu0
        %v1626 = vadd.f32 0.0, %v1625
        %1627 = vdwg.mxu0
        %v1628 = vadd.f32 %v1508, %v1626
        %v1629 = vld [vmem:[%s9] sm:$0x1]
        %v1630 = vmul.f32 %v1628, %v1628
        %v1631 = vsel %vm679, %v1630, 0.0
        %1632 = vadd.xlane.f32.xlu0 %v1631
        %v1633 = vpop.xlane.xlu0 %1632
        %v1634 = vmul.f32 %v1633, %v717
        %v1635 = vadd.f32 %v1634, 1e-06
        %v1636 = vrsqrt.pop %v1635
        %v1637 = vmul.f32 %v1636, %v1635
        %v1638 = vmul.f32 %v1637, %v1636
        %v1639 = vmul.f32 0.5, %v1638
        %v1640 = vsub.f32 1.5, %v1639
        %v1641 = vmul.f32 %v1636, %v1640
        %vm1642 = vweird.f32 %v1635
        %vm1643 = vweird.f32 %v1636
        %vm1644 = vmor %vm1642, %vm1643
        %v1645 = vsel %vm1644, %v1636, %v1641
        %v1646 = vmul.f32 %v1628, %v1645
        %v1647 = vadd.f32 %v1629, 1.0
        %v1649 = vperm.slane %v1647, 0
        %v1651 = vmul.f32 %v1646, %v1649
        %1652 = vst.msk [vmem:[%s655] sm:$0xff] %vm679, %v1651
        %s1653 = sand.u32 %s362, 1
        %s1654 = scalar_lea.sflag [#allocation7], %s1653
        %s1655 = sand.u32 %s362, 1
        %s1656 = smul.addr %s1655, 8
        %s1657 = scalar_lea.vmem [#allocation6], %s1656
        %s1658 = sand.u32 %s388, 1
        %s1659 = sand.u32 %s388, 1
        %s1660 = smul.addr %s1659, 16
        %s1661 = scalar_lea.vmem [#allocation8], %s1660
        %s1662 = sand.u32 %s414, 1
        %s1663 = sand.u32 %s414, 1
        %s1664 = smul.addr %s1663, 16
        %s1665 = scalar_lea.vmem [#allocation9], %s1664
        // Predicated region
        $region153: #{gemma_model_pallas.1} parent=143 // pred_check
          %p1666 = pneg %p372
        $region154: #{gemma_model_pallas.1} parent=143 // pred_check_branch
          %1668 = sbr.rel (%p1666) target = $region156
        $region155: #{gemma_model_pallas.1} parent=143 // pred_region
          %1670 = vsyncadd %s1654, 0
          %s1671 = smul.addr %s40, 8
          %s1672 = scalar_lea.hbm %s15, %s1671
          %s1674 = sshll.u32 %s1657, 4
          %s1675 = int_to_ptr.vmem [resolvable:$true] %s1674
          %s1676 = sshll.u32 %s1672, 4
          %s1677 = int_to_ptr.hbm [resolvable:$true] %s1676
          %1679 = dma.vmem_to_hbm [thread:$0]  %s1675, 128, %s1677, %s1654
        $region156: #{gemma_model_pallas.1} parent=143 // pred_fallthru
          _
        // Predicated region
        $region157: #{gemma_model_pallas.1} parent=143 // pred_check
          %p1680 = pneg %p398
        $region158: #{gemma_model_pallas.1} parent=143 // pred_check_branch
          %1682 = sbr.rel (%p1680) target = $region160
        $region159: #{gemma_model_pallas.1} parent=143 // pred_region
          %s1683 = smul.addr %s40, 8
          %s1684 = scalar_lea.vmem %s16, %s1683
          // Predicated region
          $region161: #{gemma_model_pallas.1} parent=159 // pred_check
            _
          $region162: #{gemma_model_pallas.1} parent=159 // pred_check_branch
            %1686 = sbr.rel (0) target = $region164
          $region163: #{gemma_model_pallas.1} parent=159 // pred_region
            // Predicated region
            $region165: #{gemma_model_pallas.1} parent=163 // pred_check
              _
            $region166: #{gemma_model_pallas.1} parent=163 // pred_check_branch
              %1688 = sbr.rel (0) target = $region168
            $region167: #{gemma_model_pallas.1} parent=163 // pred_region
              // Predicated region
              $region180: #{gemma_model_pallas.1} parent=167 // pred_check
                _
              $region181: #{gemma_model_pallas.1} parent=167 // pred_check_branch
                %1706 = sbr.rel (0) target = $region183
              $region182: #{gemma_model_pallas.1} parent=167 // pred_region
                loop: start=0, step=1, limit=1
                $region184: #{gemma_model_pallas.1} parent=182 // loop_pre_header
                  _
                $region185: #{gemma_model_pallas.1} parent=182 // loop_header
                  %s1708 = sphi 0, %s1712
                  %p1709 = scmp.ge.s32.totalorder %s1708, 1
                  %s1713 = sphi %s1661, %s1661
                  %s1714 = sphi %s1684, %s1684
                $region186: #{gemma_model_pallas.1} parent=182 // loop_header_branch
                  %1711 = sbr.rel (%p1709) target = $region190
                $region187: #{gemma_model_pallas.1} parent=182 // loop_body
                  %v1715 = vld [vmem:[%s1713] sm:$0xff]
                  %1716 = vst [vmem:[%s1714] sm:$0xff] %v1715
                  %v1717 = vld [vmem:[%s1713 + $0x8] sm:$0xff]
                  %1718 = vst [vmem:[%s1714 + $0x10] sm:$0xff] %v1717
                $region188: #{gemma_model_pallas.1} parent=182 // loop_footer
                  %s1712 = sadd.s32 1, %s1708
                $region189: #{gemma_model_pallas.1} parent=182 // loop_footer_branch
                  %1707 = sbr.rel target = $region185
                $region190: #{gemma_model_pallas.1} parent=182 // loop_exit
                  _
              $region183: #{gemma_model_pallas.1} parent=167 // pred_fallthru
                _
              // Predicated region
              $region191: #{gemma_model_pallas.1} parent=167 // pred_check
                _
              $region192: #{gemma_model_pallas.1} parent=167 // pred_check_branch
                %1720 = sbr.rel target = $region194
              $region193: #{gemma_model_pallas.1} parent=167 // pred_region
                _
              $region194: #{gemma_model_pallas.1} parent=167 // pred_fallthru
                _
            $region168: #{gemma_model_pallas.1} parent=163 // pred_fallthru
              _
            // Predicated region
            $region169: #{gemma_model_pallas.1} parent=163 // pred_check
              _
            $region170: #{gemma_model_pallas.1} parent=163 // pred_check_branch
              %1690 = sbr.rel target = $region172
            $region171: #{gemma_model_pallas.1} parent=163 // pred_region
              %s1692 = ssub.s32 256, 1
              loop: start=0, step=1, limit=1
              $region173: #{gemma_model_pallas.1} parent=171 // loop_pre_header
                _
              $region174: #{gemma_model_pallas.1} parent=171 // loop_header
                %s1694 = sphi 0, %s1698
                %p1695 = scmp.ge.s32.totalorder %s1694, 1
                %s1699 = sphi %s1661, %s1661
                %s1700 = sphi %s1684, %s1684
              $region175: #{gemma_model_pallas.1} parent=171 // loop_header_branch
                %1697 = sbr.rel (%p1695) target = $region179
              $region176: #{gemma_model_pallas.1} parent=171 // loop_body
                %v1701 = vld [vmem:[%s1699] sm:%s1692]
                %1702 = vst [vmem:[%s1700] sm:%s1692] %v1701
                %v1703 = vld [vmem:[%s1699 + $0x8] sm:%s1692]
                %1704 = vst [vmem:[%s1700 + $0x10] sm:%s1692] %v1703
              $region177: #{gemma_model_pallas.1} parent=171 // loop_footer
                %s1698 = sadd.s32 1, %s1694
              $region178: #{gemma_model_pallas.1} parent=171 // loop_footer_branch
                %1693 = sbr.rel target = $region174
              $region179: #{gemma_model_pallas.1} parent=171 // loop_exit
                _
            $region172: #{gemma_model_pallas.1} parent=163 // pred_fallthru
              _
          $region164: #{gemma_model_pallas.1} parent=159 // pred_fallthru
            _
          %1721 = vnop
        $region160: #{gemma_model_pallas.1} parent=143 // pred_fallthru
          _
        // Predicated region
        $region195: #{gemma_model_pallas.1} parent=143 // pred_check
          %p1722 = pneg %p424
        $region196: #{gemma_model_pallas.1} parent=143 // pred_check_branch
          %1724 = sbr.rel (%p1722) target = $region198
        $region197: #{gemma_model_pallas.1} parent=143 // pred_region
          %s1725 = smul.addr %s40, 8
          %s1726 = scalar_lea.vmem %s17, %s1725
          // Predicated region
          $region199: #{gemma_model_pallas.1} parent=197 // pred_check
            _
          $region200: #{gemma_model_pallas.1} parent=197 // pred_check_branch
            %1728 = sbr.rel (0) target = $region202
          $region201: #{gemma_model_pallas.1} parent=197 // pred_region
            // Predicated region
            $region203: #{gemma_model_pallas.1} parent=201 // pred_check
              _
            $region204: #{gemma_model_pallas.1} parent=201 // pred_check_branch
              %1730 = sbr.rel (0) target = $region206
            $region205: #{gemma_model_pallas.1} parent=201 // pred_region
              // Predicated region
              $region218: #{gemma_model_pallas.1} parent=205 // pred_check
                _
              $region219: #{gemma_model_pallas.1} parent=205 // pred_check_branch
                %1748 = sbr.rel (0) target = $region221
              $region220: #{gemma_model_pallas.1} parent=205 // pred_region
                loop: start=0, step=1, limit=1
                $region222: #{gemma_model_pallas.1} parent=220 // loop_pre_header
                  _
                $region223: #{gemma_model_pallas.1} parent=220 // loop_header
                  %s1750 = sphi 0, %s1754
                  %p1751 = scmp.ge.s32.totalorder %s1750, 1
                  %s1755 = sphi %s1665, %s1665
                  %s1756 = sphi %s1726, %s1726
                $region224: #{gemma_model_pallas.1} parent=220 // loop_header_branch
                  %1753 = sbr.rel (%p1751) target = $region228
                $region225: #{gemma_model_pallas.1} parent=220 // loop_body
                  %v1757 = vld [vmem:[%s1755] sm:$0xff]
                  %1758 = vst [vmem:[%s1756] sm:$0xff] %v1757
                  %v1759 = vld [vmem:[%s1755 + $0x8] sm:$0xff]
                  %1760 = vst [vmem:[%s1756 + $0x10] sm:$0xff] %v1759
                $region226: #{gemma_model_pallas.1} parent=220 // loop_footer
                  %s1754 = sadd.s32 1, %s1750
                $region227: #{gemma_model_pallas.1} parent=220 // loop_footer_branch
                  %1749 = sbr.rel target = $region223
                $region228: #{gemma_model_pallas.1} parent=220 // loop_exit
                  _
              $region221: #{gemma_model_pallas.1} parent=205 // pred_fallthru
                _
              // Predicated region
              $region229: #{gemma_model_pallas.1} parent=205 // pred_check
                _
              $region230: #{gemma_model_pallas.1} parent=205 // pred_check_branch
                %1762 = sbr.rel target = $region232
              $region231: #{gemma_model_pallas.1} parent=205 // pred_region
                _
              $region232: #{gemma_model_pallas.1} parent=205 // pred_fallthru
                _
            $region206: #{gemma_model_pallas.1} parent=201 // pred_fallthru
              _
            // Predicated region
            $region207: #{gemma_model_pallas.1} parent=201 // pred_check
              _
            $region208: #{gemma_model_pallas.1} parent=201 // pred_check_branch
              %1732 = sbr.rel target = $region210
            $region209: #{gemma_model_pallas.1} parent=201 // pred_region
              %s1734 = ssub.s32 256, 1
              loop: start=0, step=1, limit=1
              $region211: #{gemma_model_pallas.1} parent=209 // loop_pre_header
                _
              $region212: #{gemma_model_pallas.1} parent=209 // loop_header
                %s1736 = sphi 0, %s1740
                %p1737 = scmp.ge.s32.totalorder %s1736, 1
                %s1741 = sphi %s1665, %s1665
                %s1742 = sphi %s1726, %s1726
              $region213: #{gemma_model_pallas.1} parent=209 // loop_header_branch
                %1739 = sbr.rel (%p1737) target = $region217
              $region214: #{gemma_model_pallas.1} parent=209 // loop_body
                %v1743 = vld [vmem:[%s1741] sm:%s1734]
                %1744 = vst [vmem:[%s1742] sm:%s1734] %v1743
                %v1745 = vld [vmem:[%s1741 + $0x8] sm:%s1734]
                %1746 = vst [vmem:[%s1742 + $0x10] sm:%s1734] %v1745
              $region215: #{gemma_model_pallas.1} parent=209 // loop_footer
                %s1740 = sadd.s32 1, %s1736
              $region216: #{gemma_model_pallas.1} parent=209 // loop_footer_branch
                %1735 = sbr.rel target = $region212
              $region217: #{gemma_model_pallas.1} parent=209 // loop_exit
                _
            $region210: #{gemma_model_pallas.1} parent=201 // pred_fallthru
              _
          $region202: #{gemma_model_pallas.1} parent=197 // pred_fallthru
            _
          %1763 = vnop
        $region198: #{gemma_model_pallas.1} parent=143 // pred_fallthru
          _
      $region144: #{gemma_model_pallas.1} parent=5 // pred_fallthru
        _
      %p1764 = scmp.le.s32.totalorder 2, %s35
      // Predicated region
      $region233: #{gemma_model_pallas.1} parent=5 // pred_check
        %p1765 = pneg %p1764
      $region234: #{gemma_model_pallas.1} parent=5 // pred_check_branch
        %1767 = sbr.rel (%p1765) target = $region236
      $region235: #{gemma_model_pallas.1} parent=5 // pred_region
        %s1768 = ssub.s32 %s35, 2
        // Predicated region
        $region237: #{gemma_model_pallas.1} parent=235 // pred_check
          %p1769 = pneg %p378
        $region238: #{gemma_model_pallas.1} parent=235 // pred_check_branch
          %1771 = sbr.rel (%p1769) target = $region240
        $region239: #{gemma_model_pallas.1} parent=235 // pred_region
          %s1772 = sand.u32 %s363, 1
          %s1773 = scalar_lea.sflag [#allocation7], %s1772
          %s1774 = sand.u32 %s363, 1
          %s1775 = smul.addr %s1774, 8
          %s1776 = scalar_lea.vmem [#allocation6], %s1775
          %1778 = dma.done %s1773, 128
        $region240: #{gemma_model_pallas.1} parent=235 // pred_fallthru
          _
        // Predicated region
        $region241: #{gemma_model_pallas.1} parent=235 // pred_check
          %p1779 = pneg %p404
        $region242: #{gemma_model_pallas.1} parent=235 // pred_check_branch
          %1781 = sbr.rel (%p1779) target = $region244
        $region243: #{gemma_model_pallas.1} parent=235 // pred_region
          %s1782 = sand.u32 %s389, 1
          %s1783 = sand.u32 %s389, 1
          %s1784 = smul.addr %s1783, 16
          %s1785 = scalar_lea.vmem [#allocation8], %s1784
        $region244: #{gemma_model_pallas.1} parent=235 // pred_fallthru
          _
        // Predicated region
        $region245: #{gemma_model_pallas.1} parent=235 // pred_check
          %p1786 = pneg %p430
        $region246: #{gemma_model_pallas.1} parent=235 // pred_check_branch
          %1788 = sbr.rel (%p1786) target = $region248
        $region247: #{gemma_model_pallas.1} parent=235 // pred_region
          %s1789 = sand.u32 %s415, 1
          %s1790 = sand.u32 %s415, 1
          %s1791 = smul.addr %s1790, 16
          %s1792 = scalar_lea.vmem [#allocation9], %s1791
        $region248: #{gemma_model_pallas.1} parent=235 // pred_fallthru
          _
      $region236: #{gemma_model_pallas.1} parent=5 // pred_fallthru
        _
    $region6: #{gemma_model_pallas.1} parent=1 // loop_footer
      %s39 = sadd.s32 1, %s35
    $region7: #{gemma_model_pallas.1} parent=1 // loop_footer_branch
      %34 = sbr.rel target = $region3
    $region8: #{gemma_model_pallas.1} parent=1 // loop_exit
      _
    %1793 = vsyncpa [#allocation7], 1
    %s1794 = scalar_lea.sflag [#allocation7], 1
    %1795 = vsyncpa %s1794, 1

</llo_original>
